<compile_context>
chip_gen: v6e
topology: v6e:2x2x1
jax: 0.10.0
libtpu: 0.0.40
codegen_flags: <defaults>
</compile_context>

<pallas_src>
import functools

import jax
import jax.numpy as jnp
from jax import lax
from jax.experimental import pallas as pl
from jax.experimental.pallas import tpu as pltpu


# ----------------------------------------------------------------------------
# Fused Conv5x5(SAME) + bias + ReLU + MaxPool2x2 kernel (per batch image).
# Inputs are four im2col patch groups, one per 2x2-pool offset (dy, dx):
#   p_{dy,dx}[m, :] is the 5x5xCin patch producing conv output (2i+dy, 2j+dx),
#   with m = i*Wo + j.  So pooling == elementwise max of the four GEMM results.
# ----------------------------------------------------------------------------
def _conv_relu_pool_kernel(p00_ref, p01_ref, p10_ref, p11_ref, w_ref, b_ref,
                           o_ref):
    w = w_ref[...]            # (K, Cout)
    b = b_ref[...]            # (1, Cout)

    def branch(p_ref):
        acc = jnp.dot(p_ref[...], w, preferred_element_type=jnp.float32)
        return jnp.maximum(acc + b, 0.0)          # bias + ReLU

    pooled = jnp.maximum(jnp.maximum(branch(p00_ref), branch(p01_ref)),
                         jnp.maximum(branch(p10_ref), branch(p11_ref)))
    o_ref[...] = pooled.astype(o_ref.dtype)       # (Ho*Wo, Cout)


def conv5x5_relu_pool2(x_nhwc, w_hwio, b):
    """Fused 5x5 SAME conv + bias + ReLU + 2x2 max-pool.  NHWC in/out."""
    B, H, W, Cin = x_nhwc.shape
    KH, KW, Cin_w, Cout = w_hwio.shape
    assert (KH, KW) == (5, 5) and Cin_w == Cin and H % 2 == 0 and W % 2 == 0
    Ho, Wo = H // 2, W // 2
    M, K = Ho * Wo, KH * KW * Cin

    # ---- wrapper-side layout plumbing (zero compute, handled by XLA) -------
    xp = jnp.pad(x_nhwc, ((0, 0), (2, 2), (2, 2), (0, 0)))
    groups = []
    for dy in range(2):
        for dx in range(2):
            cols = [xp[:, dy + kh:dy + kh + H:2, dx + kw:dx + kw + W:2, :]
                    for kh in range(KH) for kw in range(KW)]
            # (B, Ho, Wo, 25, Cin) -> (B, Ho*Wo, 25*Cin); col idx = (kh*5+kw)*Cin + c
            groups.append(jnp.stack(cols, axis=3).reshape(B, M, K))
    w_mat = w_hwio.reshape(K, Cout)     # row idx = (kh*5+kw)*Cin + c  (matches)
    b_row = b.reshape(1, Cout)

    patch_spec = pl.BlockSpec((None, M, K), lambda i: (i, 0, 0))
    out = pl.pallas_call(
        _conv_relu_pool_kernel,
        out_shape=jax.ShapeDtypeStruct((B, M, Cout), x_nhwc.dtype),
        grid=(B,),
        in_specs=[patch_spec, patch_spec, patch_spec, patch_spec,
                  pl.BlockSpec((K, Cout), lambda i: (0, 0)),
                  pl.BlockSpec((1, Cout), lambda i: (0, 0))],
        out_specs=pl.BlockSpec((None, M, Cout), lambda i: (i, 0, 0)),
        compiler_params=pltpu.CompilerParams(
            dimension_semantics=("parallel",)),   # megacore-shard over batch
    )(*groups, w_mat, b_row)
    return out.reshape(B, Ho, Wo, Cout)


# ----------------------------------------------------------------------------
# Final Linear: fused matmul + bias.
# ----------------------------------------------------------------------------
def _linear_kernel(x_ref, w_ref, b_ref, o_ref):
    acc = jnp.dot(x_ref[...], w_ref[...], preferred_element_type=jnp.float32)
    o_ref[...] = (acc + b_ref[...]).astype(o_ref.dtype)


def linear(x, w, b):
    Bt, Din = x.shape
    Din_w, Dout = w.shape
    assert Din_w == Din
    return pl.pallas_call(
        _linear_kernel,
        out_shape=jax.ShapeDtypeStruct((Bt, Dout), x.dtype),
        grid=(1,),
        in_specs=[pl.BlockSpec((Bt, Din), lambda i: (0, 0)),
                  pl.BlockSpec((Din, Dout), lambda i: (0, 0)),
                  pl.BlockSpec((1, Dout), lambda i: (0, 0))],
        out_specs=pl.BlockSpec((Bt, Dout), lambda i: (0, 0)),
    )(x, w, b.reshape(1, Dout))


# ----------------------------------------------------------------------------
# Full forward pass (== PyTorch CNN.forward): returns (logits, flat_features).
# ----------------------------------------------------------------------------
def cnn_forward(x_nchw, params):
    B = x_nchw.shape[0]
    x = jnp.transpose(x_nchw, (0, 2, 3, 1))                     # NCHW -> NHWC
    x = conv5x5_relu_pool2(x, params["w1"], params["b1"])       # (B, 14, 14, 16)
    x = conv5x5_relu_pool2(x, params["w2"], params["b2"])       # (B,  7,  7, 32)
    # PyTorch x.view(B, -1) flattens NCHW order (C, H, W):
    flat = jnp.transpose(x, (0, 3, 1, 2)).reshape(B, 32 * 7 * 7)
    logits = linear(flat, params["w3"], params["b3"])           # (B, 10)
    return logits, flat


# ----------------------------------------------------------------------------
# Pure-JAX reference (same math) for correctness checking.
# ----------------------------------------------------------------------------
def cnn_reference(x_nchw, params):
    dn = ("NHWC", "HWIO", "NHWC")
    x = jnp.transpose(x_nchw, (0, 2, 3, 1))
    x = lax.conv_general_dilated(x, params["w1"], (1, 1), [(2, 2), (2, 2)],
                                 dimension_numbers=dn)
    x = jnp.maximum(x + params["b1"], 0.0)
    x = lax.reduce_window(x, -jnp.inf, lax.max, (1, 2, 2, 1), (1, 2, 2, 1),
                          "VALID")
    x = lax.conv_general_dilated(x, params["w2"], (1, 1), [(2, 2), (2, 2)],
                                 dimension_numbers=dn)
    x = jnp.maximum(x + params["b2"], 0.0)
    x = lax.reduce_window(x, -jnp.inf, lax.max, (1, 2, 2, 1), (1, 2, 2, 1),
                          "VALID")
    flat = jnp.transpose(x, (0, 3, 1, 2)).reshape(x.shape[0], -1)
    logits = flat @ params["w3"] + params["b3"]
    return logits, flat


if __name__ == "__main__":
    key = jax.random.PRNGKey(0)
    ks = jax.random.split(key, 7)
    B = 2
    # MNIST-style input implied by Linear(32*7*7, 10): (B, 1, 28, 28)
    x = jax.random.normal(ks[0], (B, 1, 28, 28), dtype=jnp.float32)
    params = {
        "w1": 0.2 * jax.random.normal(ks[1], (5, 5, 1, 16), dtype=jnp.float32),
        "b1": 0.1 * jax.random.normal(ks[2], (16,), dtype=jnp.float32),
        "w2": 0.05 * jax.random.normal(ks[3], (5, 5, 16, 32), dtype=jnp.float32),
        "b2": 0.1 * jax.random.normal(ks[4], (32,), dtype=jnp.float32),
        "w3": 0.02 * jax.random.normal(ks[5], (32 * 7 * 7, 10), dtype=jnp.float32),
        "b3": 0.1 * jax.random.normal(ks[6], (10,), dtype=jnp.float32),
    }

    logits, feat = jax.jit(cnn_forward)(x, params)
    jax.block_until_ready((logits, feat))

    assert logits.shape == (B, 10), logits.shape
    assert feat.shape == (B, 32 * 7 * 7), feat.shape

    ref_logits, ref_feat = jax.jit(cnn_reference)(x, params)
    assert jnp.allclose(feat, ref_feat, rtol=2e-2, atol=2e-2), \
        float(jnp.max(jnp.abs(feat - ref_feat)))
    assert jnp.allclose(logits, ref_logits, rtol=2e-2, atol=2e-2), \
        float(jnp.max(jnp.abs(logits - ref_logits)))

    print("KERNEL_OK")
</pallas_src>

<mosaic_0001>
module attributes {stable_mosaic.version = 11 : i64} {
  func.func @_conv_relu_pool_kernel(%arg0: i32, %arg1: memref<1x196x25xf32, #tpu.memory_space<vmem>>, %arg2: memref<1x196x25xf32, #tpu.memory_space<vmem>>, %arg3: memref<1x196x25xf32, #tpu.memory_space<vmem>>, %arg4: memref<1x196x25xf32, #tpu.memory_space<vmem>>, %arg5: memref<25x16xf32, #tpu.memory_space<vmem>>, %arg6: memref<1x16xf32, #tpu.memory_space<vmem>>, %arg7: memref<1x196x16xf32, #tpu.memory_space<vmem>>) attributes {dimension_semantics = [#tpu.dimension_semantics<parallel>], iteration_bounds = array<i64: 2>, scalar_prefetch = 0 : i64, scratch_operands = 0 : i64, tpu.core_type = #tpu.core_type<tc>, window_params = [{transform_indices = @transform_0, window_bounds = array<i64: 1, 196, 25>}, {transform_indices = @transform_1, window_bounds = array<i64: 1, 196, 25>}, {transform_indices = @transform_2, window_bounds = array<i64: 1, 196, 25>}, {transform_indices = @transform_3, window_bounds = array<i64: 1, 196, 25>}, {pipeline_mode = #tpu.pipeline_mode<synchronous>, transform_indices = @transform_4, window_bounds = array<i64: 25, 16>}, {pipeline_mode = #tpu.pipeline_mode<synchronous>, transform_indices = @transform_5, window_bounds = array<i64: 1, 16>}, {transform_indices = @transform_6, window_bounds = array<i64: 1, 196, 16>}]} {
    %c0 = arith.constant 0 : index
    %c0_0 = arith.constant 0 : index
    %0 = vector.load %arg5[%c0, %c0_0] : memref<25x16xf32, #tpu.memory_space<vmem>>, vector<25x16xf32>
    %c0_1 = arith.constant 0 : index
    %c0_2 = arith.constant 0 : index
    %1 = vector.load %arg6[%c0_1, %c0_2] : memref<1x16xf32, #tpu.memory_space<vmem>>, vector<1x16xf32>
    %c0_3 = arith.constant 0 : index
    %c0_4 = arith.constant 0 : index
    %c0_5 = arith.constant 0 : index
    %2 = vector.load %arg1[%c0_3, %c0_4, %c0_5] : memref<1x196x25xf32, #tpu.memory_space<vmem>>, vector<1x196x25xf32>
    %3 = vector.shape_cast %2 : vector<1x196x25xf32> to vector<196x25xf32>
    %cst = arith.constant dense<0.000000e+00> : vector<196x16xf32>
    %4 = tpu.matmul %3, %0, %cst {dimension_numbers = #tpu.dot_dimension_numbers<[1], [0], [0], [1], [0, 0, 1, 1], [], []>} : vector<196x25xf32>, vector<25x16xf32>, vector<196x16xf32> -> vector<196x16xf32>
    %5 = vector.broadcast %1 : vector<1x16xf32> to vector<196x16xf32>
    %6 = arith.addf %4, %5 : vector<196x16xf32>
    %cst_6 = arith.constant 0.000000e+00 : f32
    %7 = vector.broadcast %cst_6 : f32 to vector<196x16xf32>
    %8 = arith.maximumf %6, %7 : vector<196x16xf32>
    %c0_7 = arith.constant 0 : index
    %c0_8 = arith.constant 0 : index
    %c0_9 = arith.constant 0 : index
    %9 = vector.load %arg2[%c0_7, %c0_8, %c0_9] : memref<1x196x25xf32, #tpu.memory_space<vmem>>, vector<1x196x25xf32>
    %10 = vector.shape_cast %9 : vector<1x196x25xf32> to vector<196x25xf32>
    %cst_10 = arith.constant dense<0.000000e+00> : vector<196x16xf32>
    %11 = tpu.matmul %10, %0, %cst_10 {dimension_numbers = #tpu.dot_dimension_numbers<[1], [0], [0], [1], [0, 0, 1, 1], [], []>} : vector<196x25xf32>, vector<25x16xf32>, vector<196x16xf32> -> vector<196x16xf32>
    %12 = vector.broadcast %1 : vector<1x16xf32> to vector<196x16xf32>
    %13 = arith.addf %11, %12 : vector<196x16xf32>
    %cst_11 = arith.constant 0.000000e+00 : f32
    %14 = vector.broadcast %cst_11 : f32 to vector<196x16xf32>
    %15 = arith.maximumf %13, %14 : vector<196x16xf32>
    %16 = arith.maximumf %8, %15 : vector<196x16xf32>
    %c0_12 = arith.constant 0 : index
    %c0_13 = arith.constant 0 : index
    %c0_14 = arith.constant 0 : index
    %17 = vector.load %arg3[%c0_12, %c0_13, %c0_14] : memref<1x196x25xf32, #tpu.memory_space<vmem>>, vector<1x196x25xf32>
    %18 = vector.shape_cast %17 : vector<1x196x25xf32> to vector<196x25xf32>
    %cst_15 = arith.constant dense<0.000000e+00> : vector<196x16xf32>
    %19 = tpu.matmul %18, %0, %cst_15 {dimension_numbers = #tpu.dot_dimension_numbers<[1], [0], [0], [1], [0, 0, 1, 1], [], []>} : vector<196x25xf32>, vector<25x16xf32>, vector<196x16xf32> -> vector<196x16xf32>
    %20 = vector.broadcast %1 : vector<1x16xf32> to vector<196x16xf32>
    %21 = arith.addf %19, %20 : vector<196x16xf32>
    %cst_16 = arith.constant 0.000000e+00 : f32
    %22 = vector.broadcast %cst_16 : f32 to vector<196x16xf32>
    %23 = arith.maximumf %21, %22 : vector<196x16xf32>
    %c0_17 = arith.constant 0 : index
    %c0_18 = arith.constant 0 : index
    %c0_19 = arith.constant 0 : index
    %24 = vector.load %arg4[%c0_17, %c0_18, %c0_19] : memref<1x196x25xf32, #tpu.memory_space<vmem>>, vector<1x196x25xf32>
    %25 = vector.shape_cast %24 : vector<1x196x25xf32> to vector<196x25xf32>
    %cst_20 = arith.constant dense<0.000000e+00> : vector<196x16xf32>
    %26 = tpu.matmul %25, %0, %cst_20 {dimension_numbers = #tpu.dot_dimension_numbers<[1], [0], [0], [1], [0, 0, 1, 1], [], []>} : vector<196x25xf32>, vector<25x16xf32>, vector<196x16xf32> -> vector<196x16xf32>
    %27 = vector.broadcast %1 : vector<1x16xf32> to vector<196x16xf32>
    %28 = arith.addf %26, %27 : vector<196x16xf32>
    %cst_21 = arith.constant 0.000000e+00 : f32
    %29 = vector.broadcast %cst_21 : f32 to vector<196x16xf32>
    %30 = arith.maximumf %28, %29 : vector<196x16xf32>
    %31 = arith.maximumf %23, %30 : vector<196x16xf32>
    %32 = arith.maximumf %16, %31 : vector<196x16xf32>
    %c0_22 = arith.constant 0 : index
    %c0_23 = arith.constant 0 : index
    %c0_24 = arith.constant 0 : index
    %33 = vector.load %arg7[%c0_22, %c0_23, %c0_24] : memref<1x196x16xf32, #tpu.memory_space<vmem>>, vector<1x196x16xf32>
    %34 = vector.shape_cast %33 : vector<1x196x16xf32> to vector<196x16xf32>
    %35 = vector.shape_cast %32 : vector<196x16xf32> to vector<1x196x16xf32>
    tpu.vector_store %arg7[%c0_22, %c0_23, %c0_24], %35 {strides = array<i32>} : memref<1x196x16xf32, #tpu.memory_space<vmem>>, vector<1x196x16xf32>,
    return
  }
  func.func @transform_0(%arg0: i32) -> (i32, i32, i32) {
    %c0_i32 = arith.constant 0 : i32
    %c0_i32_0 = arith.constant 0 : i32
    %c0_i32_1 = arith.constant 0 : i32
    return %arg0, %c0_i32, %c0_i32_0 : i32, i32, i32
  }
  func.func @transform_1(%arg0: i32) -> (i32, i32, i32) {
    %c0_i32 = arith.constant 0 : i32
    %c0_i32_0 = arith.constant 0 : i32
    %c0_i32_1 = arith.constant 0 : i32
    return %arg0, %c0_i32, %c0_i32_0 : i32, i32, i32
  }
  func.func @transform_2(%arg0: i32) -> (i32, i32, i32) {
    %c0_i32 = arith.constant 0 : i32
    %c0_i32_0 = arith.constant 0 : i32
    %c0_i32_1 = arith.constant 0 : i32
    return %arg0, %c0_i32, %c0_i32_0 : i32, i32, i32
  }
  func.func @transform_3(%arg0: i32) -> (i32, i32, i32) {
    %c0_i32 = arith.constant 0 : i32
    %c0_i32_0 = arith.constant 0 : i32
    %c0_i32_1 = arith.constant 0 : i32
    return %arg0, %c0_i32, %c0_i32_0 : i32, i32, i32
  }
  func.func @transform_4(%arg0: i32) -> (i32, i32) {
    %c0_i32 = arith.constant 0 : i32
    %c0_i32_0 = arith.constant 0 : i32
    %c0_i32_1 = arith.constant 0 : i32
    return %c0_i32, %c0_i32_0 : i32, i32
  }
  func.func @transform_5(%arg0: i32) -> (i32, i32) {
    %c0_i32 = arith.constant 0 : i32
    %c0_i32_0 = arith.constant 0 : i32
    %c0_i32_1 = arith.constant 0 : i32
    return %c0_i32, %c0_i32_0 : i32, i32
  }
  func.func @transform_6(%arg0: i32) -> (i32, i32, i32) {
    %c0_i32 = arith.constant 0 : i32
    %c0_i32_0 = arith.constant 0 : i32
    %c0_i32_1 = arith.constant 0 : i32
    return %arg0, %c0_i32, %c0_i32_0 : i32, i32, i32
  }
}

module attributes {stable_mosaic.version = 11 : i64} {
  func.func @_conv_relu_pool_kernel(%arg0: i32, %arg1: memref<1x49x400xf32, #tpu.memory_space<vmem>>, %arg2: memref<1x49x400xf32, #tpu.memory_space<vmem>>, %arg3: memref<1x49x400xf32, #tpu.memory_space<vmem>>, %arg4: memref<1x49x400xf32, #tpu.memory_space<vmem>>, %arg5: memref<400x32xf32, #tpu.memory_space<vmem>>, %arg6: memref<1x32xf32, #tpu.memory_space<vmem>>, %arg7: memref<1x49x32xf32, #tpu.memory_space<vmem>>) attributes {dimension_semantics = [#tpu.dimension_semantics<parallel>], iteration_bounds = array<i64: 2>, scalar_prefetch = 0 : i64, scratch_operands = 0 : i64, tpu.core_type = #tpu.core_type<tc>, window_params = [{transform_indices = @transform_0, window_bounds = array<i64: 1, 49, 400>}, {transform_indices = @transform_1, window_bounds = array<i64: 1, 49, 400>}, {transform_indices = @transform_2, window_bounds = array<i64: 1, 49, 400>}, {transform_indices = @transform_3, window_bounds = array<i64: 1, 49, 400>}, {pipeline_mode = #tpu.pipeline_mode<synchronous>, transform_indices = @transform_4, window_bounds = array<i64: 400, 32>}, {pipeline_mode = #tpu.pipeline_mode<synchronous>, transform_indices = @transform_5, window_bounds = array<i64: 1, 32>}, {transform_indices = @transform_6, window_bounds = array<i64: 1, 49, 32>}]} {
    %c0 = arith.constant 0 : index
    %c0_0 = arith.constant 0 : index
    %0 = vector.load %arg5[%c0, %c0_0] : memref<400x32xf32, #tpu.memory_space<vmem>>, vector<400x32xf32>
    %c0_1 = arith.constant 0 : index
    %c0_2 = arith.constant 0 : index
    %1 = vector.load %arg6[%c0_1, %c0_2] : memref<1x32xf32, #tpu.memory_space<vmem>>, vector<1x32xf32>
    %c0_3 = arith.constant 0 : index
    %c0_4 = arith.constant 0 : index
    %c0_5 = arith.constant 0 : index
    %2 = vector.load %arg1[%c0_3, %c0_4, %c0_5] : memref<1x49x400xf32, #tpu.memory_space<vmem>>, vector<1x49x400xf32>
    %3 = vector.shape_cast %2 : vector<1x49x400xf32> to vector<49x400xf32>
    %cst = arith.constant dense<0.000000e+00> : vector<49x32xf32>
    %4 = tpu.matmul %3, %0, %cst {dimension_numbers = #tpu.dot_dimension_numbers<[1], [0], [0], [1], [0, 0, 1, 1], [], []>} : vector<49x400xf32>, vector<400x32xf32>, vector<49x32xf32> -> vector<49x32xf32>
    %5 = vector.broadcast %1 : vector<1x32xf32> to vector<49x32xf32>
    %6 = arith.addf %4, %5 : vector<49x32xf32>
    %cst_6 = arith.constant 0.000000e+00 : f32
    %7 = vector.broadcast %cst_6 : f32 to vector<49x32xf32>
    %8 = arith.maximumf %6, %7 : vector<49x32xf32>
    %c0_7 = arith.constant 0 : index
    %c0_8 = arith.constant 0 : index
    %c0_9 = arith.constant 0 : index
    %9 = vector.load %arg2[%c0_7, %c0_8, %c0_9] : memref<1x49x400xf32, #tpu.memory_space<vmem>>, vector<1x49x400xf32>
    %10 = vector.shape_cast %9 : vector<1x49x400xf32> to vector<49x400xf32>
    %cst_10 = arith.constant dense<0.000000e+00> : vector<49x32xf32>
    %11 = tpu.matmul %10, %0, %cst_10 {dimension_numbers = #tpu.dot_dimension_numbers<[1], [0], [0], [1], [0, 0, 1, 1], [], []>} : vector<49x400xf32>, vector<400x32xf32>, vector<49x32xf32> -> vector<49x32xf32>
    %12 = vector.broadcast %1 : vector<1x32xf32> to vector<49x32xf32>
    %13 = arith.addf %11, %12 : vector<49x32xf32>
    %cst_11 = arith.constant 0.000000e+00 : f32
    %14 = vector.broadcast %cst_11 : f32 to vector<49x32xf32>
    %15 = arith.maximumf %13, %14 : vector<49x32xf32>
    %16 = arith.maximumf %8, %15 : vector<49x32xf32>
    %c0_12 = arith.constant 0 : index
    %c0_13 = arith.constant 0 : index
    %c0_14 = arith.constant 0 : index
    %17 = vector.load %arg3[%c0_12, %c0_13, %c0_14] : memref<1x49x400xf32, #tpu.memory_space<vmem>>, vector<1x49x400xf32>
    %18 = vector.shape_cast %17 : vector<1x49x400xf32> to vector<49x400xf32>
    %cst_15 = arith.constant dense<0.000000e+00> : vector<49x32xf32>
    %19 = tpu.matmul %18, %0, %cst_15 {dimension_numbers = #tpu.dot_dimension_numbers<[1], [0], [0], [1], [0, 0, 1, 1], [], []>} : vector<49x400xf32>, vector<400x32xf32>, vector<49x32xf32> -> vector<49x32xf32>
    %20 = vector.broadcast %1 : vector<1x32xf32> to vector<49x32xf32>
    %21 = arith.addf %19, %20 : vector<49x32xf32>
    %cst_16 = arith.constant 0.000000e+00 : f32
    %22 = vector.broadcast %cst_16 : f32 to vector<49x32xf32>
    %23 = arith.maximumf %21, %22 : vector<49x32xf32>
    %c0_17 = arith.constant 0 : index
    %c0_18 = arith.constant 0 : index
    %c0_19 = arith.constant 0 : index
    %24 = vector.load %arg4[%c0_17, %c0_18, %c0_19] : memref<1x49x400xf32, #tpu.memory_space<vmem>>, vector<1x49x400xf32>
    %25 = vector.shape_cast %24 : vector<1x49x400xf32> to vector<49x400xf32>
    %cst_20 = arith.constant dense<0.000000e+00> : vector<49x32xf32>
    %26 = tpu.matmul %25, %0, %cst_20 {dimension_numbers = #tpu.dot_dimension_numbers<[1], [0], [0], [1], [0, 0, 1, 1], [], []>} : vector<49x400xf32>, vector<400x32xf32>, vector<49x32xf32> -> vector<49x32xf32>
    %27 = vector.broadcast %1 : vector<1x32xf32> to vector<49x32xf32>
    %28 = arith.addf %26, %27 : vector<49x32xf32>
    %cst_21 = arith.constant 0.000000e+00 : f32
    %29 = vector.broadcast %cst_21 : f32 to vector<49x32xf32>
    %30 = arith.maximumf %28, %29 : vector<49x32xf32>
    %31 = arith.maximumf %23, %30 : vector<49x32xf32>
    %32 = arith.maximumf %16, %31 : vector<49x32xf32>
    %c0_22 = arith.constant 0 : index
    %c0_23 = arith.constant 0 : index
    %c0_24 = arith.constant 0 : index
    %33 = vector.load %arg7[%c0_22, %c0_23, %c0_24] : memref<1x49x32xf32, #tpu.memory_space<vmem>>, vector<1x49x32xf32>
    %34 = vector.shape_cast %33 : vector<1x49x32xf32> to vector<49x32xf32>
    %35 = vector.shape_cast %32 : vector<49x32xf32> to vector<1x49x32xf32>
    tpu.vector_store %arg7[%c0_22, %c0_23, %c0_24], %35 {strides = array<i32>} : memref<1x49x32xf32, #tpu.memory_space<vmem>>, vector<1x49x32xf32>,
    return
  }
  func.func @transform_0(%arg0: i32) -> (i32, i32, i32) {
    %c0_i32 = arith.constant 0 : i32
    %c0_i32_0 = arith.constant 0 : i32
    %c0_i32_1 = arith.constant 0 : i32
    return %arg0, %c0_i32, %c0_i32_0 : i32, i32, i32
  }
  func.func @transform_1(%arg0: i32) -> (i32, i32, i32) {
    %c0_i32 = arith.constant 0 : i32
    %c0_i32_0 = arith.constant 0 : i32
    %c0_i32_1 = arith.constant 0 : i32
    return %arg0, %c0_i32, %c0_i32_0 : i32, i32, i32
  }
  func.func @transform_2(%arg0: i32) -> (i32, i32, i32) {
    %c0_i32 = arith.constant 0 : i32
    %c0_i32_0 = arith.constant 0 : i32
    %c0_i32_1 = arith.constant 0 : i32
    return %arg0, %c0_i32, %c0_i32_0 : i32, i32, i32
  }
  func.func @transform_3(%arg0: i32) -> (i32, i32, i32) {
    %c0_i32 = arith.constant 0 : i32
    %c0_i32_0 = arith.constant 0 : i32
    %c0_i32_1 = arith.constant 0 : i32
    return %arg0, %c0_i32, %c0_i32_0 : i32, i32, i32
  }
  func.func @transform_4(%arg0: i32) -> (i32, i32) {
    %c0_i32 = arith.constant 0 : i32
    %c0_i32_0 = arith.constant 0 : i32
    %c0_i32_1 = arith.constant 0 : i32
    return %c0_i32, %c0_i32_0 : i32, i32
  }
  func.func @transform_5(%arg0: i32) -> (i32, i32) {
    %c0_i32 = arith.constant 0 : i32
    %c0_i32_0 = arith.constant 0 : i32
    %c0_i32_1 = arith.constant 0 : i32
    return %c0_i32, %c0_i32_0 : i32, i32
  }
  func.func @transform_6(%arg0: i32) -> (i32, i32, i32) {
    %c0_i32 = arith.constant 0 : i32
    %c0_i32_0 = arith.constant 0 : i32
    %c0_i32_1 = arith.constant 0 : i32
    return %arg0, %c0_i32, %c0_i32_0 : i32, i32, i32
  }
}

module attributes {stable_mosaic.version = 11 : i64} {
  func.func @_linear_kernel(%arg0: i32, %arg1: memref<2x1568xf32, #tpu.memory_space<vmem>>, %arg2: memref<1568x10xf32, #tpu.memory_space<vmem>>, %arg3: memref<1x10xf32, #tpu.memory_space<vmem>>, %arg4: memref<2x10xf32, #tpu.memory_space<vmem>>) attributes {dimension_semantics = [#tpu.dimension_semantics<arbitrary>], iteration_bounds = array<i64: 1>, scalar_prefetch = 0 : i64, scratch_operands = 0 : i64, tpu.core_type = #tpu.core_type<tc>, window_params = [{pipeline_mode = #tpu.pipeline_mode<synchronous>, transform_indices = @transform_0, window_bounds = array<i64: 2, 1568>}, {pipeline_mode = #tpu.pipeline_mode<synchronous>, transform_indices = @transform_1, window_bounds = array<i64: 1568, 10>}, {pipeline_mode = #tpu.pipeline_mode<synchronous>, transform_indices = @transform_2, window_bounds = array<i64: 1, 10>}, {pipeline_mode = #tpu.pipeline_mode<synchronous>, transform_indices = @transform_3, window_bounds = array<i64: 2, 10>}]} {
    %c0 = arith.constant 0 : index
    %c0_0 = arith.constant 0 : index
    %0 = vector.load %arg1[%c0, %c0_0] : memref<2x1568xf32, #tpu.memory_space<vmem>>, vector<2x1568xf32>
    %c0_1 = arith.constant 0 : index
    %c0_2 = arith.constant 0 : index
    %1 = vector.load %arg2[%c0_1, %c0_2] : memref<1568x10xf32, #tpu.memory_space<vmem>>, vector<1568x10xf32>
    %cst = arith.constant dense<0.000000e+00> : vector<2x10xf32>
    %2 = tpu.matmul %0, %1, %cst {dimension_numbers = #tpu.dot_dimension_numbers<[1], [0], [0], [1], [0, 0, 1, 1], [], []>} : vector<2x1568xf32>, vector<1568x10xf32>, vector<2x10xf32> -> vector<2x10xf32>
    %c0_3 = arith.constant 0 : index
    %c0_4 = arith.constant 0 : index
    %3 = vector.load %arg3[%c0_3, %c0_4] : memref<1x10xf32, #tpu.memory_space<vmem>>, vector<1x10xf32>
    %4 = vector.broadcast %3 : vector<1x10xf32> to vector<2x10xf32>
    %5 = arith.addf %2, %4 : vector<2x10xf32>
    %c0_5 = arith.constant 0 : index
    %c0_6 = arith.constant 0 : index
    %6 = vector.load %arg4[%c0_5, %c0_6] : memref<2x10xf32, #tpu.memory_space<vmem>>, vector<2x10xf32>
    tpu.vector_store %arg4[%c0_5, %c0_6], %5 {strides = array<i32>} : memref<2x10xf32, #tpu.memory_space<vmem>>, vector<2x10xf32>,
    return
  }
  func.func @transform_0(%arg0: i32) -> (i32, i32) {
    %c0_i32 = arith.constant 0 : i32
    %c0_i32_0 = arith.constant 0 : i32
    %c0_i32_1 = arith.constant 0 : i32
    return %c0_i32, %c0_i32_0 : i32, i32
  }
  func.func @transform_1(%arg0: i32) -> (i32, i32) {
    %c0_i32 = arith.constant 0 : i32
    %c0_i32_0 = arith.constant 0 : i32
    %c0_i32_1 = arith.constant 0 : i32
    return %c0_i32, %c0_i32_0 : i32, i32
  }
  func.func @transform_2(%arg0: i32) -> (i32, i32) {
    %c0_i32 = arith.constant 0 : i32
    %c0_i32_0 = arith.constant 0 : i32
    %c0_i32_1 = arith.constant 0 : i32
    return %c0_i32, %c0_i32_0 : i32, i32
  }
  func.func @transform_3(%arg0: i32) -> (i32, i32) {
    %c0_i32 = arith.constant 0 : i32
    %c0_i32_0 = arith.constant 0 : i32
    %c0_i32_1 = arith.constant 0 : i32
    return %c0_i32, %c0_i32_0 : i32, i32
  }
}

</mosaic_0001>

<llo_original>
// kernel: cnn_forward.3
$region0: #{cnn_forward.3}
  #allocation0 [shape = 'u32[]', space=smem, size = 0x4, offset = 0x4, fixed_abs, tag = 'smem constant byte address 0x4 - core index']
  #allocation1 [shape = 'u32[144,128]{1,0:T(1,128)}', space=vmem, size = 0x12000, scoped, tag = 'internal scratch']
  %s0 = inlined_call_operand.vmem [shape: f32[2,196,25], index: 0, kind: input, shape index: {}]
  %s1 = inlined_call_operand.vmem [shape: f32[2,196,25], index: 1, kind: input, shape index: {}]
  %s2 = inlined_call_operand.vmem [shape: f32[2,196,25], index: 2, kind: input, shape index: {}]
  %s3 = inlined_call_operand.vmem [shape: f32[2,196,25], index: 3, kind: input, shape index: {}]
  %s4 = inlined_call_operand.vmem [shape: f32[25,16], index: 4, kind: input, shape index: {}]
  %s5 = inlined_call_operand.vmem [shape: f32[1,16], index: 5, kind: input, shape index: {}]
  %s6 = inlined_call_operand.vmem [shape: f32[2,196,16], index: 6, kind: output, shape index: {}]
  %s7 = sld [smem:[#allocation0]]
  $region57: #{cnn_forward.3} parent=0
    _
  %s9 = ssub.s32 1, %s7
  %s10 = scalar_select 0, %s9, %s7
  loop: start=0, step=1, limit=4
  $region2: #{cnn_forward.3} parent=0 // loop_pre_header
    _
  $region3: #{cnn_forward.3} parent=0 // loop_header
    %s12 = sphi 0, %s16
    %p13 = scmp.ge.s32.totalorder %s12, 4
    %s22 = sphi 0, %s24
    %s25 = sphi 0, %s22
    %s26 = sphi 0, %s25
    %s42 = sphi 0, %s26
    %s48 = sphi 0, %s50
    %s51 = sphi 0, %s48
    %s52 = sphi 0, %s51
    %s68 = sphi 0, %s52
    %s74 = sphi 0, %s76
    %s77 = sphi 0, %s74
    %s78 = sphi 0, %s77
    %s94 = sphi 0, %s78
    %s100 = sphi 0, %s102
    %s103 = sphi 0, %s100
    %s104 = sphi 0, %s103
    %s120 = sphi 0, %s104
    %s124 = sphi 0, %s124
    %s126 = sphi 0, %s124
    %s127 = sphi 0, %s126
    %s141 = sphi 0, %s127
    %s145 = sphi 0, %s145
    %s147 = sphi 0, %s145
    %s148 = sphi 0, %s147
    %s162 = sphi 0, %s148
    %s168 = sphi 0, %s170
    %s171 = sphi 0, %s168
    %s172 = sphi 0, %s171
    %s188 = sphi 0, %s172
  $region4: #{cnn_forward.3} parent=0 // loop_header_branch
    %15 = sbr.rel (%p13) target = $region8
  $region5: #{cnn_forward.3} parent=0 // loop_body
    %s17 = ssub.s32 %s12, 1
    %s18 = ssub.s32 %s12, 2
    %s19 = sadd.s32 %s12, 1
    %s20 = ssub.s32 %s12, %s19
    %p21 = scmp.eq.s32.totalorder %s20, 0
    %s23 = sadd.s32 %s22, 1
    %s24 = scalar_select %p21, %s22, %s23
    %p27 = pneg %p21
    %p28 = scmp.eq.s32.totalorder %s12, 1
    %p29 = por %p27, %p28
    %p30 = scmp.ne.s32.totalorder %s22, %s25
    %p31 = scmp.eq.s32.totalorder %s12, 0
    %p32 = por %p30, %p31
    %p33 = scmp.ne.s32.totalorder %s22, %s25
    %p34 = scmp.eq.s32.totalorder %s17, 1
    %p35 = por %p33, %p34
    %p36 = scmp.ne.s32.totalorder %s25, %s26
    %p37 = scmp.eq.s32.totalorder %s17, 0
    %p38 = por %p36, %p37
    %p39 = scmp.ne.s32.totalorder %s25, %s26
    %p40 = scmp.eq.s32.totalorder %s18, 1
    %p41 = por %p39, %p40
    %p43 = scmp.ne.s32.totalorder %s26, %s42
    %p44 = scmp.eq.s32.totalorder %s18, 0
    %p45 = por %p43, %p44
    %s46 = ssub.s32 %s12, %s19
    %p47 = scmp.eq.s32.totalorder %s46, 0
    %s49 = sadd.s32 %s48, 1
    %s50 = scalar_select %p47, %s48, %s49
    %p53 = pneg %p47
    %p54 = scmp.eq.s32.totalorder %s12, 1
    %p55 = por %p53, %p54
    %p56 = scmp.ne.s32.totalorder %s48, %s51
    %p57 = scmp.eq.s32.totalorder %s12, 0
    %p58 = por %p56, %p57
    %p59 = scmp.ne.s32.totalorder %s48, %s51
    %p60 = scmp.eq.s32.totalorder %s17, 1
    %p61 = por %p59, %p60
    %p62 = scmp.ne.s32.totalorder %s51, %s52
    %p63 = scmp.eq.s32.totalorder %s17, 0
    %p64 = por %p62, %p63
    %p65 = scmp.ne.s32.totalorder %s51, %s52
    %p66 = scmp.eq.s32.totalorder %s18, 1
    %p67 = por %p65, %p66
    %p69 = scmp.ne.s32.totalorder %s52, %s68
    %p70 = scmp.eq.s32.totalorder %s18, 0
    %p71 = por %p69, %p70
    %s72 = ssub.s32 %s12, %s19
    %p73 = scmp.eq.s32.totalorder %s72, 0
    %s75 = sadd.s32 %s74, 1
    %s76 = scalar_select %p73, %s74, %s75
    %p79 = pneg %p73
    %p80 = scmp.eq.s32.totalorder %s12, 1
    %p81 = por %p79, %p80
    %p82 = scmp.ne.s32.totalorder %s74, %s77
    %p83 = scmp.eq.s32.totalorder %s12, 0
    %p84 = por %p82, %p83
    %p85 = scmp.ne.s32.totalorder %s74, %s77
    %p86 = scmp.eq.s32.totalorder %s17, 1
    %p87 = por %p85, %p86
    %p88 = scmp.ne.s32.totalorder %s77, %s78
    %p89 = scmp.eq.s32.totalorder %s17, 0
    %p90 = por %p88, %p89
    %p91 = scmp.ne.s32.totalorder %s77, %s78
    %p92 = scmp.eq.s32.totalorder %s18, 1
    %p93 = por %p91, %p92
    %p95 = scmp.ne.s32.totalorder %s78, %s94
    %p96 = scmp.eq.s32.totalorder %s18, 0
    %p97 = por %p95, %p96
    %s98 = ssub.s32 %s12, %s19
    %p99 = scmp.eq.s32.totalorder %s98, 0
    %s101 = sadd.s32 %s100, 1
    %s102 = scalar_select %p99, %s100, %s101
    %p105 = pneg %p99
    %p106 = scmp.eq.s32.totalorder %s12, 1
    %p107 = por %p105, %p106
    %p108 = scmp.ne.s32.totalorder %s100, %s103
    %p109 = scmp.eq.s32.totalorder %s12, 0
    %p110 = por %p108, %p109
    %p111 = scmp.ne.s32.totalorder %s100, %s103
    %p112 = scmp.eq.s32.totalorder %s17, 1
    %p113 = por %p111, %p112
    %p114 = scmp.ne.s32.totalorder %s103, %s104
    %p115 = scmp.eq.s32.totalorder %s17, 0
    %p116 = por %p114, %p115
    %p117 = scmp.ne.s32.totalorder %s103, %s104
    %p118 = scmp.eq.s32.totalorder %s18, 1
    %p119 = por %p117, %p118
    %p121 = scmp.ne.s32.totalorder %s104, %s120
    %p122 = scmp.eq.s32.totalorder %s18, 0
    %p123 = por %p121, %p122
    %s125 = sadd.s32 %s124, 1
    %p128 = scmp.eq.s32.totalorder %s12, 1
    %p129 = scmp.ne.s32.totalorder %s124, %s126
    %p130 = scmp.eq.s32.totalorder %s12, 0
    %p131 = por %p129, %p130
    %p132 = scmp.ne.s32.totalorder %s124, %s126
    %p133 = scmp.eq.s32.totalorder %s17, 1
    %p134 = por %p132, %p133
    %p135 = scmp.ne.s32.totalorder %s126, %s127
    %p136 = scmp.eq.s32.totalorder %s17, 0
    %p137 = por %p135, %p136
    %p138 = scmp.ne.s32.totalorder %s126, %s127
    %p139 = scmp.eq.s32.totalorder %s18, 1
    %p140 = por %p138, %p139
    %p142 = scmp.ne.s32.totalorder %s127, %s141
    %p143 = scmp.eq.s32.totalorder %s18, 0
    %p144 = por %p142, %p143
    %s146 = sadd.s32 %s145, 1
    %p149 = scmp.eq.s32.totalorder %s12, 1
    %p150 = scmp.ne.s32.totalorder %s145, %s147
    %p151 = scmp.eq.s32.totalorder %s12, 0
    %p152 = por %p150, %p151
    %p153 = scmp.ne.s32.totalorder %s145, %s147
    %p154 = scmp.eq.s32.totalorder %s17, 1
    %p155 = por %p153, %p154
    %p156 = scmp.ne.s32.totalorder %s147, %s148
    %p157 = scmp.eq.s32.totalorder %s17, 0
    %p158 = por %p156, %p157
    %p159 = scmp.ne.s32.totalorder %s147, %s148
    %p160 = scmp.eq.s32.totalorder %s18, 1
    %p161 = por %p159, %p160
    %p163 = scmp.ne.s32.totalorder %s148, %s162
    %p164 = scmp.eq.s32.totalorder %s18, 0
    %p165 = por %p163, %p164
    %s166 = ssub.s32 %s12, %s19
    %p167 = scmp.eq.s32.totalorder %s166, 0
    %s169 = sadd.s32 %s168, 1
    %s170 = scalar_select %p167, %s168, %s169
    %p173 = pneg %p167
    %p174 = scmp.eq.s32.totalorder %s12, 1
    %p175 = por %p173, %p174
    %p176 = scmp.ne.s32.totalorder %s168, %s171
    %p177 = scmp.eq.s32.totalorder %s12, 0
    %p178 = por %p176, %p177
    %p179 = scmp.ne.s32.totalorder %s168, %s171
    %p180 = scmp.eq.s32.totalorder %s17, 1
    %p181 = por %p179, %p180
    %p182 = scmp.ne.s32.totalorder %s171, %s172
    %p183 = scmp.eq.s32.totalorder %s17, 0
    %p184 = por %p182, %p183
    %p185 = scmp.ne.s32.totalorder %s171, %s172
    %p186 = scmp.eq.s32.totalorder %s18, 1
    %p187 = por %p185, %p186
    %p189 = scmp.ne.s32.totalorder %s172, %s188
    %p190 = scmp.eq.s32.totalorder %s18, 0
    %p191 = por %p189, %p190
    %p192 = scmp.le.s32.totalorder 1, %s12
    %p193 = scmp.lt.s32.totalorder %s12, 3
    %p194 = pnand %p192, %p193
    %p195 = pneg %p194
    // Predicated region
    $region9: #{cnn_forward.3} parent=5 // pred_check
      _
    $region10: #{cnn_forward.3} parent=5 // pred_check_branch
      %197 = sbr.rel (%p194) target = $region12
    $region11: #{cnn_forward.3} parent=5 // pred_region
      %s198 = ssub.s32 %s12, 1
      // Predicated region
      $region13: #{cnn_forward.3} parent=11 // pred_check
        %p199 = pneg %p137
      $region14: #{cnn_forward.3} parent=11 // pred_check_branch
        %201 = sbr.rel (%p199) target = $region16
      $region15: #{cnn_forward.3} parent=11 // pred_region
        _
      $region16: #{cnn_forward.3} parent=11 // pred_fallthru
        _
      // Predicated region
      $region17: #{cnn_forward.3} parent=11 // pred_check
        %p202 = pneg %p158
      $region18: #{cnn_forward.3} parent=11 // pred_check_branch
        %204 = sbr.rel (%p202) target = $region20
      $region19: #{cnn_forward.3} parent=11 // pred_region
        _
      $region20: #{cnn_forward.3} parent=11 // pred_fallthru
        _
    $region12: #{cnn_forward.3} parent=5 // pred_fallthru
      _
    %p205 = scmp.lt.s32.totalorder %s12, 2
    // Predicated region
    $region21: #{cnn_forward.3} parent=5 // pred_check
      %p206 = pneg %p205
    $region22: #{cnn_forward.3} parent=5 // pred_check_branch
      %208 = sbr.rel (%p206) target = $region24
    $region23: #{cnn_forward.3} parent=5 // pred_region
      // Predicated region
      $region25: #{cnn_forward.3} parent=23 // pred_check
        %p209 = pneg %p32
      $region26: #{cnn_forward.3} parent=23 // pred_check_branch
        %211 = sbr.rel (%p209) target = $region28
      $region27: #{cnn_forward.3} parent=23 // pred_region
        %p212 = scmp.lt.s32.totalorder %s12, 1
        %s213 = scalar_select %p212, %s12, 1
        %s214 = smul.addr %s213, 25
        %s215 = smul.addr %s214, 8
        %s216 = scalar_lea.vmem %s0, %s215
      $region28: #{cnn_forward.3} parent=23 // pred_fallthru
        _
      // Predicated region
      $region29: #{cnn_forward.3} parent=23 // pred_check
        %p217 = pneg %p58
      $region30: #{cnn_forward.3} parent=23 // pred_check_branch
        %219 = sbr.rel (%p217) target = $region32
      $region31: #{cnn_forward.3} parent=23 // pred_region
        %p220 = scmp.lt.s32.totalorder %s12, 1
        %s221 = scalar_select %p220, %s12, 1
        %s222 = smul.addr %s221, 25
        %s223 = smul.addr %s222, 8
        %s224 = scalar_lea.vmem %s1, %s223
      $region32: #{cnn_forward.3} parent=23 // pred_fallthru
        _
      // Predicated region
      $region33: #{cnn_forward.3} parent=23 // pred_check
        %p225 = pneg %p84
      $region34: #{cnn_forward.3} parent=23 // pred_check_branch
        %227 = sbr.rel (%p225) target = $region36
      $region35: #{cnn_forward.3} parent=23 // pred_region
        %p228 = scmp.lt.s32.totalorder %s12, 1
        %s229 = scalar_select %p228, %s12, 1
        %s230 = smul.addr %s229, 25
        %s231 = smul.addr %s230, 8
        %s232 = scalar_lea.vmem %s2, %s231
      $region36: #{cnn_forward.3} parent=23 // pred_fallthru
        _
      // Predicated region
      $region37: #{cnn_forward.3} parent=23 // pred_check
        %p233 = pneg %p110
      $region38: #{cnn_forward.3} parent=23 // pred_check_branch
        %235 = sbr.rel (%p233) target = $region40
      $region39: #{cnn_forward.3} parent=23 // pred_region
        %p236 = scmp.lt.s32.totalorder %s12, 1
        %s237 = scalar_select %p236, %s12, 1
        %s238 = smul.addr %s237, 25
        %s239 = smul.addr %s238, 8
        %s240 = scalar_lea.vmem %s3, %s239
      $region40: #{cnn_forward.3} parent=23 // pred_fallthru
        _
    $region24: #{cnn_forward.3} parent=5 // pred_fallthru
      _
    %p241 = scmp.le.s32.totalorder 1, %s12
    %p242 = scmp.lt.s32.totalorder %s12, 3
    %p243 = pnand %p241, %p242
    %p244 = pneg %p243
    // Predicated region
    $region41: #{cnn_forward.3} parent=5 // pred_check
      _
    $region42: #{cnn_forward.3} parent=5 // pred_check_branch
      %246 = sbr.rel (%p243) target = $region44
    $region43: #{cnn_forward.3} parent=5 // pred_region
      %s247 = ssub.s32 %s12, 1
      %p248 = scmp.lt.s32.totalorder %s17, 1
      %s249 = scalar_select %p248, %s17, 1
      %s250 = smul.addr %s249, 25
      %s251 = smul.addr %s250, 8
      %s252 = scalar_lea.vmem %s0, %s251
      %p253 = pneg %p38
      %p254 = pneg %p35
      %p255 = scmp.lt.s32.totalorder %s17, 1
      %s256 = scalar_select %p255, %s17, 1
      %s257 = smul.addr %s256, 25
      %s258 = smul.addr %s257, 8
      %s259 = scalar_lea.vmem %s1, %s258
      %p260 = pneg %p64
      %p261 = pneg %p61
      %p262 = scmp.lt.s32.totalorder %s17, 1
      %s263 = scalar_select %p262, %s17, 1
      %s264 = smul.addr %s263, 25
      %s265 = smul.addr %s264, 8
      %s266 = scalar_lea.vmem %s2, %s265
      %p267 = pneg %p90
      %p268 = pneg %p87
      %p269 = scmp.lt.s32.totalorder %s17, 1
      %s270 = scalar_select %p269, %s17, 1
      %s271 = smul.addr %s270, 25
      %s272 = smul.addr %s271, 8
      %s273 = scalar_lea.vmem %s3, %s272
      %p274 = pneg %p116
      %p275 = pneg %p113
      %p276 = pneg %p137
      %p277 = pneg %p134
      %p278 = pneg %p158
      %p279 = pneg %p155
      %p280 = pneg %p184
      %p281 = pneg %p181
      %p282 = scmp.lt.s32.totalorder %s17, 1
      %s283 = scalar_select %p282, %s17, 1
      %s284 = smul.addr %s283, 25
      %s285 = smul.addr %s284, 8
      %s286 = scalar_lea.vmem %s6, %s285
      %p287 = scmp.lt.s32.totalorder %s17, 1
      %s288 = scalar_select %p287, %s17, 1
      %s289 = smul.addr %s288, 25
      %s290 = smul.addr %s289, 8
      %s291 = scalar_lea.vmem %s0, %s290
      %p292 = scmp.lt.s32.totalorder %s17, 1
      %s293 = scalar_select %p292, %s17, 1
      %s294 = smul.addr %s293, 25
      %s295 = smul.addr %s294, 8
      %s296 = scalar_lea.vmem %s1, %s295
      %p297 = scmp.lt.s32.totalorder %s17, 1
      %s298 = scalar_select %p297, %s17, 1
      %s299 = smul.addr %s298, 25
      %s300 = smul.addr %s299, 8
      %s301 = scalar_lea.vmem %s2, %s300
      %p302 = scmp.lt.s32.totalorder %s17, 1
      %s303 = scalar_select %p302, %s17, 1
      %s304 = smul.addr %s303, 25
      %s305 = smul.addr %s304, 8
      %s306 = scalar_lea.vmem %s3, %s305
      %p307 = scmp.lt.s32.totalorder %s17, 1
      %s308 = scalar_select %p307, %s17, 1
      %s309 = smul.addr %s308, 25
      %s310 = smul.addr %s309, 8
      %s311 = scalar_lea.vmem %s6, %s310
      %v312 = vld [vmem:[%s4] sm:$0xff]
      %v313 = vld [vmem:[%s4 + $0x8] sm:$0xff]
      %v314 = vld [vmem:[%s4 + $0x10] sm:$0xff]
      %v315 = vld [vmem:[%s4 + $0x18] sm:$0x1]
      %v316 = vld [vmem:[%s5] sm:$0x1]
      %v317 = vld [vmem:[%s291] sm:$0xff]
      %v318 = vld [vmem:[%s291 + $0x8] sm:$0xff]
      %v319 = vld [vmem:[%s291 + $0x10] sm:$0xff]
      %v320 = vld [vmem:[%s291 + $0x18] sm:$0xff]
      %v321 = vld [vmem:[%s291 + $0x20] sm:$0xff]
      %v322 = vld [vmem:[%s291 + $0x28] sm:$0xff]
      %v323 = vld [vmem:[%s291 + $0x30] sm:$0xff]
      %v324 = vld [vmem:[%s291 + $0x38] sm:$0xff]
      %v325 = vld [vmem:[%s291 + $0x40] sm:$0xff]
      %v326 = vld [vmem:[%s291 + $0x48] sm:$0xff]
      %v327 = vld [vmem:[%s291 + $0x50] sm:$0xff]
      %v328 = vld [vmem:[%s291 + $0x58] sm:$0xff]
      %v329 = vld [vmem:[%s291 + $0x60] sm:$0xff]
      %v330 = vld [vmem:[%s291 + $0x68] sm:$0xff]
      %v331 = vld [vmem:[%s291 + $0x70] sm:$0xff]
      %v332 = vld [vmem:[%s291 + $0x78] sm:$0xff]
      %v333 = vld [vmem:[%s291 + $0x80] sm:$0xff]
      %v334 = vld [vmem:[%s291 + $0x88] sm:$0xff]
      %v335 = vld [vmem:[%s291 + $0x90] sm:$0xff]
      %v336 = vld [vmem:[%s291 + $0x98] sm:$0xff]
      %v337 = vld [vmem:[%s291 + $0xa0] sm:$0xff]
      %v338 = vld [vmem:[%s291 + $0xa8] sm:$0xff]
      %v339 = vld [vmem:[%s291 + $0xb0] sm:$0xff]
      %v340 = vld [vmem:[%s291 + $0xb8] sm:$0xff]
      %v341 = vld [vmem:[%s291 + $0xc0] sm:$0xf]
      %v343 = vlaneseq
      %v344 = vshrl.u32 %v343, 7
      %v345 = vsub.s32 0, %v344
      %v346 = vrot.slane %v316, %v345
      %vm348 = vcmask 203776
      %v350 = vsel %vm348, %v317, 0
      %v353 = vsel %vm348, %v318, 0
      %v356 = vsel %vm348, %v319, 0
      %v359 = vsel %vm348, %v320, 0
      %v362 = vsel %vm348, %v321, 0
      %v365 = vsel %vm348, %v322, 0
      %v368 = vsel %vm348, %v323, 0
      %v371 = vsel %vm348, %v324, 0
      %v374 = vsel %vm348, %v325, 0
      %v377 = vsel %vm348, %v326, 0
      %v380 = vsel %vm348, %v327, 0
      %v383 = vsel %vm348, %v328, 0
      %v386 = vsel %vm348, %v329, 0
      %v389 = vsel %vm348, %v330, 0
      %v392 = vsel %vm348, %v331, 0
      %v395 = vsel %vm348, %v332, 0
      %v398 = vsel %vm348, %v333, 0
      %v401 = vsel %vm348, %v334, 0
      %v404 = vsel %vm348, %v335, 0
      %v407 = vsel %vm348, %v336, 0
      %v410 = vsel %vm348, %v337, 0
      %v413 = vsel %vm348, %v338, 0
      %v416 = vsel %vm348, %v339, 0
      %v419 = vsel %vm348, %v340, 0
      %v422 = vsel %vm348, %v341, 0
      %vm424 = vcmask 1040384
      %v426 = vsel %vm424, %v315, 0
      %428 = vmatprep.subr.mxu0 0.0
      %429 = vmatpush1.msra.mxu0 0.0
      %430 = vmatprep.subr.mxu0 0.0
      %431 = vmatpush1.msra.mxu0 0.0
      %432 = vmatprep.subr.mxu0 0.0
      %433 = vmatpush1.msra.mxu0 0.0
      %434 = vmatprep.subr.mxu0 0.0
      %435 = vmatpush1.msra.mxu0 0.0
      %436 = vmatprep.subr.mxu0 0.0
      %437 = vmatpush1.msra.mxu0 0.0
      %438 = vmatprep.subr.mxu0 0.0
      %439 = vmatpush1.msra.mxu0 0.0
      %440 = vmatprep.subr.mxu0 0.0
      %441 = vmatpush1.msra.mxu0 0.0
      %442 = vmatprep.subr.mxu0 0.0
      %443 = vmatpush1.msra.mxu0 0.0
      %444 = vmatprep.subr.mxu0 0.0
      %445 = vmatpush1.msra.mxu0 0.0
      %446 = vmatprep.subr.mxu0 0.0
      %447 = vmatpush1.msra.mxu0 0.0
      %448 = vmatprep.subr.mxu0 0.0
      %449 = vmatpush1.msra.mxu0 0.0
      %450 = vmatprep.subr.mxu0 0.0
      %451 = vmatpush1.msra.mxu0 0.0
      %452 = vmatprep.subr.mxu0 0.0
      %453 = vmatpush1.msra.mxu0 %v426
      %454 = vmatprep.subr.mxu0 0.0
      %455 = vmatpush1.msra.mxu0 %v314
      %456 = vmatprep.subr.mxu0 0.0
      %457 = vmatpush1.msra.mxu0 %v313
      %458 = vmatprep.subr.mxu0 0.0
      %459 = vmatpush1.msra.mxu0 %v312
      %460 = vmatprep.subr.mxu0 0.0
      %461 = vmatpush2.msra.mxu0 0.0
      %462 = vmatprep.subr.mxu0 0.0
      %463 = vmatpush2.msra.mxu0 0.0
      %464 = vmatprep.subr.mxu0 0.0
      %465 = vmatpush2.msra.mxu0 0.0
      %466 = vmatprep.subr.mxu0 0.0
      %467 = vmatpush2.msra.mxu0 0.0
      %468 = vmatprep.subr.mxu0 0.0
      %469 = vmatpush2.msra.mxu0 0.0
      %470 = vmatprep.subr.mxu0 0.0
      %471 = vmatpush2.msra.mxu0 0.0
      %472 = vmatprep.subr.mxu0 0.0
      %473 = vmatpush2.msra.mxu0 0.0
      %474 = vmatprep.subr.mxu0 0.0
      %475 = vmatpush2.msra.mxu0 0.0
      %476 = vmatprep.subr.mxu0 0.0
      %477 = vmatpush2.msra.mxu0 0.0
      %478 = vmatprep.subr.mxu0 0.0
      %479 = vmatpush2.msra.mxu0 0.0
      %480 = vmatprep.subr.mxu0 0.0
      %481 = vmatpush2.msra.mxu0 0.0
      %482 = vmatprep.subr.mxu0 0.0
      %483 = vmatpush2.msra.mxu0 0.0
      %484 = vmatprep.subr.mxu0 0.0
      %485 = vmatpush2.msra.mxu0 0.0
      %486 = vmatprep.subr.mxu0 0.0
      %487 = vmatpush2.msra.mxu0 0.0
      %488 = vmatprep.subr.mxu0 0.0
      %489 = vmatpush2.msra.mxu0 0.0
      %490 = vmatprep.subr.mxu0 0.0
      %491 = vmatpush2.msra.mxu0 0.0
      %492 = vmatprep.mubr.f32.mxu0 0.0
      %493 = vmatmul.mubr.f32.gmra.mxu0 %v350
      %v494 = vpop.f32.mrf.mxu0
      %v495 = vadd.f32 %v346, %v494
      %v496 = vpop.f32.mrf.mxu0
      %497 = vmatprep.mubr.f32.mxu0 0.0
      %498 = vmatmul.mubr.f32.gmra.mxu0 %v353
      %v499 = vpop.f32.mrf.mxu0
      %v500 = vadd.f32 %v346, %v499
      %v501 = vpop.f32.mrf.mxu0
      %502 = vmatprep.mubr.f32.mxu0 0.0
      %503 = vmatmul.mubr.f32.gmra.mxu0 %v356
      %v504 = vpop.f32.mrf.mxu0
      %v505 = vadd.f32 %v346, %v504
      %v506 = vpop.f32.mrf.mxu0
      %507 = vmatprep.mubr.f32.mxu0 0.0
      %508 = vmatmul.mubr.f32.gmra.mxu0 %v359
      %v509 = vpop.f32.mrf.mxu0
      %v510 = vadd.f32 %v346, %v509
      %v511 = vpop.f32.mrf.mxu0
      %512 = vmatprep.mubr.f32.mxu0 0.0
      %513 = vmatmul.mubr.f32.gmra.mxu0 %v362
      %v514 = vpop.f32.mrf.mxu0
      %v515 = vadd.f32 %v346, %v514
      %v516 = vpop.f32.mrf.mxu0
      %517 = vmatprep.mubr.f32.mxu0 0.0
      %518 = vmatmul.mubr.f32.gmra.mxu0 %v365
      %v519 = vpop.f32.mrf.mxu0
      %v520 = vadd.f32 %v346, %v519
      %v521 = vpop.f32.mrf.mxu0
      %522 = vmatprep.mubr.f32.mxu0 0.0
      %523 = vmatmul.mubr.f32.gmra.mxu0 %v368
      %v524 = vpop.f32.mrf.mxu0
      %v525 = vadd.f32 %v346, %v524
      %v526 = vpop.f32.mrf.mxu0
      %527 = vmatprep.mubr.f32.mxu0 0.0
      %528 = vmatmul.mubr.f32.gmra.mxu0 %v371
      %v529 = vpop.f32.mrf.mxu0
      %v530 = vadd.f32 %v346, %v529
      %v531 = vpop.f32.mrf.mxu0
      %532 = vmatprep.mubr.f32.mxu0 0.0
      %533 = vmatmul.mubr.f32.gmra.mxu0 %v374
      %v534 = vpop.f32.mrf.mxu0
      %v535 = vadd.f32 %v346, %v534
      %v536 = vpop.f32.mrf.mxu0
      %537 = vmatprep.mubr.f32.mxu0 0.0
      %538 = vmatmul.mubr.f32.gmra.mxu0 %v377
      %v539 = vpop.f32.mrf.mxu0
      %v540 = vadd.f32 %v346, %v539
      %v541 = vpop.f32.mrf.mxu0
      %542 = vmatprep.mubr.f32.mxu0 0.0
      %543 = vmatmul.mubr.f32.gmra.mxu0 %v380
      %v544 = vpop.f32.mrf.mxu0
      %v545 = vadd.f32 %v346, %v544
      %v546 = vpop.f32.mrf.mxu0
      %547 = vmatprep.mubr.f32.mxu0 0.0
      %548 = vmatmul.mubr.f32.gmra.mxu0 %v383
      %v549 = vpop.f32.mrf.mxu0
      %v550 = vadd.f32 %v346, %v549
      %v551 = vpop.f32.mrf.mxu0
      %552 = vmatprep.mubr.f32.mxu0 0.0
      %553 = vmatmul.mubr.f32.gmra.mxu0 %v386
      %v554 = vpop.f32.mrf.mxu0
      %v555 = vadd.f32 %v346, %v554
      %v556 = vpop.f32.mrf.mxu0
      %557 = vmatprep.mubr.f32.mxu0 0.0
      %558 = vmatmul.mubr.f32.gmra.mxu0 %v389
      %v559 = vpop.f32.mrf.mxu0
      %v560 = vadd.f32 %v346, %v559
      %v561 = vpop.f32.mrf.mxu0
      %562 = vmatprep.mubr.f32.mxu0 0.0
      %563 = vmatmul.mubr.f32.gmra.mxu0 %v392
      %v564 = vpop.f32.mrf.mxu0
      %v565 = vadd.f32 %v346, %v564
      %v566 = vpop.f32.mrf.mxu0
      %567 = vmatprep.mubr.f32.mxu0 0.0
      %568 = vmatmul.mubr.f32.gmra.mxu0 %v395
      %v569 = vpop.f32.mrf.mxu0
      %v570 = vadd.f32 %v346, %v569
      %v571 = vpop.f32.mrf.mxu0
      %572 = vmatprep.mubr.f32.mxu0 0.0
      %573 = vmatmul.mubr.f32.gmra.mxu0 %v398
      %v574 = vpop.f32.mrf.mxu0
      %v575 = vadd.f32 %v346, %v574
      %v576 = vpop.f32.mrf.mxu0
      %577 = vmatprep.mubr.f32.mxu0 0.0
      %578 = vmatmul.mubr.f32.gmra.mxu0 %v401
      %v579 = vpop.f32.mrf.mxu0
      %v580 = vadd.f32 %v346, %v579
      %v581 = vpop.f32.mrf.mxu0
      %582 = vmatprep.mubr.f32.mxu0 0.0
      %583 = vmatmul.mubr.f32.gmra.mxu0 %v404
      %v584 = vpop.f32.mrf.mxu0
      %v585 = vadd.f32 %v346, %v584
      %v586 = vpop.f32.mrf.mxu0
      %587 = vmatprep.mubr.f32.mxu0 0.0
      %588 = vmatmul.mubr.f32.gmra.mxu0 %v407
      %v589 = vpop.f32.mrf.mxu0
      %v590 = vadd.f32 %v346, %v589
      %v591 = vpop.f32.mrf.mxu0
      %592 = vmatprep.mubr.f32.mxu0 0.0
      %593 = vmatmul.mubr.f32.gmra.mxu0 %v410
      %v594 = vpop.f32.mrf.mxu0
      %v595 = vadd.f32 %v346, %v594
      %v596 = vpop.f32.mrf.mxu0
      %597 = vmatprep.mubr.f32.mxu0 0.0
      %598 = vmatmul.mubr.f32.gmra.mxu0 %v413
      %v599 = vpop.f32.mrf.mxu0
      %v600 = vadd.f32 %v346, %v599
      %v601 = vpop.f32.mrf.mxu0
      %602 = vmatprep.mubr.f32.mxu0 0.0
      %603 = vmatmul.mubr.f32.gmra.mxu0 %v416
      %v604 = vpop.f32.mrf.mxu0
      %v605 = vadd.f32 %v346, %v604
      %v606 = vpop.f32.mrf.mxu0
      %607 = vmatprep.mubr.f32.mxu0 0.0
      %608 = vmatmul.mubr.f32.gmra.mxu0 %v419
      %v609 = vpop.f32.mrf.mxu0
      %v610 = vadd.f32 %v346, %v609
      %v611 = vpop.f32.mrf.mxu0
      %612 = vmatprep.mubr.f32.mxu0 0.0
      %613 = vmatmul.mubr.f32.gmra.mxu0 %v422
      %v614 = vpop.f32.mrf.mxu0
      %v615 = vadd.f32 %v346, %v614
      %v616 = vpop.f32.mrf.mxu0
      %617 = vdwg.mxu0
      %v618 = vmax.f32 %v495, 0.0
      %v619 = vmax.f32 %v500, 0.0
      %v620 = vmax.f32 %v505, 0.0
      %v621 = vmax.f32 %v510, 0.0
      %v622 = vmax.f32 %v515, 0.0
      %v623 = vmax.f32 %v520, 0.0
      %v624 = vmax.f32 %v525, 0.0
      %v625 = vmax.f32 %v530, 0.0
      %v626 = vmax.f32 %v535, 0.0
      %v627 = vmax.f32 %v540, 0.0
      %v628 = vmax.f32 %v545, 0.0
      %v629 = vmax.f32 %v550, 0.0
      %v630 = vmax.f32 %v555, 0.0
      %v631 = vmax.f32 %v560, 0.0
      %v632 = vmax.f32 %v565, 0.0
      %v633 = vmax.f32 %v570, 0.0
      %v634 = vmax.f32 %v575, 0.0
      %v635 = vmax.f32 %v580, 0.0
      %v636 = vmax.f32 %v585, 0.0
      %v637 = vmax.f32 %v590, 0.0
      %v638 = vmax.f32 %v595, 0.0
      %v639 = vmax.f32 %v600, 0.0
      %v640 = vmax.f32 %v605, 0.0
      %v641 = vmax.f32 %v610, 0.0
      %v642 = vmax.f32 %v615, 0.0
      %v643 = vld [vmem:[%s296] sm:$0xff]
      %v644 = vld [vmem:[%s296 + $0x8] sm:$0xff]
      %v645 = vld [vmem:[%s296 + $0x10] sm:$0xff]
      %v646 = vld [vmem:[%s296 + $0x18] sm:$0xff]
      %v647 = vld [vmem:[%s296 + $0x20] sm:$0xff]
      %v648 = vld [vmem:[%s296 + $0x28] sm:$0xff]
      %v649 = vld [vmem:[%s296 + $0x30] sm:$0xff]
      %v650 = vld [vmem:[%s296 + $0x38] sm:$0xff]
      %v651 = vld [vmem:[%s296 + $0x40] sm:$0xff]
      %v652 = vld [vmem:[%s296 + $0x48] sm:$0xff]
      %v653 = vld [vmem:[%s296 + $0x50] sm:$0xff]
      %v654 = vld [vmem:[%s296 + $0x58] sm:$0xff]
      %v655 = vld [vmem:[%s296 + $0x60] sm:$0xff]
      %v656 = vld [vmem:[%s296 + $0x68] sm:$0xff]
      %v657 = vld [vmem:[%s296 + $0x70] sm:$0xff]
      %v658 = vld [vmem:[%s296 + $0x78] sm:$0xff]
      %v659 = vld [vmem:[%s296 + $0x80] sm:$0xff]
      %v660 = vld [vmem:[%s296 + $0x88] sm:$0xff]
      %v661 = vld [vmem:[%s296 + $0x90] sm:$0xff]
      %v662 = vld [vmem:[%s296 + $0x98] sm:$0xff]
      %v663 = vld [vmem:[%s296 + $0xa0] sm:$0xff]
      %v664 = vld [vmem:[%s296 + $0xa8] sm:$0xff]
      %v665 = vld [vmem:[%s296 + $0xb0] sm:$0xff]
      %v666 = vld [vmem:[%s296 + $0xb8] sm:$0xff]
      %v667 = vld [vmem:[%s296 + $0xc0] sm:$0xf]
      %v669 = vsel %vm348, %v643, 0
      %v672 = vsel %vm348, %v644, 0
      %v675 = vsel %vm348, %v645, 0
      %v678 = vsel %vm348, %v646, 0
      %v681 = vsel %vm348, %v647, 0
      %v684 = vsel %vm348, %v648, 0
      %v687 = vsel %vm348, %v649, 0
      %v690 = vsel %vm348, %v650, 0
      %v693 = vsel %vm348, %v651, 0
      %v696 = vsel %vm348, %v652, 0
      %v699 = vsel %vm348, %v653, 0
      %v702 = vsel %vm348, %v654, 0
      %v705 = vsel %vm348, %v655, 0
      %v708 = vsel %vm348, %v656, 0
      %v711 = vsel %vm348, %v657, 0
      %v714 = vsel %vm348, %v658, 0
      %v717 = vsel %vm348, %v659, 0
      %v720 = vsel %vm348, %v660, 0
      %v723 = vsel %vm348, %v661, 0
      %v726 = vsel %vm348, %v662, 0
      %v729 = vsel %vm348, %v663, 0
      %v732 = vsel %vm348, %v664, 0
      %v735 = vsel %vm348, %v665, 0
      %v738 = vsel %vm348, %v666, 0
      %v741 = vsel %vm348, %v667, 0
      %743 = vmatprep.subr.mxu0 0.0
      %744 = vmatpush1.msra.mxu0 0.0
      %745 = vmatprep.subr.mxu0 0.0
      %746 = vmatpush1.msra.mxu0 0.0
      %747 = vmatprep.subr.mxu0 0.0
      %748 = vmatpush1.msra.mxu0 0.0
      %749 = vmatprep.subr.mxu0 0.0
      %750 = vmatpush1.msra.mxu0 0.0
      %751 = vmatprep.subr.mxu0 0.0
      %752 = vmatpush1.msra.mxu0 0.0
      %753 = vmatprep.subr.mxu0 0.0
      %754 = vmatpush1.msra.mxu0 0.0
      %755 = vmatprep.subr.mxu0 0.0
      %756 = vmatpush1.msra.mxu0 0.0
      %757 = vmatprep.subr.mxu0 0.0
      %758 = vmatpush1.msra.mxu0 0.0
      %759 = vmatprep.subr.mxu0 0.0
      %760 = vmatpush1.msra.mxu0 0.0
      %761 = vmatprep.subr.mxu0 0.0
      %762 = vmatpush1.msra.mxu0 0.0
      %763 = vmatprep.subr.mxu0 0.0
      %764 = vmatpush1.msra.mxu0 0.0
      %765 = vmatprep.subr.mxu0 0.0
      %766 = vmatpush1.msra.mxu0 0.0
      %767 = vmatprep.subr.mxu0 0.0
      %768 = vmatpush1.msra.mxu0 %v426
      %769 = vmatprep.subr.mxu0 0.0
      %770 = vmatpush1.msra.mxu0 %v314
      %771 = vmatprep.subr.mxu0 0.0
      %772 = vmatpush1.msra.mxu0 %v313
      %773 = vmatprep.subr.mxu0 0.0
      %774 = vmatpush1.msra.mxu0 %v312
      %775 = vmatprep.subr.mxu0 0.0
      %776 = vmatpush2.msra.mxu0 0.0
      %777 = vmatprep.subr.mxu0 0.0
      %778 = vmatpush2.msra.mxu0 0.0
      %779 = vmatprep.subr.mxu0 0.0
      %780 = vmatpush2.msra.mxu0 0.0
      %781 = vmatprep.subr.mxu0 0.0
      %782 = vmatpush2.msra.mxu0 0.0
      %783 = vmatprep.subr.mxu0 0.0
      %784 = vmatpush2.msra.mxu0 0.0
      %785 = vmatprep.subr.mxu0 0.0
      %786 = vmatpush2.msra.mxu0 0.0
      %787 = vmatprep.subr.mxu0 0.0
      %788 = vmatpush2.msra.mxu0 0.0
      %789 = vmatprep.subr.mxu0 0.0
      %790 = vmatpush2.msra.mxu0 0.0
      %791 = vmatprep.subr.mxu0 0.0
      %792 = vmatpush2.msra.mxu0 0.0
      %793 = vmatprep.subr.mxu0 0.0
      %794 = vmatpush2.msra.mxu0 0.0
      %795 = vmatprep.subr.mxu0 0.0
      %796 = vmatpush2.msra.mxu0 0.0
      %797 = vmatprep.subr.mxu0 0.0
      %798 = vmatpush2.msra.mxu0 0.0
      %799 = vmatprep.subr.mxu0 0.0
      %800 = vmatpush2.msra.mxu0 0.0
      %801 = vmatprep.subr.mxu0 0.0
      %802 = vmatpush2.msra.mxu0 0.0
      %803 = vmatprep.subr.mxu0 0.0
      %804 = vmatpush2.msra.mxu0 0.0
      %805 = vmatprep.subr.mxu0 0.0
      %806 = vmatpush2.msra.mxu0 0.0
      %807 = vmatprep.mubr.f32.mxu0 0.0
      %808 = vmatmul.mubr.f32.gmra.mxu0 %v669
      %v809 = vpop.f32.mrf.mxu0
      %v810 = vadd.f32 %v346, %v809
      %v811 = vpop.f32.mrf.mxu0
      %812 = vmatprep.mubr.f32.mxu0 0.0
      %813 = vmatmul.mubr.f32.gmra.mxu0 %v672
      %v814 = vpop.f32.mrf.mxu0
      %v815 = vadd.f32 %v346, %v814
      %v816 = vpop.f32.mrf.mxu0
      %817 = vmatprep.mubr.f32.mxu0 0.0
      %818 = vmatmul.mubr.f32.gmra.mxu0 %v675
      %v819 = vpop.f32.mrf.mxu0
      %v820 = vadd.f32 %v346, %v819
      %v821 = vpop.f32.mrf.mxu0
      %822 = vmatprep.mubr.f32.mxu0 0.0
      %823 = vmatmul.mubr.f32.gmra.mxu0 %v678
      %v824 = vpop.f32.mrf.mxu0
      %v825 = vadd.f32 %v346, %v824
      %v826 = vpop.f32.mrf.mxu0
      %827 = vmatprep.mubr.f32.mxu0 0.0
      %828 = vmatmul.mubr.f32.gmra.mxu0 %v681
      %v829 = vpop.f32.mrf.mxu0
      %v830 = vadd.f32 %v346, %v829
      %v831 = vpop.f32.mrf.mxu0
      %832 = vmatprep.mubr.f32.mxu0 0.0
      %833 = vmatmul.mubr.f32.gmra.mxu0 %v684
      %v834 = vpop.f32.mrf.mxu0
      %v835 = vadd.f32 %v346, %v834
      %v836 = vpop.f32.mrf.mxu0
      %837 = vmatprep.mubr.f32.mxu0 0.0
      %838 = vmatmul.mubr.f32.gmra.mxu0 %v687
      %v839 = vpop.f32.mrf.mxu0
      %v840 = vadd.f32 %v346, %v839
      %v841 = vpop.f32.mrf.mxu0
      %842 = vmatprep.mubr.f32.mxu0 0.0
      %843 = vmatmul.mubr.f32.gmra.mxu0 %v690
      %v844 = vpop.f32.mrf.mxu0
      %v845 = vadd.f32 %v346, %v844
      %v846 = vpop.f32.mrf.mxu0
      %847 = vmatprep.mubr.f32.mxu0 0.0
      %848 = vmatmul.mubr.f32.gmra.mxu0 %v693
      %v849 = vpop.f32.mrf.mxu0
      %v850 = vadd.f32 %v346, %v849
      %v851 = vpop.f32.mrf.mxu0
      %852 = vmatprep.mubr.f32.mxu0 0.0
      %853 = vmatmul.mubr.f32.gmra.mxu0 %v696
      %v854 = vpop.f32.mrf.mxu0
      %v855 = vadd.f32 %v346, %v854
      %v856 = vpop.f32.mrf.mxu0
      %857 = vmatprep.mubr.f32.mxu0 0.0
      %858 = vmatmul.mubr.f32.gmra.mxu0 %v699
      %v859 = vpop.f32.mrf.mxu0
      %v860 = vadd.f32 %v346, %v859
      %v861 = vpop.f32.mrf.mxu0
      %862 = vmatprep.mubr.f32.mxu0 0.0
      %863 = vmatmul.mubr.f32.gmra.mxu0 %v702
      %v864 = vpop.f32.mrf.mxu0
      %v865 = vadd.f32 %v346, %v864
      %v866 = vpop.f32.mrf.mxu0
      %867 = vmatprep.mubr.f32.mxu0 0.0
      %868 = vmatmul.mubr.f32.gmra.mxu0 %v705
      %v869 = vpop.f32.mrf.mxu0
      %v870 = vadd.f32 %v346, %v869
      %v871 = vpop.f32.mrf.mxu0
      %872 = vmatprep.mubr.f32.mxu0 0.0
      %873 = vmatmul.mubr.f32.gmra.mxu0 %v708
      %v874 = vpop.f32.mrf.mxu0
      %v875 = vadd.f32 %v346, %v874
      %v876 = vpop.f32.mrf.mxu0
      %877 = vmatprep.mubr.f32.mxu0 0.0
      %878 = vmatmul.mubr.f32.gmra.mxu0 %v711
      %v879 = vpop.f32.mrf.mxu0
      %v880 = vadd.f32 %v346, %v879
      %v881 = vpop.f32.mrf.mxu0
      %882 = vmatprep.mubr.f32.mxu0 0.0
      %883 = vmatmul.mubr.f32.gmra.mxu0 %v714
      %v884 = vpop.f32.mrf.mxu0
      %v885 = vadd.f32 %v346, %v884
      %v886 = vpop.f32.mrf.mxu0
      %887 = vmatprep.mubr.f32.mxu0 0.0
      %888 = vmatmul.mubr.f32.gmra.mxu0 %v717
      %v889 = vpop.f32.mrf.mxu0
      %v890 = vadd.f32 %v346, %v889
      %v891 = vpop.f32.mrf.mxu0
      %892 = vmatprep.mubr.f32.mxu0 0.0
      %893 = vmatmul.mubr.f32.gmra.mxu0 %v720
      %v894 = vpop.f32.mrf.mxu0
      %v895 = vadd.f32 %v346, %v894
      %v896 = vpop.f32.mrf.mxu0
      %897 = vmatprep.mubr.f32.mxu0 0.0
      %898 = vmatmul.mubr.f32.gmra.mxu0 %v723
      %v899 = vpop.f32.mrf.mxu0
      %v900 = vadd.f32 %v346, %v899
      %v901 = vpop.f32.mrf.mxu0
      %902 = vmatprep.mubr.f32.mxu0 0.0
      %903 = vmatmul.mubr.f32.gmra.mxu0 %v726
      %v904 = vpop.f32.mrf.mxu0
      %v905 = vadd.f32 %v346, %v904
      %v906 = vpop.f32.mrf.mxu0
      %907 = vmatprep.mubr.f32.mxu0 0.0
      %908 = vmatmul.mubr.f32.gmra.mxu0 %v729
      %v909 = vpop.f32.mrf.mxu0
      %v910 = vadd.f32 %v346, %v909
      %v911 = vpop.f32.mrf.mxu0
      %912 = vmatprep.mubr.f32.mxu0 0.0
      %913 = vmatmul.mubr.f32.gmra.mxu0 %v732
      %v914 = vpop.f32.mrf.mxu0
      %v915 = vadd.f32 %v346, %v914
      %v916 = vpop.f32.mrf.mxu0
      %917 = vmatprep.mubr.f32.mxu0 0.0
      %918 = vmatmul.mubr.f32.gmra.mxu0 %v735
      %v919 = vpop.f32.mrf.mxu0
      %v920 = vadd.f32 %v346, %v919
      %v921 = vpop.f32.mrf.mxu0
      %922 = vmatprep.mubr.f32.mxu0 0.0
      %923 = vmatmul.mubr.f32.gmra.mxu0 %v738
      %v924 = vpop.f32.mrf.mxu0
      %v925 = vadd.f32 %v346, %v924
      %v926 = vpop.f32.mrf.mxu0
      %927 = vmatprep.mubr.f32.mxu0 0.0
      %928 = vmatmul.mubr.f32.gmra.mxu0 %v741
      %v929 = vpop.f32.mrf.mxu0
      %v930 = vadd.f32 %v346, %v929
      %v931 = vpop.f32.mrf.mxu0
      %932 = vdwg.mxu0
      %v933 = vmax.f32 %v810, 0.0
      %v934 = vmax.f32 %v815, 0.0
      %v935 = vmax.f32 %v820, 0.0
      %v936 = vmax.f32 %v825, 0.0
      %v937 = vmax.f32 %v830, 0.0
      %v938 = vmax.f32 %v835, 0.0
      %v939 = vmax.f32 %v840, 0.0
      %v940 = vmax.f32 %v845, 0.0
      %v941 = vmax.f32 %v850, 0.0
      %v942 = vmax.f32 %v855, 0.0
      %v943 = vmax.f32 %v860, 0.0
      %v944 = vmax.f32 %v865, 0.0
      %v945 = vmax.f32 %v870, 0.0
      %v946 = vmax.f32 %v875, 0.0
      %v947 = vmax.f32 %v880, 0.0
      %v948 = vmax.f32 %v885, 0.0
      %v949 = vmax.f32 %v890, 0.0
      %v950 = vmax.f32 %v895, 0.0
      %v951 = vmax.f32 %v900, 0.0
      %v952 = vmax.f32 %v905, 0.0
      %v953 = vmax.f32 %v910, 0.0
      %v954 = vmax.f32 %v915, 0.0
      %v955 = vmax.f32 %v920, 0.0
      %v956 = vmax.f32 %v925, 0.0
      %v957 = vmax.f32 %v930, 0.0
      %v958 = vmax.f32 %v618, %v933
      %v959 = vmax.f32 %v619, %v934
      %v960 = vmax.f32 %v620, %v935
      %v961 = vmax.f32 %v621, %v936
      %v962 = vmax.f32 %v622, %v937
      %v963 = vmax.f32 %v623, %v938
      %v964 = vmax.f32 %v624, %v939
      %v965 = vmax.f32 %v625, %v940
      %v966 = vmax.f32 %v626, %v941
      %v967 = vmax.f32 %v627, %v942
      %v968 = vmax.f32 %v628, %v943
      %v969 = vmax.f32 %v629, %v944
      %v970 = vmax.f32 %v630, %v945
      %v971 = vmax.f32 %v631, %v946
      %v972 = vmax.f32 %v632, %v947
      %v973 = vmax.f32 %v633, %v948
      %v974 = vmax.f32 %v634, %v949
      %v975 = vmax.f32 %v635, %v950
      %v976 = vmax.f32 %v636, %v951
      %v977 = vmax.f32 %v637, %v952
      %v978 = vmax.f32 %v638, %v953
      %v979 = vmax.f32 %v639, %v954
      %v980 = vmax.f32 %v640, %v955
      %v981 = vmax.f32 %v641, %v956
      %v982 = vmax.f32 %v642, %v957
      %v983 = vld [vmem:[%s301] sm:$0xff]
      %v984 = vld [vmem:[%s301 + $0x8] sm:$0xff]
      %v985 = vld [vmem:[%s301 + $0x10] sm:$0xff]
      %v986 = vld [vmem:[%s301 + $0x18] sm:$0xff]
      %v987 = vld [vmem:[%s301 + $0x20] sm:$0xff]
      %v988 = vld [vmem:[%s301 + $0x28] sm:$0xff]
      %v989 = vld [vmem:[%s301 + $0x30] sm:$0xff]
      %v990 = vld [vmem:[%s301 + $0x38] sm:$0xff]
      %v991 = vld [vmem:[%s301 + $0x40] sm:$0xff]
      %v992 = vld [vmem:[%s301 + $0x48] sm:$0xff]
      %v993 = vld [vmem:[%s301 + $0x50] sm:$0xff]
      %v994 = vld [vmem:[%s301 + $0x58] sm:$0xff]
      %v995 = vld [vmem:[%s301 + $0x60] sm:$0xff]
      %v996 = vld [vmem:[%s301 + $0x68] sm:$0xff]
      %v997 = vld [vmem:[%s301 + $0x70] sm:$0xff]
      %v998 = vld [vmem:[%s301 + $0x78] sm:$0xff]
      %v999 = vld [vmem:[%s301 + $0x80] sm:$0xff]
      %v1000 = vld [vmem:[%s301 + $0x88] sm:$0xff]
      %v1001 = vld [vmem:[%s301 + $0x90] sm:$0xff]
      %v1002 = vld [vmem:[%s301 + $0x98] sm:$0xff]
      %v1003 = vld [vmem:[%s301 + $0xa0] sm:$0xff]
      %v1004 = vld [vmem:[%s301 + $0xa8] sm:$0xff]
      %v1005 = vld [vmem:[%s301 + $0xb0] sm:$0xff]
      %v1006 = vld [vmem:[%s301 + $0xb8] sm:$0xff]
      %v1007 = vld [vmem:[%s301 + $0xc0] sm:$0xf]
      %v1009 = vsel %vm348, %v983, 0
      %v1012 = vsel %vm348, %v984, 0
      %v1015 = vsel %vm348, %v985, 0
      %v1018 = vsel %vm348, %v986, 0
      %v1021 = vsel %vm348, %v987, 0
      %v1024 = vsel %vm348, %v988, 0
      %v1027 = vsel %vm348, %v989, 0
      %v1030 = vsel %vm348, %v990, 0
      %v1033 = vsel %vm348, %v991, 0
      %v1036 = vsel %vm348, %v992, 0
      %v1039 = vsel %vm348, %v993, 0
      %v1042 = vsel %vm348, %v994, 0
      %v1045 = vsel %vm348, %v995, 0
      %v1048 = vsel %vm348, %v996, 0
      %v1051 = vsel %vm348, %v997, 0
      %v1054 = vsel %vm348, %v998, 0
      %v1057 = vsel %vm348, %v999, 0
      %v1060 = vsel %vm348, %v1000, 0
      %v1063 = vsel %vm348, %v1001, 0
      %v1066 = vsel %vm348, %v1002, 0
      %v1069 = vsel %vm348, %v1003, 0
      %v1072 = vsel %vm348, %v1004, 0
      %v1075 = vsel %vm348, %v1005, 0
      %v1078 = vsel %vm348, %v1006, 0
      %v1081 = vsel %vm348, %v1007, 0
      %1083 = vmatprep.subr.mxu0 0.0
      %1084 = vmatpush1.msra.mxu0 0.0
      %1085 = vmatprep.subr.mxu0 0.0
      %1086 = vmatpush1.msra.mxu0 0.0
      %1087 = vmatprep.subr.mxu0 0.0
      %1088 = vmatpush1.msra.mxu0 0.0
      %1089 = vmatprep.subr.mxu0 0.0
      %1090 = vmatpush1.msra.mxu0 0.0
      %1091 = vmatprep.subr.mxu0 0.0
      %1092 = vmatpush1.msra.mxu0 0.0
      %1093 = vmatprep.subr.mxu0 0.0
      %1094 = vmatpush1.msra.mxu0 0.0
      %1095 = vmatprep.subr.mxu0 0.0
      %1096 = vmatpush1.msra.mxu0 0.0
      %1097 = vmatprep.subr.mxu0 0.0
      %1098 = vmatpush1.msra.mxu0 0.0
      %1099 = vmatprep.subr.mxu0 0.0
      %1100 = vmatpush1.msra.mxu0 0.0
      %1101 = vmatprep.subr.mxu0 0.0
      %1102 = vmatpush1.msra.mxu0 0.0
      %1103 = vmatprep.subr.mxu0 0.0
      %1104 = vmatpush1.msra.mxu0 0.0
      %1105 = vmatprep.subr.mxu0 0.0
      %1106 = vmatpush1.msra.mxu0 0.0
      %1107 = vmatprep.subr.mxu0 0.0
      %1108 = vmatpush1.msra.mxu0 %v426
      %1109 = vmatprep.subr.mxu0 0.0
      %1110 = vmatpush1.msra.mxu0 %v314
      %1111 = vmatprep.subr.mxu0 0.0
      %1112 = vmatpush1.msra.mxu0 %v313
      %1113 = vmatprep.subr.mxu0 0.0
      %1114 = vmatpush1.msra.mxu0 %v312
      %1115 = vmatprep.subr.mxu0 0.0
      %1116 = vmatpush2.msra.mxu0 0.0
      %1117 = vmatprep.subr.mxu0 0.0
      %1118 = vmatpush2.msra.mxu0 0.0
      %1119 = vmatprep.subr.mxu0 0.0
      %1120 = vmatpush2.msra.mxu0 0.0
      %1121 = vmatprep.subr.mxu0 0.0
      %1122 = vmatpush2.msra.mxu0 0.0
      %1123 = vmatprep.subr.mxu0 0.0
      %1124 = vmatpush2.msra.mxu0 0.0
      %1125 = vmatprep.subr.mxu0 0.0
      %1126 = vmatpush2.msra.mxu0 0.0
      %1127 = vmatprep.subr.mxu0 0.0
      %1128 = vmatpush2.msra.mxu0 0.0
      %1129 = vmatprep.subr.mxu0 0.0
      %1130 = vmatpush2.msra.mxu0 0.0
      %1131 = vmatprep.subr.mxu0 0.0
      %1132 = vmatpush2.msra.mxu0 0.0
      %1133 = vmatprep.subr.mxu0 0.0
      %1134 = vmatpush2.msra.mxu0 0.0
      %1135 = vmatprep.subr.mxu0 0.0
      %1136 = vmatpush2.msra.mxu0 0.0
      %1137 = vmatprep.subr.mxu0 0.0
      %1138 = vmatpush2.msra.mxu0 0.0
      %1139 = vmatprep.subr.mxu0 0.0
      %1140 = vmatpush2.msra.mxu0 0.0
      %1141 = vmatprep.subr.mxu0 0.0
      %1142 = vmatpush2.msra.mxu0 0.0
      %1143 = vmatprep.subr.mxu0 0.0
      %1144 = vmatpush2.msra.mxu0 0.0
      %1145 = vmatprep.subr.mxu0 0.0
      %1146 = vmatpush2.msra.mxu0 0.0
      %1147 = vmatprep.mubr.f32.mxu0 0.0
      %1148 = vmatmul.mubr.f32.gmra.mxu0 %v1009
      %v1149 = vpop.f32.mrf.mxu0
      %v1150 = vadd.f32 %v346, %v1149
      %v1151 = vpop.f32.mrf.mxu0
      %1152 = vmatprep.mubr.f32.mxu0 0.0
      %1153 = vmatmul.mubr.f32.gmra.mxu0 %v1012
      %v1154 = vpop.f32.mrf.mxu0
      %v1155 = vadd.f32 %v346, %v1154
      %v1156 = vpop.f32.mrf.mxu0
      %1157 = vmatprep.mubr.f32.mxu0 0.0
      %1158 = vmatmul.mubr.f32.gmra.mxu0 %v1015
      %v1159 = vpop.f32.mrf.mxu0
      %v1160 = vadd.f32 %v346, %v1159
      %v1161 = vpop.f32.mrf.mxu0
      %1162 = vmatprep.mubr.f32.mxu0 0.0
      %1163 = vmatmul.mubr.f32.gmra.mxu0 %v1018
      %v1164 = vpop.f32.mrf.mxu0
      %v1165 = vadd.f32 %v346, %v1164
      %v1166 = vpop.f32.mrf.mxu0
      %1167 = vmatprep.mubr.f32.mxu0 0.0
      %1168 = vmatmul.mubr.f32.gmra.mxu0 %v1021
      %v1169 = vpop.f32.mrf.mxu0
      %v1170 = vadd.f32 %v346, %v1169
      %v1171 = vpop.f32.mrf.mxu0
      %1172 = vmatprep.mubr.f32.mxu0 0.0
      %1173 = vmatmul.mubr.f32.gmra.mxu0 %v1024
      %v1174 = vpop.f32.mrf.mxu0
      %v1175 = vadd.f32 %v346, %v1174
      %v1176 = vpop.f32.mrf.mxu0
      %1177 = vmatprep.mubr.f32.mxu0 0.0
      %1178 = vmatmul.mubr.f32.gmra.mxu0 %v1027
      %v1179 = vpop.f32.mrf.mxu0
      %v1180 = vadd.f32 %v346, %v1179
      %v1181 = vpop.f32.mrf.mxu0
      %1182 = vmatprep.mubr.f32.mxu0 0.0
      %1183 = vmatmul.mubr.f32.gmra.mxu0 %v1030
      %v1184 = vpop.f32.mrf.mxu0
      %v1185 = vadd.f32 %v346, %v1184
      %v1186 = vpop.f32.mrf.mxu0
      %1187 = vmatprep.mubr.f32.mxu0 0.0
      %1188 = vmatmul.mubr.f32.gmra.mxu0 %v1033
      %v1189 = vpop.f32.mrf.mxu0
      %v1190 = vadd.f32 %v346, %v1189
      %v1191 = vpop.f32.mrf.mxu0
      %1192 = vmatprep.mubr.f32.mxu0 0.0
      %1193 = vmatmul.mubr.f32.gmra.mxu0 %v1036
      %v1194 = vpop.f32.mrf.mxu0
      %v1195 = vadd.f32 %v346, %v1194
      %v1196 = vpop.f32.mrf.mxu0
      %1197 = vmatprep.mubr.f32.mxu0 0.0
      %1198 = vmatmul.mubr.f32.gmra.mxu0 %v1039
      %v1199 = vpop.f32.mrf.mxu0
      %v1200 = vadd.f32 %v346, %v1199
      %v1201 = vpop.f32.mrf.mxu0
      %1202 = vmatprep.mubr.f32.mxu0 0.0
      %1203 = vmatmul.mubr.f32.gmra.mxu0 %v1042
      %v1204 = vpop.f32.mrf.mxu0
      %v1205 = vadd.f32 %v346, %v1204
      %v1206 = vpop.f32.mrf.mxu0
      %1207 = vmatprep.mubr.f32.mxu0 0.0
      %1208 = vmatmul.mubr.f32.gmra.mxu0 %v1045
      %v1209 = vpop.f32.mrf.mxu0
      %v1210 = vadd.f32 %v346, %v1209
      %v1211 = vpop.f32.mrf.mxu0
      %1212 = vmatprep.mubr.f32.mxu0 0.0
      %1213 = vmatmul.mubr.f32.gmra.mxu0 %v1048
      %v1214 = vpop.f32.mrf.mxu0
      %v1215 = vadd.f32 %v346, %v1214
      %v1216 = vpop.f32.mrf.mxu0
      %1217 = vmatprep.mubr.f32.mxu0 0.0
      %1218 = vmatmul.mubr.f32.gmra.mxu0 %v1051
      %v1219 = vpop.f32.mrf.mxu0
      %v1220 = vadd.f32 %v346, %v1219
      %v1221 = vpop.f32.mrf.mxu0
      %1222 = vmatprep.mubr.f32.mxu0 0.0
      %1223 = vmatmul.mubr.f32.gmra.mxu0 %v1054
      %v1224 = vpop.f32.mrf.mxu0
      %v1225 = vadd.f32 %v346, %v1224
      %v1226 = vpop.f32.mrf.mxu0
      %1227 = vmatprep.mubr.f32.mxu0 0.0
      %1228 = vmatmul.mubr.f32.gmra.mxu0 %v1057
      %v1229 = vpop.f32.mrf.mxu0
      %v1230 = vadd.f32 %v346, %v1229
      %v1231 = vpop.f32.mrf.mxu0
      %1232 = vmatprep.mubr.f32.mxu0 0.0
      %1233 = vmatmul.mubr.f32.gmra.mxu0 %v1060
      %v1234 = vpop.f32.mrf.mxu0
      %v1235 = vadd.f32 %v346, %v1234
      %v1236 = vpop.f32.mrf.mxu0
      %1237 = vmatprep.mubr.f32.mxu0 0.0
      %1238 = vmatmul.mubr.f32.gmra.mxu0 %v1063
      %v1239 = vpop.f32.mrf.mxu0
      %v1240 = vadd.f32 %v346, %v1239
      %v1241 = vpop.f32.mrf.mxu0
      %1242 = vmatprep.mubr.f32.mxu0 0.0
      %1243 = vmatmul.mubr.f32.gmra.mxu0 %v1066
      %v1244 = vpop.f32.mrf.mxu0
      %v1245 = vadd.f32 %v346, %v1244
      %v1246 = vpop.f32.mrf.mxu0
      %1247 = vmatprep.mubr.f32.mxu0 0.0
      %1248 = vmatmul.mubr.f32.gmra.mxu0 %v1069
      %v1249 = vpop.f32.mrf.mxu0
      %v1250 = vadd.f32 %v346, %v1249
      %v1251 = vpop.f32.mrf.mxu0
      %1252 = vmatprep.mubr.f32.mxu0 0.0
      %1253 = vmatmul.mubr.f32.gmra.mxu0 %v1072
      %v1254 = vpop.f32.mrf.mxu0
      %v1255 = vadd.f32 %v346, %v1254
      %v1256 = vpop.f32.mrf.mxu0
      %1257 = vmatprep.mubr.f32.mxu0 0.0
      %1258 = vmatmul.mubr.f32.gmra.mxu0 %v1075
      %v1259 = vpop.f32.mrf.mxu0
      %v1260 = vadd.f32 %v346, %v1259
      %v1261 = vpop.f32.mrf.mxu0
      %1262 = vmatprep.mubr.f32.mxu0 0.0
      %1263 = vmatmul.mubr.f32.gmra.mxu0 %v1078
      %v1264 = vpop.f32.mrf.mxu0
      %v1265 = vadd.f32 %v346, %v1264
      %v1266 = vpop.f32.mrf.mxu0
      %1267 = vmatprep.mubr.f32.mxu0 0.0
      %1268 = vmatmul.mubr.f32.gmra.mxu0 %v1081
      %v1269 = vpop.f32.mrf.mxu0
      %v1270 = vadd.f32 %v346, %v1269
      %v1271 = vpop.f32.mrf.mxu0
      %1272 = vdwg.mxu0
      %v1273 = vmax.f32 %v1150, 0.0
      %v1274 = vmax.f32 %v1155, 0.0
      %v1275 = vmax.f32 %v1160, 0.0
      %v1276 = vmax.f32 %v1165, 0.0
      %v1277 = vmax.f32 %v1170, 0.0
      %v1278 = vmax.f32 %v1175, 0.0
      %v1279 = vmax.f32 %v1180, 0.0
      %v1280 = vmax.f32 %v1185, 0.0
      %v1281 = vmax.f32 %v1190, 0.0
      %v1282 = vmax.f32 %v1195, 0.0
      %v1283 = vmax.f32 %v1200, 0.0
      %v1284 = vmax.f32 %v1205, 0.0
      %v1285 = vmax.f32 %v1210, 0.0
      %v1286 = vmax.f32 %v1215, 0.0
      %v1287 = vmax.f32 %v1220, 0.0
      %v1288 = vmax.f32 %v1225, 0.0
      %v1289 = vmax.f32 %v1230, 0.0
      %v1290 = vmax.f32 %v1235, 0.0
      %v1291 = vmax.f32 %v1240, 0.0
      %v1292 = vmax.f32 %v1245, 0.0
      %v1293 = vmax.f32 %v1250, 0.0
      %v1294 = vmax.f32 %v1255, 0.0
      %v1295 = vmax.f32 %v1260, 0.0
      %v1296 = vmax.f32 %v1265, 0.0
      %v1297 = vmax.f32 %v1270, 0.0
      %v1298 = vld [vmem:[%s306] sm:$0xff]
      %v1299 = vld [vmem:[%s306 + $0x8] sm:$0xff]
      %v1300 = vld [vmem:[%s306 + $0x10] sm:$0xff]
      %v1301 = vld [vmem:[%s306 + $0x18] sm:$0xff]
      %v1302 = vld [vmem:[%s306 + $0x20] sm:$0xff]
      %v1303 = vld [vmem:[%s306 + $0x28] sm:$0xff]
      %v1304 = vld [vmem:[%s306 + $0x30] sm:$0xff]
      %v1305 = vld [vmem:[%s306 + $0x38] sm:$0xff]
      %v1306 = vld [vmem:[%s306 + $0x40] sm:$0xff]
      %v1307 = vld [vmem:[%s306 + $0x48] sm:$0xff]
      %v1308 = vld [vmem:[%s306 + $0x50] sm:$0xff]
      %v1309 = vld [vmem:[%s306 + $0x58] sm:$0xff]
      %v1310 = vld [vmem:[%s306 + $0x60] sm:$0xff]
      %v1311 = vld [vmem:[%s306 + $0x68] sm:$0xff]
      %v1312 = vld [vmem:[%s306 + $0x70] sm:$0xff]
      %v1313 = vld [vmem:[%s306 + $0x78] sm:$0xff]
      %v1314 = vld [vmem:[%s306 + $0x80] sm:$0xff]
      %v1315 = vld [vmem:[%s306 + $0x88] sm:$0xff]
      %v1316 = vld [vmem:[%s306 + $0x90] sm:$0xff]
      %v1317 = vld [vmem:[%s306 + $0x98] sm:$0xff]
      %v1318 = vld [vmem:[%s306 + $0xa0] sm:$0xff]
      %v1319 = vld [vmem:[%s306 + $0xa8] sm:$0xff]
      %v1320 = vld [vmem:[%s306 + $0xb0] sm:$0xff]
      %v1321 = vld [vmem:[%s306 + $0xb8] sm:$0xff]
      %v1322 = vld [vmem:[%s306 + $0xc0] sm:$0xf]
      %v1324 = vsel %vm348, %v1298, 0
      %v1327 = vsel %vm348, %v1299, 0
      %v1330 = vsel %vm348, %v1300, 0
      %v1333 = vsel %vm348, %v1301, 0
      %v1336 = vsel %vm348, %v1302, 0
      %v1339 = vsel %vm348, %v1303, 0
      %v1342 = vsel %vm348, %v1304, 0
      %v1345 = vsel %vm348, %v1305, 0
      %v1348 = vsel %vm348, %v1306, 0
      %v1351 = vsel %vm348, %v1307, 0
      %v1354 = vsel %vm348, %v1308, 0
      %v1357 = vsel %vm348, %v1309, 0
      %v1360 = vsel %vm348, %v1310, 0
      %v1363 = vsel %vm348, %v1311, 0
      %v1366 = vsel %vm348, %v1312, 0
      %v1369 = vsel %vm348, %v1313, 0
      %v1372 = vsel %vm348, %v1314, 0
      %v1375 = vsel %vm348, %v1315, 0
      %v1378 = vsel %vm348, %v1316, 0
      %v1381 = vsel %vm348, %v1317, 0
      %v1384 = vsel %vm348, %v1318, 0
      %v1387 = vsel %vm348, %v1319, 0
      %v1390 = vsel %vm348, %v1320, 0
      %v1393 = vsel %vm348, %v1321, 0
      %v1396 = vsel %vm348, %v1322, 0
      %1398 = vmatprep.subr.mxu0 0.0
      %1399 = vmatpush1.msra.mxu0 0.0
      %1400 = vmatprep.subr.mxu0 0.0
      %1401 = vmatpush1.msra.mxu0 0.0
      %1402 = vmatprep.subr.mxu0 0.0
      %1403 = vmatpush1.msra.mxu0 0.0
      %1404 = vmatprep.subr.mxu0 0.0
      %1405 = vmatpush1.msra.mxu0 0.0
      %1406 = vmatprep.subr.mxu0 0.0
      %1407 = vmatpush1.msra.mxu0 0.0
      %1408 = vmatprep.subr.mxu0 0.0
      %1409 = vmatpush1.msra.mxu0 0.0
      %1410 = vmatprep.subr.mxu0 0.0
      %1411 = vmatpush1.msra.mxu0 0.0
      %1412 = vmatprep.subr.mxu0 0.0
      %1413 = vmatpush1.msra.mxu0 0.0
      %1414 = vmatprep.subr.mxu0 0.0
      %1415 = vmatpush1.msra.mxu0 0.0
      %1416 = vmatprep.subr.mxu0 0.0
      %1417 = vmatpush1.msra.mxu0 0.0
      %1418 = vmatprep.subr.mxu0 0.0
      %1419 = vmatpush1.msra.mxu0 0.0
      %1420 = vmatprep.subr.mxu0 0.0
      %1421 = vmatpush1.msra.mxu0 0.0
      %1422 = vmatprep.subr.mxu0 0.0
      %1423 = vmatpush1.msra.mxu0 %v426
      %1424 = vmatprep.subr.mxu0 0.0
      %1425 = vmatpush1.msra.mxu0 %v314
      %1426 = vmatprep.subr.mxu0 0.0
      %1427 = vmatpush1.msra.mxu0 %v313
      %1428 = vmatprep.subr.mxu0 0.0
      %1429 = vmatpush1.msra.mxu0 %v312
      %1430 = vmatprep.subr.mxu0 0.0
      %1431 = vmatpush2.msra.mxu0 0.0
      %1432 = vmatprep.subr.mxu0 0.0
      %1433 = vmatpush2.msra.mxu0 0.0
      %1434 = vmatprep.subr.mxu0 0.0
      %1435 = vmatpush2.msra.mxu0 0.0
      %1436 = vmatprep.subr.mxu0 0.0
      %1437 = vmatpush2.msra.mxu0 0.0
      %1438 = vmatprep.subr.mxu0 0.0
      %1439 = vmatpush2.msra.mxu0 0.0
      %1440 = vmatprep.subr.mxu0 0.0
      %1441 = vmatpush2.msra.mxu0 0.0
      %1442 = vmatprep.subr.mxu0 0.0
      %1443 = vmatpush2.msra.mxu0 0.0
      %1444 = vmatprep.subr.mxu0 0.0
      %1445 = vmatpush2.msra.mxu0 0.0
      %1446 = vmatprep.subr.mxu0 0.0
      %1447 = vmatpush2.msra.mxu0 0.0
      %1448 = vmatprep.subr.mxu0 0.0
      %1449 = vmatpush2.msra.mxu0 0.0
      %1450 = vmatprep.subr.mxu0 0.0
      %1451 = vmatpush2.msra.mxu0 0.0
      %1452 = vmatprep.subr.mxu0 0.0
      %1453 = vmatpush2.msra.mxu0 0.0
      %1454 = vmatprep.subr.mxu0 0.0
      %1455 = vmatpush2.msra.mxu0 0.0
      %1456 = vmatprep.subr.mxu0 0.0
      %1457 = vmatpush2.msra.mxu0 0.0
      %1458 = vmatprep.subr.mxu0 0.0
      %1459 = vmatpush2.msra.mxu0 0.0
      %1460 = vmatprep.subr.mxu0 0.0
      %1461 = vmatpush2.msra.mxu0 0.0
      %1462 = vmatprep.mubr.f32.mxu0 0.0
      %1463 = vmatmul.mubr.f32.gmra.mxu0 %v1324
      %v1464 = vpop.f32.mrf.mxu0
      %v1465 = vadd.f32 %v346, %v1464
      %v1466 = vpop.f32.mrf.mxu0
      %1467 = vmatprep.mubr.f32.mxu0 0.0
      %1468 = vmatmul.mubr.f32.gmra.mxu0 %v1327
      %v1469 = vpop.f32.mrf.mxu0
      %v1470 = vadd.f32 %v346, %v1469
      %v1471 = vpop.f32.mrf.mxu0
      %1472 = vmatprep.mubr.f32.mxu0 0.0
      %1473 = vmatmul.mubr.f32.gmra.mxu0 %v1330
      %v1474 = vpop.f32.mrf.mxu0
      %v1475 = vadd.f32 %v346, %v1474
      %v1476 = vpop.f32.mrf.mxu0
      %1477 = vmatprep.mubr.f32.mxu0 0.0
      %1478 = vmatmul.mubr.f32.gmra.mxu0 %v1333
      %v1479 = vpop.f32.mrf.mxu0
      %v1480 = vadd.f32 %v346, %v1479
      %v1481 = vpop.f32.mrf.mxu0
      %1482 = vmatprep.mubr.f32.mxu0 0.0
      %1483 = vmatmul.mubr.f32.gmra.mxu0 %v1336
      %v1484 = vpop.f32.mrf.mxu0
      %v1485 = vadd.f32 %v346, %v1484
      %v1486 = vpop.f32.mrf.mxu0
      %1487 = vmatprep.mubr.f32.mxu0 0.0
      %1488 = vmatmul.mubr.f32.gmra.mxu0 %v1339
      %v1489 = vpop.f32.mrf.mxu0
      %v1490 = vadd.f32 %v346, %v1489
      %v1491 = vpop.f32.mrf.mxu0
      %1492 = vmatprep.mubr.f32.mxu0 0.0
      %1493 = vmatmul.mubr.f32.gmra.mxu0 %v1342
      %v1494 = vpop.f32.mrf.mxu0
      %v1495 = vadd.f32 %v346, %v1494
      %v1496 = vpop.f32.mrf.mxu0
      %1497 = vmatprep.mubr.f32.mxu0 0.0
      %1498 = vmatmul.mubr.f32.gmra.mxu0 %v1345
      %v1499 = vpop.f32.mrf.mxu0
      %v1500 = vadd.f32 %v346, %v1499
      %v1501 = vpop.f32.mrf.mxu0
      %1502 = vmatprep.mubr.f32.mxu0 0.0
      %1503 = vmatmul.mubr.f32.gmra.mxu0 %v1348
      %v1504 = vpop.f32.mrf.mxu0
      %v1505 = vadd.f32 %v346, %v1504
      %v1506 = vpop.f32.mrf.mxu0
      %1507 = vmatprep.mubr.f32.mxu0 0.0
      %1508 = vmatmul.mubr.f32.gmra.mxu0 %v1351
      %v1509 = vpop.f32.mrf.mxu0
      %v1510 = vadd.f32 %v346, %v1509
      %v1511 = vpop.f32.mrf.mxu0
      %1512 = vmatprep.mubr.f32.mxu0 0.0
      %1513 = vmatmul.mubr.f32.gmra.mxu0 %v1354
      %v1514 = vpop.f32.mrf.mxu0
      %v1515 = vadd.f32 %v346, %v1514
      %v1516 = vpop.f32.mrf.mxu0
      %1517 = vmatprep.mubr.f32.mxu0 0.0
      %1518 = vmatmul.mubr.f32.gmra.mxu0 %v1357
      %v1519 = vpop.f32.mrf.mxu0
      %v1520 = vadd.f32 %v346, %v1519
      %v1521 = vpop.f32.mrf.mxu0
      %1522 = vmatprep.mubr.f32.mxu0 0.0
      %1523 = vmatmul.mubr.f32.gmra.mxu0 %v1360
      %v1524 = vpop.f32.mrf.mxu0
      %v1525 = vadd.f32 %v346, %v1524
      %v1526 = vpop.f32.mrf.mxu0
      %1527 = vmatprep.mubr.f32.mxu0 0.0
      %1528 = vmatmul.mubr.f32.gmra.mxu0 %v1363
      %v1529 = vpop.f32.mrf.mxu0
      %v1530 = vadd.f32 %v346, %v1529
      %v1531 = vpop.f32.mrf.mxu0
      %1532 = vmatprep.mubr.f32.mxu0 0.0
      %1533 = vmatmul.mubr.f32.gmra.mxu0 %v1366
      %v1534 = vpop.f32.mrf.mxu0
      %v1535 = vadd.f32 %v346, %v1534
      %v1536 = vpop.f32.mrf.mxu0
      %1537 = vmatprep.mubr.f32.mxu0 0.0
      %1538 = vmatmul.mubr.f32.gmra.mxu0 %v1369
      %v1539 = vpop.f32.mrf.mxu0
      %v1540 = vadd.f32 %v346, %v1539
      %v1541 = vpop.f32.mrf.mxu0
      %1542 = vmatprep.mubr.f32.mxu0 0.0
      %1543 = vmatmul.mubr.f32.gmra.mxu0 %v1372
      %v1544 = vpop.f32.mrf.mxu0
      %v1545 = vadd.f32 %v346, %v1544
      %v1546 = vpop.f32.mrf.mxu0
      %1547 = vmatprep.mubr.f32.mxu0 0.0
      %1548 = vmatmul.mubr.f32.gmra.mxu0 %v1375
      %v1549 = vpop.f32.mrf.mxu0
      %v1550 = vadd.f32 %v346, %v1549
      %v1551 = vpop.f32.mrf.mxu0
      %1552 = vmatprep.mubr.f32.mxu0 0.0
      %1553 = vmatmul.mubr.f32.gmra.mxu0 %v1378
      %v1554 = vpop.f32.mrf.mxu0
      %v1555 = vadd.f32 %v346, %v1554
      %v1556 = vpop.f32.mrf.mxu0
      %1557 = vmatprep.mubr.f32.mxu0 0.0
      %1558 = vmatmul.mubr.f32.gmra.mxu0 %v1381
      %v1559 = vpop.f32.mrf.mxu0
      %v1560 = vadd.f32 %v346, %v1559
      %v1561 = vpop.f32.mrf.mxu0
      %1562 = vmatprep.mubr.f32.mxu0 0.0
      %1563 = vmatmul.mubr.f32.gmra.mxu0 %v1384
      %v1564 = vpop.f32.mrf.mxu0
      %v1565 = vadd.f32 %v346, %v1564
      %v1566 = vpop.f32.mrf.mxu0
      %1567 = vmatprep.mubr.f32.mxu0 0.0
      %1568 = vmatmul.mubr.f32.gmra.mxu0 %v1387
      %v1569 = vpop.f32.mrf.mxu0
      %v1570 = vadd.f32 %v346, %v1569
      %v1571 = vpop.f32.mrf.mxu0
      %1572 = vmatprep.mubr.f32.mxu0 0.0
      %1573 = vmatmul.mubr.f32.gmra.mxu0 %v1390
      %v1574 = vpop.f32.mrf.mxu0
      %v1575 = vadd.f32 %v346, %v1574
      %v1576 = vpop.f32.mrf.mxu0
      %1577 = vmatprep.mubr.f32.mxu0 0.0
      %1578 = vmatmul.mubr.f32.gmra.mxu0 %v1393
      %v1579 = vpop.f32.mrf.mxu0
      %v1580 = vadd.f32 %v346, %v1579
      %v1581 = vpop.f32.mrf.mxu0
      %1582 = vmatprep.mubr.f32.mxu0 0.0
      %1583 = vmatmul.mubr.f32.gmra.mxu0 %v1396
      %v1584 = vpop.f32.mrf.mxu0
      %v1585 = vadd.f32 %v346, %v1584
      %v1586 = vpop.f32.mrf.mxu0
      %1587 = vdwg.mxu0
      %v1588 = vmax.f32 %v1465, 0.0
      %v1589 = vmax.f32 %v1470, 0.0
      %v1590 = vmax.f32 %v1475, 0.0
      %v1591 = vmax.f32 %v1480, 0.0
      %v1592 = vmax.f32 %v1485, 0.0
      %v1593 = vmax.f32 %v1490, 0.0
      %v1594 = vmax.f32 %v1495, 0.0
      %v1595 = vmax.f32 %v1500, 0.0
      %v1596 = vmax.f32 %v1505, 0.0
      %v1597 = vmax.f32 %v1510, 0.0
      %v1598 = vmax.f32 %v1515, 0.0
      %v1599 = vmax.f32 %v1520, 0.0
      %v1600 = vmax.f32 %v1525, 0.0
      %v1601 = vmax.f32 %v1530, 0.0
      %v1602 = vmax.f32 %v1535, 0.0
      %v1603 = vmax.f32 %v1540, 0.0
      %v1604 = vmax.f32 %v1545, 0.0
      %v1605 = vmax.f32 %v1550, 0.0
      %v1606 = vmax.f32 %v1555, 0.0
      %v1607 = vmax.f32 %v1560, 0.0
      %v1608 = vmax.f32 %v1565, 0.0
      %v1609 = vmax.f32 %v1570, 0.0
      %v1610 = vmax.f32 %v1575, 0.0
      %v1611 = vmax.f32 %v1580, 0.0
      %v1612 = vmax.f32 %v1585, 0.0
      %v1613 = vmax.f32 %v1273, %v1588
      %v1614 = vmax.f32 %v1274, %v1589
      %v1615 = vmax.f32 %v1275, %v1590
      %v1616 = vmax.f32 %v1276, %v1591
      %v1617 = vmax.f32 %v1277, %v1592
      %v1618 = vmax.f32 %v1278, %v1593
      %v1619 = vmax.f32 %v1279, %v1594
      %v1620 = vmax.f32 %v1280, %v1595
      %v1621 = vmax.f32 %v1281, %v1596
      %v1622 = vmax.f32 %v1282, %v1597
      %v1623 = vmax.f32 %v1283, %v1598
      %v1624 = vmax.f32 %v1284, %v1599
      %v1625 = vmax.f32 %v1285, %v1600
      %v1626 = vmax.f32 %v1286, %v1601
      %v1627 = vmax.f32 %v1287, %v1602
      %v1628 = vmax.f32 %v1288, %v1603
      %v1629 = vmax.f32 %v1289, %v1604
      %v1630 = vmax.f32 %v1290, %v1605
      %v1631 = vmax.f32 %v1291, %v1606
      %v1632 = vmax.f32 %v1292, %v1607
      %v1633 = vmax.f32 %v1293, %v1608
      %v1634 = vmax.f32 %v1294, %v1609
      %v1635 = vmax.f32 %v1295, %v1610
      %v1636 = vmax.f32 %v1296, %v1611
      %v1637 = vmax.f32 %v1297, %v1612
      %v1638 = vmax.f32 %v958, %v1613
      %v1639 = vmax.f32 %v959, %v1614
      %v1640 = vmax.f32 %v960, %v1615
      %v1641 = vmax.f32 %v961, %v1616
      %v1642 = vmax.f32 %v962, %v1617
      %v1643 = vmax.f32 %v963, %v1618
      %v1644 = vmax.f32 %v964, %v1619
      %v1645 = vmax.f32 %v965, %v1620
      %v1646 = vmax.f32 %v966, %v1621
      %v1647 = vmax.f32 %v967, %v1622
      %v1648 = vmax.f32 %v968, %v1623
      %v1649 = vmax.f32 %v969, %v1624
      %v1650 = vmax.f32 %v970, %v1625
      %v1651 = vmax.f32 %v971, %v1626
      %v1652 = vmax.f32 %v972, %v1627
      %v1653 = vmax.f32 %v973, %v1628
      %v1654 = vmax.f32 %v974, %v1629
      %v1655 = vmax.f32 %v975, %v1630
      %v1656 = vmax.f32 %v976, %v1631
      %v1657 = vmax.f32 %v977, %v1632
      %v1658 = vmax.f32 %v978, %v1633
      %v1659 = vmax.f32 %v979, %v1634
      %v1660 = vmax.f32 %v980, %v1635
      %v1661 = vmax.f32 %v981, %v1636
      %v1662 = vmax.f32 %v982, %v1637
      %vm1663 = vcmask 130048
      %1664 = vst.msk [vmem:[%s311] sm:$0xff] %vm1663, %v1638
      %1665 = vst.msk [vmem:[%s311 + $0x8] sm:$0xff] %vm1663, %v1639
      %1666 = vst.msk [vmem:[%s311 + $0x10] sm:$0xff] %vm1663, %v1640
      %1667 = vst.msk [vmem:[%s311 + $0x18] sm:$0xff] %vm1663, %v1641
      %1668 = vst.msk [vmem:[%s311 + $0x20] sm:$0xff] %vm1663, %v1642
      %1669 = vst.msk [vmem:[%s311 + $0x28] sm:$0xff] %vm1663, %v1643
      %1670 = vst.msk [vmem:[%s311 + $0x30] sm:$0xff] %vm1663, %v1644
      %1671 = vst.msk [vmem:[%s311 + $0x38] sm:$0xff] %vm1663, %v1645
      %1672 = vst.msk [vmem:[%s311 + $0x40] sm:$0xff] %vm1663, %v1646
      %1673 = vst.msk [vmem:[%s311 + $0x48] sm:$0xff] %vm1663, %v1647
      %1674 = vst.msk [vmem:[%s311 + $0x50] sm:$0xff] %vm1663, %v1648
      %1675 = vst.msk [vmem:[%s311 + $0x58] sm:$0xff] %vm1663, %v1649
      %1676 = vst.msk [vmem:[%s311 + $0x60] sm:$0xff] %vm1663, %v1650
      %1677 = vst.msk [vmem:[%s311 + $0x68] sm:$0xff] %vm1663, %v1651
      %1678 = vst.msk [vmem:[%s311 + $0x70] sm:$0xff] %vm1663, %v1652
      %1679 = vst.msk [vmem:[%s311 + $0x78] sm:$0xff] %vm1663, %v1653
      %1680 = vst.msk [vmem:[%s311 + $0x80] sm:$0xff] %vm1663, %v1654
      %1681 = vst.msk [vmem:[%s311 + $0x88] sm:$0xff] %vm1663, %v1655
      %1682 = vst.msk [vmem:[%s311 + $0x90] sm:$0xff] %vm1663, %v1656
      %1683 = vst.msk [vmem:[%s311 + $0x98] sm:$0xff] %vm1663, %v1657
      %1684 = vst.msk [vmem:[%s311 + $0xa0] sm:$0xff] %vm1663, %v1658
      %1685 = vst.msk [vmem:[%s311 + $0xa8] sm:$0xff] %vm1663, %v1659
      %1686 = vst.msk [vmem:[%s311 + $0xb0] sm:$0xff] %vm1663, %v1660
      %1687 = vst.msk [vmem:[%s311 + $0xb8] sm:$0xff] %vm1663, %v1661
      %vm1688 = vcmask 125952
      %1689 = vst.msk [vmem:[%s311 + $0xc0] sm:$0xf] %vm1688, %v1662
      %p1690 = scmp.lt.s32.totalorder %s17, 1
      %s1691 = scalar_select %p1690, %s17, 1
      %s1692 = smul.addr %s1691, 25
      %s1693 = smul.addr %s1692, 8
      %s1694 = scalar_lea.vmem %s6, %s1693
      // Predicated region
      $region45: #{cnn_forward.3} parent=43 // pred_check
        %p1695 = pneg %p181
      $region46: #{cnn_forward.3} parent=43 // pred_check_branch
        %1697 = sbr.rel (%p1695) target = $region48
      $region47: #{cnn_forward.3} parent=43 // pred_region
        _
      $region48: #{cnn_forward.3} parent=43 // pred_fallthru
        _
    $region44: #{cnn_forward.3} parent=5 // pred_fallthru
      _
    %p1698 = scmp.le.s32.totalorder 2, %s12
    // Predicated region
    $region49: #{cnn_forward.3} parent=5 // pred_check
      %p1699 = pneg %p1698
    $region50: #{cnn_forward.3} parent=5 // pred_check_branch
      %1701 = sbr.rel (%p1699) target = $region52
    $region51: #{cnn_forward.3} parent=5 // pred_region
      %s1702 = ssub.s32 %s12, 2
      // Predicated region
      $region53: #{cnn_forward.3} parent=51 // pred_check
        %p1703 = pneg %p187
      $region54: #{cnn_forward.3} parent=51 // pred_check_branch
        %1705 = sbr.rel (%p1703) target = $region56
      $region55: #{cnn_forward.3} parent=51 // pred_region
        %p1706 = scmp.lt.s32.totalorder %s18, 1
        %s1707 = scalar_select %p1706, %s18, 1
        %s1708 = smul.addr %s1707, 25
        %s1709 = smul.addr %s1708, 8
        %s1710 = scalar_lea.vmem %s6, %s1709
      $region56: #{cnn_forward.3} parent=51 // pred_fallthru
        _
    $region52: #{cnn_forward.3} parent=5 // pred_fallthru
      _
  $region6: #{cnn_forward.3} parent=0 // loop_footer
    %s16 = sadd.s32 1, %s12
  $region7: #{cnn_forward.3} parent=0 // loop_footer_branch
    %11 = sbr.rel target = $region3
  $region8: #{cnn_forward.3} parent=0 // loop_exit
    _

// kernel: cnn_forward.4
$region0: #{cnn_forward.4}
  #allocation0 [shape = 'u32[]', space=smem, size = 0x4, offset = 0x4, fixed_abs, tag = 'smem constant byte address 0x4 - core index']
  #allocation1 [shape = 'u32[144,128]{1,0:T(1,128)}', space=vmem, size = 0x12000, scoped, tag = 'internal scratch']
  %s0 = inlined_call_operand.vmem [shape: f32[2,49,400], index: 0, kind: input, shape index: {}]
  %s1 = inlined_call_operand.vmem [shape: f32[2,49,400], index: 1, kind: input, shape index: {}]
  %s2 = inlined_call_operand.vmem [shape: f32[2,49,400], index: 2, kind: input, shape index: {}]
  %s3 = inlined_call_operand.vmem [shape: f32[2,49,400], index: 3, kind: input, shape index: {}]
  %s4 = inlined_call_operand.vmem [shape: f32[400,32], index: 4, kind: input, shape index: {}]
  %s5 = inlined_call_operand.vmem [shape: f32[1,32], index: 5, kind: input, shape index: {}]
  %s6 = inlined_call_operand.vmem [shape: f32[2,49,32], index: 6, kind: output, shape index: {}]
  %s7 = sld [smem:[#allocation0]]
  $region57: #{cnn_forward.4} parent=0
    _
  %s9 = ssub.s32 1, %s7
  %s10 = scalar_select 0, %s9, %s7
  loop: start=0, step=1, limit=4
  $region2: #{cnn_forward.4} parent=0 // loop_pre_header
    _
  $region3: #{cnn_forward.4} parent=0 // loop_header
    %s12 = sphi 0, %s16
    %p13 = scmp.ge.s32.totalorder %s12, 4
    %s22 = sphi 0, %s24
    %s25 = sphi 0, %s22
    %s26 = sphi 0, %s25
    %s42 = sphi 0, %s26
    %s48 = sphi 0, %s50
    %s51 = sphi 0, %s48
    %s52 = sphi 0, %s51
    %s68 = sphi 0, %s52
    %s74 = sphi 0, %s76
    %s77 = sphi 0, %s74
    %s78 = sphi 0, %s77
    %s94 = sphi 0, %s78
    %s100 = sphi 0, %s102
    %s103 = sphi 0, %s100
    %s104 = sphi 0, %s103
    %s120 = sphi 0, %s104
    %s124 = sphi 0, %s124
    %s126 = sphi 0, %s124
    %s127 = sphi 0, %s126
    %s141 = sphi 0, %s127
    %s145 = sphi 0, %s145
    %s147 = sphi 0, %s145
    %s148 = sphi 0, %s147
    %s162 = sphi 0, %s148
    %s168 = sphi 0, %s170
    %s171 = sphi 0, %s168
    %s172 = sphi 0, %s171
    %s188 = sphi 0, %s172
  $region4: #{cnn_forward.4} parent=0 // loop_header_branch
    %15 = sbr.rel (%p13) target = $region8
  $region5: #{cnn_forward.4} parent=0 // loop_body
    %s17 = ssub.s32 %s12, 1
    %s18 = ssub.s32 %s12, 2
    %s19 = sadd.s32 %s12, 1
    %s20 = ssub.s32 %s12, %s19
    %p21 = scmp.eq.s32.totalorder %s20, 0
    %s23 = sadd.s32 %s22, 1
    %s24 = scalar_select %p21, %s22, %s23
    %p27 = pneg %p21
    %p28 = scmp.eq.s32.totalorder %s12, 1
    %p29 = por %p27, %p28
    %p30 = scmp.ne.s32.totalorder %s22, %s25
    %p31 = scmp.eq.s32.totalorder %s12, 0
    %p32 = por %p30, %p31
    %p33 = scmp.ne.s32.totalorder %s22, %s25
    %p34 = scmp.eq.s32.totalorder %s17, 1
    %p35 = por %p33, %p34
    %p36 = scmp.ne.s32.totalorder %s25, %s26
    %p37 = scmp.eq.s32.totalorder %s17, 0
    %p38 = por %p36, %p37
    %p39 = scmp.ne.s32.totalorder %s25, %s26
    %p40 = scmp.eq.s32.totalorder %s18, 1
    %p41 = por %p39, %p40
    %p43 = scmp.ne.s32.totalorder %s26, %s42
    %p44 = scmp.eq.s32.totalorder %s18, 0
    %p45 = por %p43, %p44
    %s46 = ssub.s32 %s12, %s19
    %p47 = scmp.eq.s32.totalorder %s46, 0
    %s49 = sadd.s32 %s48, 1
    %s50 = scalar_select %p47, %s48, %s49
    %p53 = pneg %p47
    %p54 = scmp.eq.s32.totalorder %s12, 1
    %p55 = por %p53, %p54
    %p56 = scmp.ne.s32.totalorder %s48, %s51
    %p57 = scmp.eq.s32.totalorder %s12, 0
    %p58 = por %p56, %p57
    %p59 = scmp.ne.s32.totalorder %s48, %s51
    %p60 = scmp.eq.s32.totalorder %s17, 1
    %p61 = por %p59, %p60
    %p62 = scmp.ne.s32.totalorder %s51, %s52
    %p63 = scmp.eq.s32.totalorder %s17, 0
    %p64 = por %p62, %p63
    %p65 = scmp.ne.s32.totalorder %s51, %s52
    %p66 = scmp.eq.s32.totalorder %s18, 1
    %p67 = por %p65, %p66
    %p69 = scmp.ne.s32.totalorder %s52, %s68
    %p70 = scmp.eq.s32.totalorder %s18, 0
    %p71 = por %p69, %p70
    %s72 = ssub.s32 %s12, %s19
    %p73 = scmp.eq.s32.totalorder %s72, 0
    %s75 = sadd.s32 %s74, 1
    %s76 = scalar_select %p73, %s74, %s75
    %p79 = pneg %p73
    %p80 = scmp.eq.s32.totalorder %s12, 1
    %p81 = por %p79, %p80
    %p82 = scmp.ne.s32.totalorder %s74, %s77
    %p83 = scmp.eq.s32.totalorder %s12, 0
    %p84 = por %p82, %p83
    %p85 = scmp.ne.s32.totalorder %s74, %s77
    %p86 = scmp.eq.s32.totalorder %s17, 1
    %p87 = por %p85, %p86
    %p88 = scmp.ne.s32.totalorder %s77, %s78
    %p89 = scmp.eq.s32.totalorder %s17, 0
    %p90 = por %p88, %p89
    %p91 = scmp.ne.s32.totalorder %s77, %s78
    %p92 = scmp.eq.s32.totalorder %s18, 1
    %p93 = por %p91, %p92
    %p95 = scmp.ne.s32.totalorder %s78, %s94
    %p96 = scmp.eq.s32.totalorder %s18, 0
    %p97 = por %p95, %p96
    %s98 = ssub.s32 %s12, %s19
    %p99 = scmp.eq.s32.totalorder %s98, 0
    %s101 = sadd.s32 %s100, 1
    %s102 = scalar_select %p99, %s100, %s101
    %p105 = pneg %p99
    %p106 = scmp.eq.s32.totalorder %s12, 1
    %p107 = por %p105, %p106
    %p108 = scmp.ne.s32.totalorder %s100, %s103
    %p109 = scmp.eq.s32.totalorder %s12, 0
    %p110 = por %p108, %p109
    %p111 = scmp.ne.s32.totalorder %s100, %s103
    %p112 = scmp.eq.s32.totalorder %s17, 1
    %p113 = por %p111, %p112
    %p114 = scmp.ne.s32.totalorder %s103, %s104
    %p115 = scmp.eq.s32.totalorder %s17, 0
    %p116 = por %p114, %p115
    %p117 = scmp.ne.s32.totalorder %s103, %s104
    %p118 = scmp.eq.s32.totalorder %s18, 1
    %p119 = por %p117, %p118
    %p121 = scmp.ne.s32.totalorder %s104, %s120
    %p122 = scmp.eq.s32.totalorder %s18, 0
    %p123 = por %p121, %p122
    %s125 = sadd.s32 %s124, 1
    %p128 = scmp.eq.s32.totalorder %s12, 1
    %p129 = scmp.ne.s32.totalorder %s124, %s126
    %p130 = scmp.eq.s32.totalorder %s12, 0
    %p131 = por %p129, %p130
    %p132 = scmp.ne.s32.totalorder %s124, %s126
    %p133 = scmp.eq.s32.totalorder %s17, 1
    %p134 = por %p132, %p133
    %p135 = scmp.ne.s32.totalorder %s126, %s127
    %p136 = scmp.eq.s32.totalorder %s17, 0
    %p137 = por %p135, %p136
    %p138 = scmp.ne.s32.totalorder %s126, %s127
    %p139 = scmp.eq.s32.totalorder %s18, 1
    %p140 = por %p138, %p139
    %p142 = scmp.ne.s32.totalorder %s127, %s141
    %p143 = scmp.eq.s32.totalorder %s18, 0
    %p144 = por %p142, %p143
    %s146 = sadd.s32 %s145, 1
    %p149 = scmp.eq.s32.totalorder %s12, 1
    %p150 = scmp.ne.s32.totalorder %s145, %s147
    %p151 = scmp.eq.s32.totalorder %s12, 0
    %p152 = por %p150, %p151
    %p153 = scmp.ne.s32.totalorder %s145, %s147
    %p154 = scmp.eq.s32.totalorder %s17, 1
    %p155 = por %p153, %p154
    %p156 = scmp.ne.s32.totalorder %s147, %s148
    %p157 = scmp.eq.s32.totalorder %s17, 0
    %p158 = por %p156, %p157
    %p159 = scmp.ne.s32.totalorder %s147, %s148
    %p160 = scmp.eq.s32.totalorder %s18, 1
    %p161 = por %p159, %p160
    %p163 = scmp.ne.s32.totalorder %s148, %s162
    %p164 = scmp.eq.s32.totalorder %s18, 0
    %p165 = por %p163, %p164
    %s166 = ssub.s32 %s12, %s19
    %p167 = scmp.eq.s32.totalorder %s166, 0
    %s169 = sadd.s32 %s168, 1
    %s170 = scalar_select %p167, %s168, %s169
    %p173 = pneg %p167
    %p174 = scmp.eq.s32.totalorder %s12, 1
    %p175 = por %p173, %p174
    %p176 = scmp.ne.s32.totalorder %s168, %s171
    %p177 = scmp.eq.s32.totalorder %s12, 0
    %p178 = por %p176, %p177
    %p179 = scmp.ne.s32.totalorder %s168, %s171
    %p180 = scmp.eq.s32.totalorder %s17, 1
    %p181 = por %p179, %p180
    %p182 = scmp.ne.s32.totalorder %s171, %s172
    %p183 = scmp.eq.s32.totalorder %s17, 0
    %p184 = por %p182, %p183
    %p185 = scmp.ne.s32.totalorder %s171, %s172
    %p186 = scmp.eq.s32.totalorder %s18, 1
    %p187 = por %p185, %p186
    %p189 = scmp.ne.s32.totalorder %s172, %s188
    %p190 = scmp.eq.s32.totalorder %s18, 0
    %p191 = por %p189, %p190
    %p192 = scmp.le.s32.totalorder 1, %s12
    %p193 = scmp.lt.s32.totalorder %s12, 3
    %p194 = pnand %p192, %p193
    %p195 = pneg %p194
    // Predicated region
    $region9: #{cnn_forward.4} parent=5 // pred_check
      _
    $region10: #{cnn_forward.4} parent=5 // pred_check_branch
      %197 = sbr.rel (%p194) target = $region12
    $region11: #{cnn_forward.4} parent=5 // pred_region
      %s198 = ssub.s32 %s12, 1
      // Predicated region
      $region13: #{cnn_forward.4} parent=11 // pred_check
        %p199 = pneg %p137
      $region14: #{cnn_forward.4} parent=11 // pred_check_branch
        %201 = sbr.rel (%p199) target = $region16
      $region15: #{cnn_forward.4} parent=11 // pred_region
        _
      $region16: #{cnn_forward.4} parent=11 // pred_fallthru
        _
      // Predicated region
      $region17: #{cnn_forward.4} parent=11 // pred_check
        %p202 = pneg %p158
      $region18: #{cnn_forward.4} parent=11 // pred_check_branch
        %204 = sbr.rel (%p202) target = $region20
      $region19: #{cnn_forward.4} parent=11 // pred_region
        _
      $region20: #{cnn_forward.4} parent=11 // pred_fallthru
        _
    $region12: #{cnn_forward.4} parent=5 // pred_fallthru
      _
    %p205 = scmp.lt.s32.totalorder %s12, 2
    // Predicated region
    $region21: #{cnn_forward.4} parent=5 // pred_check
      %p206 = pneg %p205
    $region22: #{cnn_forward.4} parent=5 // pred_check_branch
      %208 = sbr.rel (%p206) target = $region24
    $region23: #{cnn_forward.4} parent=5 // pred_region
      // Predicated region
      $region25: #{cnn_forward.4} parent=23 // pred_check
        %p209 = pneg %p32
      $region26: #{cnn_forward.4} parent=23 // pred_check_branch
        %211 = sbr.rel (%p209) target = $region28
      $region27: #{cnn_forward.4} parent=23 // pred_region
        %p212 = scmp.lt.s32.totalorder %s12, 1
        %s213 = scalar_select %p212, %s12, 1
        %s214 = smul.addr %s213, 28
        %s215 = smul.addr %s214, 8
        %s216 = scalar_lea.vmem %s0, %s215
      $region28: #{cnn_forward.4} parent=23 // pred_fallthru
        _
      // Predicated region
      $region29: #{cnn_forward.4} parent=23 // pred_check
        %p217 = pneg %p58
      $region30: #{cnn_forward.4} parent=23 // pred_check_branch
        %219 = sbr.rel (%p217) target = $region32
      $region31: #{cnn_forward.4} parent=23 // pred_region
        %p220 = scmp.lt.s32.totalorder %s12, 1
        %s221 = scalar_select %p220, %s12, 1
        %s222 = smul.addr %s221, 28
        %s223 = smul.addr %s222, 8
        %s224 = scalar_lea.vmem %s1, %s223
      $region32: #{cnn_forward.4} parent=23 // pred_fallthru
        _
      // Predicated region
      $region33: #{cnn_forward.4} parent=23 // pred_check
        %p225 = pneg %p84
      $region34: #{cnn_forward.4} parent=23 // pred_check_branch
        %227 = sbr.rel (%p225) target = $region36
      $region35: #{cnn_forward.4} parent=23 // pred_region
        %p228 = scmp.lt.s32.totalorder %s12, 1
        %s229 = scalar_select %p228, %s12, 1
        %s230 = smul.addr %s229, 28
        %s231 = smul.addr %s230, 8
        %s232 = scalar_lea.vmem %s2, %s231
      $region36: #{cnn_forward.4} parent=23 // pred_fallthru
        _
      // Predicated region
      $region37: #{cnn_forward.4} parent=23 // pred_check
        %p233 = pneg %p110
      $region38: #{cnn_forward.4} parent=23 // pred_check_branch
        %235 = sbr.rel (%p233) target = $region40
      $region39: #{cnn_forward.4} parent=23 // pred_region
        %p236 = scmp.lt.s32.totalorder %s12, 1
        %s237 = scalar_select %p236, %s12, 1
        %s238 = smul.addr %s237, 28
        %s239 = smul.addr %s238, 8
        %s240 = scalar_lea.vmem %s3, %s239
      $region40: #{cnn_forward.4} parent=23 // pred_fallthru
        _
    $region24: #{cnn_forward.4} parent=5 // pred_fallthru
      _
    %p241 = scmp.le.s32.totalorder 1, %s12
    %p242 = scmp.lt.s32.totalorder %s12, 3
    %p243 = pnand %p241, %p242
    %p244 = pneg %p243
    // Predicated region
    $region41: #{cnn_forward.4} parent=5 // pred_check
      _
    $region42: #{cnn_forward.4} parent=5 // pred_check_branch
      %246 = sbr.rel (%p243) target = $region44
    $region43: #{cnn_forward.4} parent=5 // pred_region
      %s247 = ssub.s32 %s12, 1
      %p248 = scmp.lt.s32.totalorder %s17, 1
      %s249 = scalar_select %p248, %s17, 1
      %s250 = smul.addr %s249, 28
      %s251 = smul.addr %s250, 8
      %s252 = scalar_lea.vmem %s0, %s251
      %p253 = pneg %p38
      %p254 = pneg %p35
      %p255 = scmp.lt.s32.totalorder %s17, 1
      %s256 = scalar_select %p255, %s17, 1
      %s257 = smul.addr %s256, 28
      %s258 = smul.addr %s257, 8
      %s259 = scalar_lea.vmem %s1, %s258
      %p260 = pneg %p64
      %p261 = pneg %p61
      %p262 = scmp.lt.s32.totalorder %s17, 1
      %s263 = scalar_select %p262, %s17, 1
      %s264 = smul.addr %s263, 28
      %s265 = smul.addr %s264, 8
      %s266 = scalar_lea.vmem %s2, %s265
      %p267 = pneg %p90
      %p268 = pneg %p87
      %p269 = scmp.lt.s32.totalorder %s17, 1
      %s270 = scalar_select %p269, %s17, 1
      %s271 = smul.addr %s270, 28
      %s272 = smul.addr %s271, 8
      %s273 = scalar_lea.vmem %s3, %s272
      %p274 = pneg %p116
      %p275 = pneg %p113
      %p276 = pneg %p137
      %p277 = pneg %p134
      %p278 = pneg %p158
      %p279 = pneg %p155
      %p280 = pneg %p184
      %p281 = pneg %p181
      %p282 = scmp.lt.s32.totalorder %s17, 1
      %s283 = scalar_select %p282, %s17, 1
      %s284 = smul.addr %s283, 7
      %s285 = smul.addr %s284, 8
      %s286 = scalar_lea.vmem %s6, %s285
      %p287 = scmp.lt.s32.totalorder %s17, 1
      %s288 = scalar_select %p287, %s17, 1
      %s289 = smul.addr %s288, 28
      %s290 = smul.addr %s289, 8
      %s291 = scalar_lea.vmem %s0, %s290
      %p292 = scmp.lt.s32.totalorder %s17, 1
      %s293 = scalar_select %p292, %s17, 1
      %s294 = smul.addr %s293, 28
      %s295 = smul.addr %s294, 8
      %s296 = scalar_lea.vmem %s1, %s295
      %p297 = scmp.lt.s32.totalorder %s17, 1
      %s298 = scalar_select %p297, %s17, 1
      %s299 = smul.addr %s298, 28
      %s300 = smul.addr %s299, 8
      %s301 = scalar_lea.vmem %s2, %s300
      %p302 = scmp.lt.s32.totalorder %s17, 1
      %s303 = scalar_select %p302, %s17, 1
      %s304 = smul.addr %s303, 28
      %s305 = smul.addr %s304, 8
      %s306 = scalar_lea.vmem %s3, %s305
      %p307 = scmp.lt.s32.totalorder %s17, 1
      %s308 = scalar_select %p307, %s17, 1
      %s309 = smul.addr %s308, 7
      %s310 = smul.addr %s309, 8
      %s311 = scalar_lea.vmem %s6, %s310
      %v312 = vld [vmem:[%s4] sm:$0xff]
      %v313 = vld [vmem:[%s4 + $0x8] sm:$0xff]
      %v314 = vld [vmem:[%s4 + $0x10] sm:$0xff]
      %v315 = vld [vmem:[%s4 + $0x18] sm:$0xff]
      %v316 = vld [vmem:[%s4 + $0x20] sm:$0xff]
      %v317 = vld [vmem:[%s4 + $0x28] sm:$0xff]
      %v318 = vld [vmem:[%s4 + $0x30] sm:$0xff]
      %v319 = vld [vmem:[%s4 + $0x38] sm:$0xff]
      %v320 = vld [vmem:[%s4 + $0x40] sm:$0xff]
      %v321 = vld [vmem:[%s4 + $0x48] sm:$0xff]
      %v322 = vld [vmem:[%s4 + $0x50] sm:$0xff]
      %v323 = vld [vmem:[%s4 + $0x58] sm:$0xff]
      %v324 = vld [vmem:[%s4 + $0x60] sm:$0xff]
      %v325 = vld [vmem:[%s4 + $0x68] sm:$0xff]
      %v326 = vld [vmem:[%s4 + $0x70] sm:$0xff]
      %v327 = vld [vmem:[%s4 + $0x78] sm:$0xff]
      %v328 = vld [vmem:[%s4 + $0x80] sm:$0xff]
      %v329 = vld [vmem:[%s4 + $0x88] sm:$0xff]
      %v330 = vld [vmem:[%s4 + $0x90] sm:$0xff]
      %v331 = vld [vmem:[%s4 + $0x98] sm:$0xff]
      %v332 = vld [vmem:[%s4 + $0xa0] sm:$0xff]
      %v333 = vld [vmem:[%s4 + $0xa8] sm:$0xff]
      %v334 = vld [vmem:[%s4 + $0xb0] sm:$0xff]
      %v335 = vld [vmem:[%s4 + $0xb8] sm:$0xff]
      %v336 = vld [vmem:[%s4 + $0xc0] sm:$0xff]
      %v337 = vld [vmem:[%s4 + $0xc8] sm:$0xff]
      %v338 = vld [vmem:[%s4 + $0xd0] sm:$0xff]
      %v339 = vld [vmem:[%s4 + $0xd8] sm:$0xff]
      %v340 = vld [vmem:[%s4 + $0xe0] sm:$0xff]
      %v341 = vld [vmem:[%s4 + $0xe8] sm:$0xff]
      %v342 = vld [vmem:[%s4 + $0xf0] sm:$0xff]
      %v343 = vld [vmem:[%s4 + $0xf8] sm:$0xff]
      %v344 = vld [vmem:[%s4 + $0x100] sm:$0xff]
      %v345 = vld [vmem:[%s4 + $0x108] sm:$0xff]
      %v346 = vld [vmem:[%s4 + $0x110] sm:$0xff]
      %v347 = vld [vmem:[%s4 + $0x118] sm:$0xff]
      %v348 = vld [vmem:[%s4 + $0x120] sm:$0xff]
      %v349 = vld [vmem:[%s4 + $0x128] sm:$0xff]
      %v350 = vld [vmem:[%s4 + $0x130] sm:$0xff]
      %v351 = vld [vmem:[%s4 + $0x138] sm:$0xff]
      %v352 = vld [vmem:[%s4 + $0x140] sm:$0xff]
      %v353 = vld [vmem:[%s4 + $0x148] sm:$0xff]
      %v354 = vld [vmem:[%s4 + $0x150] sm:$0xff]
      %v355 = vld [vmem:[%s4 + $0x158] sm:$0xff]
      %v356 = vld [vmem:[%s4 + $0x160] sm:$0xff]
      %v357 = vld [vmem:[%s4 + $0x168] sm:$0xff]
      %v358 = vld [vmem:[%s4 + $0x170] sm:$0xff]
      %v359 = vld [vmem:[%s4 + $0x178] sm:$0xff]
      %v360 = vld [vmem:[%s4 + $0x180] sm:$0xff]
      %v361 = vld [vmem:[%s4 + $0x188] sm:$0xff]
      %v362 = vld [vmem:[%s5] sm:$0x1]
      %v363 = vld [vmem:[%s291] sm:$0xff]
      %v364 = vld [vmem:[%s291 + $0x8] sm:$0xff]
      %v365 = vld [vmem:[%s291 + $0x10] sm:$0xff]
      %v366 = vld [vmem:[%s291 + $0x18] sm:$0xff]
      %v367 = vld [vmem:[%s291 + $0x20] sm:$0xff]
      %v368 = vld [vmem:[%s291 + $0x28] sm:$0xff]
      %v369 = vld [vmem:[%s291 + $0x30] sm:$0xff]
      %v370 = vld [vmem:[%s291 + $0x38] sm:$0xff]
      %v371 = vld [vmem:[%s291 + $0x40] sm:$0xff]
      %v372 = vld [vmem:[%s291 + $0x48] sm:$0xff]
      %v373 = vld [vmem:[%s291 + $0x50] sm:$0xff]
      %v374 = vld [vmem:[%s291 + $0x58] sm:$0xff]
      %v375 = vld [vmem:[%s291 + $0x60] sm:$0xff]
      %v376 = vld [vmem:[%s291 + $0x68] sm:$0xff]
      %v377 = vld [vmem:[%s291 + $0x70] sm:$0xff]
      %v378 = vld [vmem:[%s291 + $0x78] sm:$0xff]
      %v379 = vld [vmem:[%s291 + $0x80] sm:$0xff]
      %v380 = vld [vmem:[%s291 + $0x88] sm:$0xff]
      %v381 = vld [vmem:[%s291 + $0x90] sm:$0xff]
      %v382 = vld [vmem:[%s291 + $0x98] sm:$0xff]
      %v383 = vld [vmem:[%s291 + $0xa0] sm:$0xff]
      %v384 = vld [vmem:[%s291 + $0xa8] sm:$0xff]
      %v385 = vld [vmem:[%s291 + $0xb0] sm:$0xff]
      %v386 = vld [vmem:[%s291 + $0xb8] sm:$0xff]
      %v387 = vld [vmem:[%s291 + $0xc0] sm:$0x1]
      %v388 = vld [vmem:[%s291 + $0xc8] sm:$0x1]
      %v389 = vld [vmem:[%s291 + $0xd0] sm:$0x1]
      %v390 = vld [vmem:[%s291 + $0xd8] sm:$0x1]
      %v392 = vlaneseq
      %v393 = vshrl.u32 %v392, 7
      %v394 = vsub.s32 0, %v393
      %v395 = vrot.slane %v362, %v394
      %vm397 = vcmask 130048
      %v399 = vsel %vm397, %v366, 0
      %v402 = vsel %vm397, %v370, 0
      %v405 = vsel %vm397, %v374, 0
      %v408 = vsel %vm397, %v378, 0
      %v411 = vsel %vm397, %v382, 0
      %v414 = vsel %vm397, %v386, 0
      %v417 = vsel %vm397, %v390, 0
      %419 = vmatprep.subr.mxu0 0.0
      %420 = vmatpush1.msra.mxu0 %v327
      %421 = vmatprep.subr.mxu0 0.0
      %422 = vmatpush1.msra.mxu0 %v326
      %423 = vmatprep.subr.mxu0 0.0
      %424 = vmatpush1.msra.mxu0 %v325
      %425 = vmatprep.subr.mxu0 0.0
      %426 = vmatpush1.msra.mxu0 %v324
      %427 = vmatprep.subr.mxu0 0.0
      %428 = vmatpush1.msra.mxu0 %v323
      %429 = vmatprep.subr.mxu0 0.0
      %430 = vmatpush1.msra.mxu0 %v322
      %431 = vmatprep.subr.mxu0 0.0
      %432 = vmatpush1.msra.mxu0 %v321
      %433 = vmatprep.subr.mxu0 0.0
      %434 = vmatpush1.msra.mxu0 %v320
      %435 = vmatprep.subr.mxu0 0.0
      %436 = vmatpush1.msra.mxu0 %v319
      %437 = vmatprep.subr.mxu0 0.0
      %438 = vmatpush1.msra.mxu0 %v318
      %439 = vmatprep.subr.mxu0 0.0
      %440 = vmatpush1.msra.mxu0 %v317
      %441 = vmatprep.subr.mxu0 0.0
      %442 = vmatpush1.msra.mxu0 %v316
      %443 = vmatprep.subr.mxu0 0.0
      %444 = vmatpush1.msra.mxu0 %v315
      %445 = vmatprep.subr.mxu0 0.0
      %446 = vmatpush1.msra.mxu0 %v314
      %447 = vmatprep.subr.mxu0 0.0
      %448 = vmatpush1.msra.mxu0 %v313
      %449 = vmatprep.subr.mxu0 0.0
      %450 = vmatpush1.msra.mxu0 %v312
      %451 = vmatprep.subr.mxu0 0.0
      %452 = vmatpush2.msra.mxu0 %v343
      %453 = vmatprep.subr.mxu0 0.0
      %454 = vmatpush2.msra.mxu0 %v342
      %455 = vmatprep.subr.mxu0 0.0
      %456 = vmatpush2.msra.mxu0 %v341
      %457 = vmatprep.subr.mxu0 0.0
      %458 = vmatpush2.msra.mxu0 %v340
      %459 = vmatprep.subr.mxu0 0.0
      %460 = vmatpush2.msra.mxu0 %v339
      %461 = vmatprep.subr.mxu0 0.0
      %462 = vmatpush2.msra.mxu0 %v338
      %463 = vmatprep.subr.mxu0 0.0
      %464 = vmatpush2.msra.mxu0 %v337
      %465 = vmatprep.subr.mxu0 0.0
      %466 = vmatpush2.msra.mxu0 %v336
      %467 = vmatprep.subr.mxu0 0.0
      %468 = vmatpush2.msra.mxu0 %v335
      %469 = vmatprep.subr.mxu0 0.0
      %470 = vmatpush2.msra.mxu0 %v334
      %471 = vmatprep.subr.mxu0 0.0
      %472 = vmatpush2.msra.mxu0 %v333
      %473 = vmatprep.subr.mxu0 0.0
      %474 = vmatpush2.msra.mxu0 %v332
      %475 = vmatprep.subr.mxu0 0.0
      %476 = vmatpush2.msra.mxu0 %v331
      %477 = vmatprep.subr.mxu0 0.0
      %478 = vmatpush2.msra.mxu0 %v330
      %479 = vmatprep.subr.mxu0 0.0
      %480 = vmatpush2.msra.mxu0 %v329
      %481 = vmatprep.subr.mxu0 0.0
      %482 = vmatpush2.msra.mxu0 %v328
      %483 = vmatprep.mubr.f32.mxu0 %v364
      %484 = vmatmul.mubr.f32.gmra.mxu0 %v363
      %v485 = vpop.f32.mrf.mxu0
      %v486 = vadd.f32 %v395, %v485
      %v487 = vpop.f32.mrf.mxu0
      %488 = vmatprep.mubr.f32.mxu0 %v368
      %489 = vmatmul.mubr.f32.gmra.mxu0 %v367
      %v490 = vpop.f32.mrf.mxu0
      %v491 = vadd.f32 %v395, %v490
      %v492 = vpop.f32.mrf.mxu0
      %493 = vmatprep.mubr.f32.mxu0 %v372
      %494 = vmatmul.mubr.f32.gmra.mxu0 %v371
      %v495 = vpop.f32.mrf.mxu0
      %v496 = vadd.f32 %v395, %v495
      %v497 = vpop.f32.mrf.mxu0
      %498 = vmatprep.mubr.f32.mxu0 %v376
      %499 = vmatmul.mubr.f32.gmra.mxu0 %v375
      %v500 = vpop.f32.mrf.mxu0
      %v501 = vadd.f32 %v395, %v500
      %v502 = vpop.f32.mrf.mxu0
      %503 = vmatprep.mubr.f32.mxu0 %v380
      %504 = vmatmul.mubr.f32.gmra.mxu0 %v379
      %v505 = vpop.f32.mrf.mxu0
      %v506 = vadd.f32 %v395, %v505
      %v507 = vpop.f32.mrf.mxu0
      %508 = vmatprep.mubr.f32.mxu0 %v384
      %509 = vmatmul.mubr.f32.gmra.mxu0 %v383
      %v510 = vpop.f32.mrf.mxu0
      %v511 = vadd.f32 %v395, %v510
      %v512 = vpop.f32.mrf.mxu0
      %513 = vmatprep.mubr.f32.mxu0 %v388
      %514 = vmatmul.mubr.f32.gmra.mxu0 %v387
      %v515 = vpop.f32.mrf.mxu0
      %v516 = vadd.f32 %v395, %v515
      %v517 = vpop.f32.mrf.mxu0
      %518 = vdwg.mxu0
      %519 = vmatprep.subr.mxu0 0.0
      %520 = vmatpush1.msra.mxu0 %v359
      %521 = vmatprep.subr.mxu0 0.0
      %522 = vmatpush1.msra.mxu0 %v358
      %523 = vmatprep.subr.mxu0 0.0
      %524 = vmatpush1.msra.mxu0 %v357
      %525 = vmatprep.subr.mxu0 0.0
      %526 = vmatpush1.msra.mxu0 %v356
      %527 = vmatprep.subr.mxu0 0.0
      %528 = vmatpush1.msra.mxu0 %v355
      %529 = vmatprep.subr.mxu0 0.0
      %530 = vmatpush1.msra.mxu0 %v354
      %531 = vmatprep.subr.mxu0 0.0
      %532 = vmatpush1.msra.mxu0 %v353
      %533 = vmatprep.subr.mxu0 0.0
      %534 = vmatpush1.msra.mxu0 %v352
      %535 = vmatprep.subr.mxu0 0.0
      %536 = vmatpush1.msra.mxu0 %v351
      %537 = vmatprep.subr.mxu0 0.0
      %538 = vmatpush1.msra.mxu0 %v350
      %539 = vmatprep.subr.mxu0 0.0
      %540 = vmatpush1.msra.mxu0 %v349
      %541 = vmatprep.subr.mxu0 0.0
      %542 = vmatpush1.msra.mxu0 %v348
      %543 = vmatprep.subr.mxu0 0.0
      %544 = vmatpush1.msra.mxu0 %v347
      %545 = vmatprep.subr.mxu0 0.0
      %546 = vmatpush1.msra.mxu0 %v346
      %547 = vmatprep.subr.mxu0 0.0
      %548 = vmatpush1.msra.mxu0 %v345
      %549 = vmatprep.subr.mxu0 0.0
      %550 = vmatpush1.msra.mxu0 %v344
      %551 = vmatprep.subr.mxu0 0.0
      %552 = vmatpush2.msra.mxu0 0.0
      %553 = vmatprep.subr.mxu0 0.0
      %554 = vmatpush2.msra.mxu0 0.0
      %555 = vmatprep.subr.mxu0 0.0
      %556 = vmatpush2.msra.mxu0 0.0
      %557 = vmatprep.subr.mxu0 0.0
      %558 = vmatpush2.msra.mxu0 0.0
      %559 = vmatprep.subr.mxu0 0.0
      %560 = vmatpush2.msra.mxu0 0.0
      %561 = vmatprep.subr.mxu0 0.0
      %562 = vmatpush2.msra.mxu0 0.0
      %563 = vmatprep.subr.mxu0 0.0
      %564 = vmatpush2.msra.mxu0 0.0
      %565 = vmatprep.subr.mxu0 0.0
      %566 = vmatpush2.msra.mxu0 0.0
      %567 = vmatprep.subr.mxu0 0.0
      %568 = vmatpush2.msra.mxu0 0.0
      %569 = vmatprep.subr.mxu0 0.0
      %570 = vmatpush2.msra.mxu0 0.0
      %571 = vmatprep.subr.mxu0 0.0
      %572 = vmatpush2.msra.mxu0 0.0
      %573 = vmatprep.subr.mxu0 0.0
      %574 = vmatpush2.msra.mxu0 0.0
      %575 = vmatprep.subr.mxu0 0.0
      %576 = vmatpush2.msra.mxu0 0.0
      %577 = vmatprep.subr.mxu0 0.0
      %578 = vmatpush2.msra.mxu0 0.0
      %579 = vmatprep.subr.mxu0 0.0
      %580 = vmatpush2.msra.mxu0 %v361
      %581 = vmatprep.subr.mxu0 0.0
      %582 = vmatpush2.msra.mxu0 %v360
      %583 = vmatprep.mubr.f32.mxu0 %v399
      %584 = vmatmul.mubr.f32.gmra.mxu0 %v365
      %v585 = vpop.f32.mrf.mxu0
      %v586 = vadd.f32 %v486, %v585
      %v587 = vpop.f32.mrf.mxu0
      %588 = vmatprep.mubr.f32.mxu0 %v402
      %589 = vmatmul.mubr.f32.gmra.mxu0 %v369
      %v590 = vpop.f32.mrf.mxu0
      %v591 = vadd.f32 %v491, %v590
      %v592 = vpop.f32.mrf.mxu0
      %593 = vmatprep.mubr.f32.mxu0 %v405
      %594 = vmatmul.mubr.f32.gmra.mxu0 %v373
      %v595 = vpop.f32.mrf.mxu0
      %v596 = vadd.f32 %v496, %v595
      %v597 = vpop.f32.mrf.mxu0
      %598 = vmatprep.mubr.f32.mxu0 %v408
      %599 = vmatmul.mubr.f32.gmra.mxu0 %v377
      %v600 = vpop.f32.mrf.mxu0
      %v601 = vadd.f32 %v501, %v600
      %v602 = vpop.f32.mrf.mxu0
      %603 = vmatprep.mubr.f32.mxu0 %v411
      %604 = vmatmul.mubr.f32.gmra.mxu0 %v381
      %v605 = vpop.f32.mrf.mxu0
      %v606 = vadd.f32 %v506, %v605
      %v607 = vpop.f32.mrf.mxu0
      %608 = vmatprep.mubr.f32.mxu0 %v414
      %609 = vmatmul.mubr.f32.gmra.mxu0 %v385
      %v610 = vpop.f32.mrf.mxu0
      %v611 = vadd.f32 %v511, %v610
      %v612 = vpop.f32.mrf.mxu0
      %613 = vmatprep.mubr.f32.mxu0 %v417
      %614 = vmatmul.mubr.f32.gmra.mxu0 %v389
      %v615 = vpop.f32.mrf.mxu0
      %v616 = vadd.f32 %v516, %v615
      %v617 = vpop.f32.mrf.mxu0
      %618 = vdwg.mxu0
      %v619 = vmax.f32 %v586, 0.0
      %v620 = vmax.f32 %v591, 0.0
      %v621 = vmax.f32 %v596, 0.0
      %v622 = vmax.f32 %v601, 0.0
      %v623 = vmax.f32 %v606, 0.0
      %v624 = vmax.f32 %v611, 0.0
      %v625 = vmax.f32 %v616, 0.0
      %v626 = vld [vmem:[%s296] sm:$0xff]
      %v627 = vld [vmem:[%s296 + $0x8] sm:$0xff]
      %v628 = vld [vmem:[%s296 + $0x10] sm:$0xff]
      %v629 = vld [vmem:[%s296 + $0x18] sm:$0xff]
      %v630 = vld [vmem:[%s296 + $0x20] sm:$0xff]
      %v631 = vld [vmem:[%s296 + $0x28] sm:$0xff]
      %v632 = vld [vmem:[%s296 + $0x30] sm:$0xff]
      %v633 = vld [vmem:[%s296 + $0x38] sm:$0xff]
      %v634 = vld [vmem:[%s296 + $0x40] sm:$0xff]
      %v635 = vld [vmem:[%s296 + $0x48] sm:$0xff]
      %v636 = vld [vmem:[%s296 + $0x50] sm:$0xff]
      %v637 = vld [vmem:[%s296 + $0x58] sm:$0xff]
      %v638 = vld [vmem:[%s296 + $0x60] sm:$0xff]
      %v639 = vld [vmem:[%s296 + $0x68] sm:$0xff]
      %v640 = vld [vmem:[%s296 + $0x70] sm:$0xff]
      %v641 = vld [vmem:[%s296 + $0x78] sm:$0xff]
      %v642 = vld [vmem:[%s296 + $0x80] sm:$0xff]
      %v643 = vld [vmem:[%s296 + $0x88] sm:$0xff]
      %v644 = vld [vmem:[%s296 + $0x90] sm:$0xff]
      %v645 = vld [vmem:[%s296 + $0x98] sm:$0xff]
      %v646 = vld [vmem:[%s296 + $0xa0] sm:$0xff]
      %v647 = vld [vmem:[%s296 + $0xa8] sm:$0xff]
      %v648 = vld [vmem:[%s296 + $0xb0] sm:$0xff]
      %v649 = vld [vmem:[%s296 + $0xb8] sm:$0xff]
      %v650 = vld [vmem:[%s296 + $0xc0] sm:$0x1]
      %v651 = vld [vmem:[%s296 + $0xc8] sm:$0x1]
      %v652 = vld [vmem:[%s296 + $0xd0] sm:$0x1]
      %v653 = vld [vmem:[%s296 + $0xd8] sm:$0x1]
      %v655 = vsel %vm397, %v629, 0
      %v658 = vsel %vm397, %v633, 0
      %v661 = vsel %vm397, %v637, 0
      %v664 = vsel %vm397, %v641, 0
      %v667 = vsel %vm397, %v645, 0
      %v670 = vsel %vm397, %v649, 0
      %v673 = vsel %vm397, %v653, 0
      %675 = vmatprep.subr.mxu0 0.0
      %676 = vmatpush1.msra.mxu0 %v327
      %677 = vmatprep.subr.mxu0 0.0
      %678 = vmatpush1.msra.mxu0 %v326
      %679 = vmatprep.subr.mxu0 0.0
      %680 = vmatpush1.msra.mxu0 %v325
      %681 = vmatprep.subr.mxu0 0.0
      %682 = vmatpush1.msra.mxu0 %v324
      %683 = vmatprep.subr.mxu0 0.0
      %684 = vmatpush1.msra.mxu0 %v323
      %685 = vmatprep.subr.mxu0 0.0
      %686 = vmatpush1.msra.mxu0 %v322
      %687 = vmatprep.subr.mxu0 0.0
      %688 = vmatpush1.msra.mxu0 %v321
      %689 = vmatprep.subr.mxu0 0.0
      %690 = vmatpush1.msra.mxu0 %v320
      %691 = vmatprep.subr.mxu0 0.0
      %692 = vmatpush1.msra.mxu0 %v319
      %693 = vmatprep.subr.mxu0 0.0
      %694 = vmatpush1.msra.mxu0 %v318
      %695 = vmatprep.subr.mxu0 0.0
      %696 = vmatpush1.msra.mxu0 %v317
      %697 = vmatprep.subr.mxu0 0.0
      %698 = vmatpush1.msra.mxu0 %v316
      %699 = vmatprep.subr.mxu0 0.0
      %700 = vmatpush1.msra.mxu0 %v315
      %701 = vmatprep.subr.mxu0 0.0
      %702 = vmatpush1.msra.mxu0 %v314
      %703 = vmatprep.subr.mxu0 0.0
      %704 = vmatpush1.msra.mxu0 %v313
      %705 = vmatprep.subr.mxu0 0.0
      %706 = vmatpush1.msra.mxu0 %v312
      %707 = vmatprep.subr.mxu0 0.0
      %708 = vmatpush2.msra.mxu0 %v343
      %709 = vmatprep.subr.mxu0 0.0
      %710 = vmatpush2.msra.mxu0 %v342
      %711 = vmatprep.subr.mxu0 0.0
      %712 = vmatpush2.msra.mxu0 %v341
      %713 = vmatprep.subr.mxu0 0.0
      %714 = vmatpush2.msra.mxu0 %v340
      %715 = vmatprep.subr.mxu0 0.0
      %716 = vmatpush2.msra.mxu0 %v339
      %717 = vmatprep.subr.mxu0 0.0
      %718 = vmatpush2.msra.mxu0 %v338
      %719 = vmatprep.subr.mxu0 0.0
      %720 = vmatpush2.msra.mxu0 %v337
      %721 = vmatprep.subr.mxu0 0.0
      %722 = vmatpush2.msra.mxu0 %v336
      %723 = vmatprep.subr.mxu0 0.0
      %724 = vmatpush2.msra.mxu0 %v335
      %725 = vmatprep.subr.mxu0 0.0
      %726 = vmatpush2.msra.mxu0 %v334
      %727 = vmatprep.subr.mxu0 0.0
      %728 = vmatpush2.msra.mxu0 %v333
      %729 = vmatprep.subr.mxu0 0.0
      %730 = vmatpush2.msra.mxu0 %v332
      %731 = vmatprep.subr.mxu0 0.0
      %732 = vmatpush2.msra.mxu0 %v331
      %733 = vmatprep.subr.mxu0 0.0
      %734 = vmatpush2.msra.mxu0 %v330
      %735 = vmatprep.subr.mxu0 0.0
      %736 = vmatpush2.msra.mxu0 %v329
      %737 = vmatprep.subr.mxu0 0.0
      %738 = vmatpush2.msra.mxu0 %v328
      %739 = vmatprep.mubr.f32.mxu0 %v627
      %740 = vmatmul.mubr.f32.gmra.mxu0 %v626
      %v741 = vpop.f32.mrf.mxu0
      %v742 = vadd.f32 %v395, %v741
      %v743 = vpop.f32.mrf.mxu0
      %744 = vmatprep.mubr.f32.mxu0 %v631
      %745 = vmatmul.mubr.f32.gmra.mxu0 %v630
      %v746 = vpop.f32.mrf.mxu0
      %v747 = vadd.f32 %v395, %v746
      %v748 = vpop.f32.mrf.mxu0
      %749 = vmatprep.mubr.f32.mxu0 %v635
      %750 = vmatmul.mubr.f32.gmra.mxu0 %v634
      %v751 = vpop.f32.mrf.mxu0
      %v752 = vadd.f32 %v395, %v751
      %v753 = vpop.f32.mrf.mxu0
      %754 = vmatprep.mubr.f32.mxu0 %v639
      %755 = vmatmul.mubr.f32.gmra.mxu0 %v638
      %v756 = vpop.f32.mrf.mxu0
      %v757 = vadd.f32 %v395, %v756
      %v758 = vpop.f32.mrf.mxu0
      %759 = vmatprep.mubr.f32.mxu0 %v643
      %760 = vmatmul.mubr.f32.gmra.mxu0 %v642
      %v761 = vpop.f32.mrf.mxu0
      %v762 = vadd.f32 %v395, %v761
      %v763 = vpop.f32.mrf.mxu0
      %764 = vmatprep.mubr.f32.mxu0 %v647
      %765 = vmatmul.mubr.f32.gmra.mxu0 %v646
      %v766 = vpop.f32.mrf.mxu0
      %v767 = vadd.f32 %v395, %v766
      %v768 = vpop.f32.mrf.mxu0
      %769 = vmatprep.mubr.f32.mxu0 %v651
      %770 = vmatmul.mubr.f32.gmra.mxu0 %v650
      %v771 = vpop.f32.mrf.mxu0
      %v772 = vadd.f32 %v395, %v771
      %v773 = vpop.f32.mrf.mxu0
      %774 = vdwg.mxu0
      %775 = vmatprep.subr.mxu0 0.0
      %776 = vmatpush1.msra.mxu0 %v359
      %777 = vmatprep.subr.mxu0 0.0
      %778 = vmatpush1.msra.mxu0 %v358
      %779 = vmatprep.subr.mxu0 0.0
      %780 = vmatpush1.msra.mxu0 %v357
      %781 = vmatprep.subr.mxu0 0.0
      %782 = vmatpush1.msra.mxu0 %v356
      %783 = vmatprep.subr.mxu0 0.0
      %784 = vmatpush1.msra.mxu0 %v355
      %785 = vmatprep.subr.mxu0 0.0
      %786 = vmatpush1.msra.mxu0 %v354
      %787 = vmatprep.subr.mxu0 0.0
      %788 = vmatpush1.msra.mxu0 %v353
      %789 = vmatprep.subr.mxu0 0.0
      %790 = vmatpush1.msra.mxu0 %v352
      %791 = vmatprep.subr.mxu0 0.0
      %792 = vmatpush1.msra.mxu0 %v351
      %793 = vmatprep.subr.mxu0 0.0
      %794 = vmatpush1.msra.mxu0 %v350
      %795 = vmatprep.subr.mxu0 0.0
      %796 = vmatpush1.msra.mxu0 %v349
      %797 = vmatprep.subr.mxu0 0.0
      %798 = vmatpush1.msra.mxu0 %v348
      %799 = vmatprep.subr.mxu0 0.0
      %800 = vmatpush1.msra.mxu0 %v347
      %801 = vmatprep.subr.mxu0 0.0
      %802 = vmatpush1.msra.mxu0 %v346
      %803 = vmatprep.subr.mxu0 0.0
      %804 = vmatpush1.msra.mxu0 %v345
      %805 = vmatprep.subr.mxu0 0.0
      %806 = vmatpush1.msra.mxu0 %v344
      %807 = vmatprep.subr.mxu0 0.0
      %808 = vmatpush2.msra.mxu0 0.0
      %809 = vmatprep.subr.mxu0 0.0
      %810 = vmatpush2.msra.mxu0 0.0
      %811 = vmatprep.subr.mxu0 0.0
      %812 = vmatpush2.msra.mxu0 0.0
      %813 = vmatprep.subr.mxu0 0.0
      %814 = vmatpush2.msra.mxu0 0.0
      %815 = vmatprep.subr.mxu0 0.0
      %816 = vmatpush2.msra.mxu0 0.0
      %817 = vmatprep.subr.mxu0 0.0
      %818 = vmatpush2.msra.mxu0 0.0
      %819 = vmatprep.subr.mxu0 0.0
      %820 = vmatpush2.msra.mxu0 0.0
      %821 = vmatprep.subr.mxu0 0.0
      %822 = vmatpush2.msra.mxu0 0.0
      %823 = vmatprep.subr.mxu0 0.0
      %824 = vmatpush2.msra.mxu0 0.0
      %825 = vmatprep.subr.mxu0 0.0
      %826 = vmatpush2.msra.mxu0 0.0
      %827 = vmatprep.subr.mxu0 0.0
      %828 = vmatpush2.msra.mxu0 0.0
      %829 = vmatprep.subr.mxu0 0.0
      %830 = vmatpush2.msra.mxu0 0.0
      %831 = vmatprep.subr.mxu0 0.0
      %832 = vmatpush2.msra.mxu0 0.0
      %833 = vmatprep.subr.mxu0 0.0
      %834 = vmatpush2.msra.mxu0 0.0
      %835 = vmatprep.subr.mxu0 0.0
      %836 = vmatpush2.msra.mxu0 %v361
      %837 = vmatprep.subr.mxu0 0.0
      %838 = vmatpush2.msra.mxu0 %v360
      %839 = vmatprep.mubr.f32.mxu0 %v655
      %840 = vmatmul.mubr.f32.gmra.mxu0 %v628
      %v841 = vpop.f32.mrf.mxu0
      %v842 = vadd.f32 %v742, %v841
      %v843 = vpop.f32.mrf.mxu0
      %844 = vmatprep.mubr.f32.mxu0 %v658
      %845 = vmatmul.mubr.f32.gmra.mxu0 %v632
      %v846 = vpop.f32.mrf.mxu0
      %v847 = vadd.f32 %v747, %v846
      %v848 = vpop.f32.mrf.mxu0
      %849 = vmatprep.mubr.f32.mxu0 %v661
      %850 = vmatmul.mubr.f32.gmra.mxu0 %v636
      %v851 = vpop.f32.mrf.mxu0
      %v852 = vadd.f32 %v752, %v851
      %v853 = vpop.f32.mrf.mxu0
      %854 = vmatprep.mubr.f32.mxu0 %v664
      %855 = vmatmul.mubr.f32.gmra.mxu0 %v640
      %v856 = vpop.f32.mrf.mxu0
      %v857 = vadd.f32 %v757, %v856
      %v858 = vpop.f32.mrf.mxu0
      %859 = vmatprep.mubr.f32.mxu0 %v667
      %860 = vmatmul.mubr.f32.gmra.mxu0 %v644
      %v861 = vpop.f32.mrf.mxu0
      %v862 = vadd.f32 %v762, %v861
      %v863 = vpop.f32.mrf.mxu0
      %864 = vmatprep.mubr.f32.mxu0 %v670
      %865 = vmatmul.mubr.f32.gmra.mxu0 %v648
      %v866 = vpop.f32.mrf.mxu0
      %v867 = vadd.f32 %v767, %v866
      %v868 = vpop.f32.mrf.mxu0
      %869 = vmatprep.mubr.f32.mxu0 %v673
      %870 = vmatmul.mubr.f32.gmra.mxu0 %v652
      %v871 = vpop.f32.mrf.mxu0
      %v872 = vadd.f32 %v772, %v871
      %v873 = vpop.f32.mrf.mxu0
      %874 = vdwg.mxu0
      %v875 = vmax.f32 %v842, 0.0
      %v876 = vmax.f32 %v847, 0.0
      %v877 = vmax.f32 %v852, 0.0
      %v878 = vmax.f32 %v857, 0.0
      %v879 = vmax.f32 %v862, 0.0
      %v880 = vmax.f32 %v867, 0.0
      %v881 = vmax.f32 %v872, 0.0
      %v882 = vmax.f32 %v619, %v875
      %v883 = vmax.f32 %v620, %v876
      %v884 = vmax.f32 %v621, %v877
      %v885 = vmax.f32 %v622, %v878
      %v886 = vmax.f32 %v623, %v879
      %v887 = vmax.f32 %v624, %v880
      %v888 = vmax.f32 %v625, %v881
      %v889 = vld [vmem:[%s301] sm:$0xff]
      %v890 = vld [vmem:[%s301 + $0x8] sm:$0xff]
      %v891 = vld [vmem:[%s301 + $0x10] sm:$0xff]
      %v892 = vld [vmem:[%s301 + $0x18] sm:$0xff]
      %v893 = vld [vmem:[%s301 + $0x20] sm:$0xff]
      %v894 = vld [vmem:[%s301 + $0x28] sm:$0xff]
      %v895 = vld [vmem:[%s301 + $0x30] sm:$0xff]
      %v896 = vld [vmem:[%s301 + $0x38] sm:$0xff]
      %v897 = vld [vmem:[%s301 + $0x40] sm:$0xff]
      %v898 = vld [vmem:[%s301 + $0x48] sm:$0xff]
      %v899 = vld [vmem:[%s301 + $0x50] sm:$0xff]
      %v900 = vld [vmem:[%s301 + $0x58] sm:$0xff]
      %v901 = vld [vmem:[%s301 + $0x60] sm:$0xff]
      %v902 = vld [vmem:[%s301 + $0x68] sm:$0xff]
      %v903 = vld [vmem:[%s301 + $0x70] sm:$0xff]
      %v904 = vld [vmem:[%s301 + $0x78] sm:$0xff]
      %v905 = vld [vmem:[%s301 + $0x80] sm:$0xff]
      %v906 = vld [vmem:[%s301 + $0x88] sm:$0xff]
      %v907 = vld [vmem:[%s301 + $0x90] sm:$0xff]
      %v908 = vld [vmem:[%s301 + $0x98] sm:$0xff]
      %v909 = vld [vmem:[%s301 + $0xa0] sm:$0xff]
      %v910 = vld [vmem:[%s301 + $0xa8] sm:$0xff]
      %v911 = vld [vmem:[%s301 + $0xb0] sm:$0xff]
      %v912 = vld [vmem:[%s301 + $0xb8] sm:$0xff]
      %v913 = vld [vmem:[%s301 + $0xc0] sm:$0x1]
      %v914 = vld [vmem:[%s301 + $0xc8] sm:$0x1]
      %v915 = vld [vmem:[%s301 + $0xd0] sm:$0x1]
      %v916 = vld [vmem:[%s301 + $0xd8] sm:$0x1]
      %v918 = vsel %vm397, %v892, 0
      %v921 = vsel %vm397, %v896, 0
      %v924 = vsel %vm397, %v900, 0
      %v927 = vsel %vm397, %v904, 0
      %v930 = vsel %vm397, %v908, 0
      %v933 = vsel %vm397, %v912, 0
      %v936 = vsel %vm397, %v916, 0
      %938 = vmatprep.subr.mxu0 0.0
      %939 = vmatpush1.msra.mxu0 %v327
      %940 = vmatprep.subr.mxu0 0.0
      %941 = vmatpush1.msra.mxu0 %v326
      %942 = vmatprep.subr.mxu0 0.0
      %943 = vmatpush1.msra.mxu0 %v325
      %944 = vmatprep.subr.mxu0 0.0
      %945 = vmatpush1.msra.mxu0 %v324
      %946 = vmatprep.subr.mxu0 0.0
      %947 = vmatpush1.msra.mxu0 %v323
      %948 = vmatprep.subr.mxu0 0.0
      %949 = vmatpush1.msra.mxu0 %v322
      %950 = vmatprep.subr.mxu0 0.0
      %951 = vmatpush1.msra.mxu0 %v321
      %952 = vmatprep.subr.mxu0 0.0
      %953 = vmatpush1.msra.mxu0 %v320
      %954 = vmatprep.subr.mxu0 0.0
      %955 = vmatpush1.msra.mxu0 %v319
      %956 = vmatprep.subr.mxu0 0.0
      %957 = vmatpush1.msra.mxu0 %v318
      %958 = vmatprep.subr.mxu0 0.0
      %959 = vmatpush1.msra.mxu0 %v317
      %960 = vmatprep.subr.mxu0 0.0
      %961 = vmatpush1.msra.mxu0 %v316
      %962 = vmatprep.subr.mxu0 0.0
      %963 = vmatpush1.msra.mxu0 %v315
      %964 = vmatprep.subr.mxu0 0.0
      %965 = vmatpush1.msra.mxu0 %v314
      %966 = vmatprep.subr.mxu0 0.0
      %967 = vmatpush1.msra.mxu0 %v313
      %968 = vmatprep.subr.mxu0 0.0
      %969 = vmatpush1.msra.mxu0 %v312
      %970 = vmatprep.subr.mxu0 0.0
      %971 = vmatpush2.msra.mxu0 %v343
      %972 = vmatprep.subr.mxu0 0.0
      %973 = vmatpush2.msra.mxu0 %v342
      %974 = vmatprep.subr.mxu0 0.0
      %975 = vmatpush2.msra.mxu0 %v341
      %976 = vmatprep.subr.mxu0 0.0
      %977 = vmatpush2.msra.mxu0 %v340
      %978 = vmatprep.subr.mxu0 0.0
      %979 = vmatpush2.msra.mxu0 %v339
      %980 = vmatprep.subr.mxu0 0.0
      %981 = vmatpush2.msra.mxu0 %v338
      %982 = vmatprep.subr.mxu0 0.0
      %983 = vmatpush2.msra.mxu0 %v337
      %984 = vmatprep.subr.mxu0 0.0
      %985 = vmatpush2.msra.mxu0 %v336
      %986 = vmatprep.subr.mxu0 0.0
      %987 = vmatpush2.msra.mxu0 %v335
      %988 = vmatprep.subr.mxu0 0.0
      %989 = vmatpush2.msra.mxu0 %v334
      %990 = vmatprep.subr.mxu0 0.0
      %991 = vmatpush2.msra.mxu0 %v333
      %992 = vmatprep.subr.mxu0 0.0
      %993 = vmatpush2.msra.mxu0 %v332
      %994 = vmatprep.subr.mxu0 0.0
      %995 = vmatpush2.msra.mxu0 %v331
      %996 = vmatprep.subr.mxu0 0.0
      %997 = vmatpush2.msra.mxu0 %v330
      %998 = vmatprep.subr.mxu0 0.0
      %999 = vmatpush2.msra.mxu0 %v329
      %1000 = vmatprep.subr.mxu0 0.0
      %1001 = vmatpush2.msra.mxu0 %v328
      %1002 = vmatprep.mubr.f32.mxu0 %v890
      %1003 = vmatmul.mubr.f32.gmra.mxu0 %v889
      %v1004 = vpop.f32.mrf.mxu0
      %v1005 = vadd.f32 %v395, %v1004
      %v1006 = vpop.f32.mrf.mxu0
      %1007 = vmatprep.mubr.f32.mxu0 %v894
      %1008 = vmatmul.mubr.f32.gmra.mxu0 %v893
      %v1009 = vpop.f32.mrf.mxu0
      %v1010 = vadd.f32 %v395, %v1009
      %v1011 = vpop.f32.mrf.mxu0
      %1012 = vmatprep.mubr.f32.mxu0 %v898
      %1013 = vmatmul.mubr.f32.gmra.mxu0 %v897
      %v1014 = vpop.f32.mrf.mxu0
      %v1015 = vadd.f32 %v395, %v1014
      %v1016 = vpop.f32.mrf.mxu0
      %1017 = vmatprep.mubr.f32.mxu0 %v902
      %1018 = vmatmul.mubr.f32.gmra.mxu0 %v901
      %v1019 = vpop.f32.mrf.mxu0
      %v1020 = vadd.f32 %v395, %v1019
      %v1021 = vpop.f32.mrf.mxu0
      %1022 = vmatprep.mubr.f32.mxu0 %v906
      %1023 = vmatmul.mubr.f32.gmra.mxu0 %v905
      %v1024 = vpop.f32.mrf.mxu0
      %v1025 = vadd.f32 %v395, %v1024
      %v1026 = vpop.f32.mrf.mxu0
      %1027 = vmatprep.mubr.f32.mxu0 %v910
      %1028 = vmatmul.mubr.f32.gmra.mxu0 %v909
      %v1029 = vpop.f32.mrf.mxu0
      %v1030 = vadd.f32 %v395, %v1029
      %v1031 = vpop.f32.mrf.mxu0
      %1032 = vmatprep.mubr.f32.mxu0 %v914
      %1033 = vmatmul.mubr.f32.gmra.mxu0 %v913
      %v1034 = vpop.f32.mrf.mxu0
      %v1035 = vadd.f32 %v395, %v1034
      %v1036 = vpop.f32.mrf.mxu0
      %1037 = vdwg.mxu0
      %1038 = vmatprep.subr.mxu0 0.0
      %1039 = vmatpush1.msra.mxu0 %v359
      %1040 = vmatprep.subr.mxu0 0.0
      %1041 = vmatpush1.msra.mxu0 %v358
      %1042 = vmatprep.subr.mxu0 0.0
      %1043 = vmatpush1.msra.mxu0 %v357
      %1044 = vmatprep.subr.mxu0 0.0
      %1045 = vmatpush1.msra.mxu0 %v356
      %1046 = vmatprep.subr.mxu0 0.0
      %1047 = vmatpush1.msra.mxu0 %v355
      %1048 = vmatprep.subr.mxu0 0.0
      %1049 = vmatpush1.msra.mxu0 %v354
      %1050 = vmatprep.subr.mxu0 0.0
      %1051 = vmatpush1.msra.mxu0 %v353
      %1052 = vmatprep.subr.mxu0 0.0
      %1053 = vmatpush1.msra.mxu0 %v352
      %1054 = vmatprep.subr.mxu0 0.0
      %1055 = vmatpush1.msra.mxu0 %v351
      %1056 = vmatprep.subr.mxu0 0.0
      %1057 = vmatpush1.msra.mxu0 %v350
      %1058 = vmatprep.subr.mxu0 0.0
      %1059 = vmatpush1.msra.mxu0 %v349
      %1060 = vmatprep.subr.mxu0 0.0
      %1061 = vmatpush1.msra.mxu0 %v348
      %1062 = vmatprep.subr.mxu0 0.0
      %1063 = vmatpush1.msra.mxu0 %v347
      %1064 = vmatprep.subr.mxu0 0.0
      %1065 = vmatpush1.msra.mxu0 %v346
      %1066 = vmatprep.subr.mxu0 0.0
      %1067 = vmatpush1.msra.mxu0 %v345
      %1068 = vmatprep.subr.mxu0 0.0
      %1069 = vmatpush1.msra.mxu0 %v344
      %1070 = vmatprep.subr.mxu0 0.0
      %1071 = vmatpush2.msra.mxu0 0.0
      %1072 = vmatprep.subr.mxu0 0.0
      %1073 = vmatpush2.msra.mxu0 0.0
      %1074 = vmatprep.subr.mxu0 0.0
      %1075 = vmatpush2.msra.mxu0 0.0
      %1076 = vmatprep.subr.mxu0 0.0
      %1077 = vmatpush2.msra.mxu0 0.0
      %1078 = vmatprep.subr.mxu0 0.0
      %1079 = vmatpush2.msra.mxu0 0.0
      %1080 = vmatprep.subr.mxu0 0.0
      %1081 = vmatpush2.msra.mxu0 0.0
      %1082 = vmatprep.subr.mxu0 0.0
      %1083 = vmatpush2.msra.mxu0 0.0
      %1084 = vmatprep.subr.mxu0 0.0
      %1085 = vmatpush2.msra.mxu0 0.0
      %1086 = vmatprep.subr.mxu0 0.0
      %1087 = vmatpush2.msra.mxu0 0.0
      %1088 = vmatprep.subr.mxu0 0.0
      %1089 = vmatpush2.msra.mxu0 0.0
      %1090 = vmatprep.subr.mxu0 0.0
      %1091 = vmatpush2.msra.mxu0 0.0
      %1092 = vmatprep.subr.mxu0 0.0
      %1093 = vmatpush2.msra.mxu0 0.0
      %1094 = vmatprep.subr.mxu0 0.0
      %1095 = vmatpush2.msra.mxu0 0.0
      %1096 = vmatprep.subr.mxu0 0.0
      %1097 = vmatpush2.msra.mxu0 0.0
      %1098 = vmatprep.subr.mxu0 0.0
      %1099 = vmatpush2.msra.mxu0 %v361
      %1100 = vmatprep.subr.mxu0 0.0
      %1101 = vmatpush2.msra.mxu0 %v360
      %1102 = vmatprep.mubr.f32.mxu0 %v918
      %1103 = vmatmul.mubr.f32.gmra.mxu0 %v891
      %v1104 = vpop.f32.mrf.mxu0
      %v1105 = vadd.f32 %v1005, %v1104
      %v1106 = vpop.f32.mrf.mxu0
      %1107 = vmatprep.mubr.f32.mxu0 %v921
      %1108 = vmatmul.mubr.f32.gmra.mxu0 %v895
      %v1109 = vpop.f32.mrf.mxu0
      %v1110 = vadd.f32 %v1010, %v1109
      %v1111 = vpop.f32.mrf.mxu0
      %1112 = vmatprep.mubr.f32.mxu0 %v924
      %1113 = vmatmul.mubr.f32.gmra.mxu0 %v899
      %v1114 = vpop.f32.mrf.mxu0
      %v1115 = vadd.f32 %v1015, %v1114
      %v1116 = vpop.f32.mrf.mxu0
      %1117 = vmatprep.mubr.f32.mxu0 %v927
      %1118 = vmatmul.mubr.f32.gmra.mxu0 %v903
      %v1119 = vpop.f32.mrf.mxu0
      %v1120 = vadd.f32 %v1020, %v1119
      %v1121 = vpop.f32.mrf.mxu0
      %1122 = vmatprep.mubr.f32.mxu0 %v930
      %1123 = vmatmul.mubr.f32.gmra.mxu0 %v907
      %v1124 = vpop.f32.mrf.mxu0
      %v1125 = vadd.f32 %v1025, %v1124
      %v1126 = vpop.f32.mrf.mxu0
      %1127 = vmatprep.mubr.f32.mxu0 %v933
      %1128 = vmatmul.mubr.f32.gmra.mxu0 %v911
      %v1129 = vpop.f32.mrf.mxu0
      %v1130 = vadd.f32 %v1030, %v1129
      %v1131 = vpop.f32.mrf.mxu0
      %1132 = vmatprep.mubr.f32.mxu0 %v936
      %1133 = vmatmul.mubr.f32.gmra.mxu0 %v915
      %v1134 = vpop.f32.mrf.mxu0
      %v1135 = vadd.f32 %v1035, %v1134
      %v1136 = vpop.f32.mrf.mxu0
      %1137 = vdwg.mxu0
      %v1138 = vmax.f32 %v1105, 0.0
      %v1139 = vmax.f32 %v1110, 0.0
      %v1140 = vmax.f32 %v1115, 0.0
      %v1141 = vmax.f32 %v1120, 0.0
      %v1142 = vmax.f32 %v1125, 0.0
      %v1143 = vmax.f32 %v1130, 0.0
      %v1144 = vmax.f32 %v1135, 0.0
      %v1145 = vld [vmem:[%s306] sm:$0xff]
      %v1146 = vld [vmem:[%s306 + $0x8] sm:$0xff]
      %v1147 = vld [vmem:[%s306 + $0x10] sm:$0xff]
      %v1148 = vld [vmem:[%s306 + $0x18] sm:$0xff]
      %v1149 = vld [vmem:[%s306 + $0x20] sm:$0xff]
      %v1150 = vld [vmem:[%s306 + $0x28] sm:$0xff]
      %v1151 = vld [vmem:[%s306 + $0x30] sm:$0xff]
      %v1152 = vld [vmem:[%s306 + $0x38] sm:$0xff]
      %v1153 = vld [vmem:[%s306 + $0x40] sm:$0xff]
      %v1154 = vld [vmem:[%s306 + $0x48] sm:$0xff]
      %v1155 = vld [vmem:[%s306 + $0x50] sm:$0xff]
      %v1156 = vld [vmem:[%s306 + $0x58] sm:$0xff]
      %v1157 = vld [vmem:[%s306 + $0x60] sm:$0xff]
      %v1158 = vld [vmem:[%s306 + $0x68] sm:$0xff]
      %v1159 = vld [vmem:[%s306 + $0x70] sm:$0xff]
      %v1160 = vld [vmem:[%s306 + $0x78] sm:$0xff]
      %v1161 = vld [vmem:[%s306 + $0x80] sm:$0xff]
      %v1162 = vld [vmem:[%s306 + $0x88] sm:$0xff]
      %v1163 = vld [vmem:[%s306 + $0x90] sm:$0xff]
      %v1164 = vld [vmem:[%s306 + $0x98] sm:$0xff]
      %v1165 = vld [vmem:[%s306 + $0xa0] sm:$0xff]
      %v1166 = vld [vmem:[%s306 + $0xa8] sm:$0xff]
      %v1167 = vld [vmem:[%s306 + $0xb0] sm:$0xff]
      %v1168 = vld [vmem:[%s306 + $0xb8] sm:$0xff]
      %v1169 = vld [vmem:[%s306 + $0xc0] sm:$0x1]
      %v1170 = vld [vmem:[%s306 + $0xc8] sm:$0x1]
      %v1171 = vld [vmem:[%s306 + $0xd0] sm:$0x1]
      %v1172 = vld [vmem:[%s306 + $0xd8] sm:$0x1]
      %v1174 = vsel %vm397, %v1148, 0
      %v1177 = vsel %vm397, %v1152, 0
      %v1180 = vsel %vm397, %v1156, 0
      %v1183 = vsel %vm397, %v1160, 0
      %v1186 = vsel %vm397, %v1164, 0
      %v1189 = vsel %vm397, %v1168, 0
      %v1192 = vsel %vm397, %v1172, 0
      %1194 = vmatprep.subr.mxu0 0.0
      %1195 = vmatpush1.msra.mxu0 %v327
      %1196 = vmatprep.subr.mxu0 0.0
      %1197 = vmatpush1.msra.mxu0 %v326
      %1198 = vmatprep.subr.mxu0 0.0
      %1199 = vmatpush1.msra.mxu0 %v325
      %1200 = vmatprep.subr.mxu0 0.0
      %1201 = vmatpush1.msra.mxu0 %v324
      %1202 = vmatprep.subr.mxu0 0.0
      %1203 = vmatpush1.msra.mxu0 %v323
      %1204 = vmatprep.subr.mxu0 0.0
      %1205 = vmatpush1.msra.mxu0 %v322
      %1206 = vmatprep.subr.mxu0 0.0
      %1207 = vmatpush1.msra.mxu0 %v321
      %1208 = vmatprep.subr.mxu0 0.0
      %1209 = vmatpush1.msra.mxu0 %v320
      %1210 = vmatprep.subr.mxu0 0.0
      %1211 = vmatpush1.msra.mxu0 %v319
      %1212 = vmatprep.subr.mxu0 0.0
      %1213 = vmatpush1.msra.mxu0 %v318
      %1214 = vmatprep.subr.mxu0 0.0
      %1215 = vmatpush1.msra.mxu0 %v317
      %1216 = vmatprep.subr.mxu0 0.0
      %1217 = vmatpush1.msra.mxu0 %v316
      %1218 = vmatprep.subr.mxu0 0.0
      %1219 = vmatpush1.msra.mxu0 %v315
      %1220 = vmatprep.subr.mxu0 0.0
      %1221 = vmatpush1.msra.mxu0 %v314
      %1222 = vmatprep.subr.mxu0 0.0
      %1223 = vmatpush1.msra.mxu0 %v313
      %1224 = vmatprep.subr.mxu0 0.0
      %1225 = vmatpush1.msra.mxu0 %v312
      %1226 = vmatprep.subr.mxu0 0.0
      %1227 = vmatpush2.msra.mxu0 %v343
      %1228 = vmatprep.subr.mxu0 0.0
      %1229 = vmatpush2.msra.mxu0 %v342
      %1230 = vmatprep.subr.mxu0 0.0
      %1231 = vmatpush2.msra.mxu0 %v341
      %1232 = vmatprep.subr.mxu0 0.0
      %1233 = vmatpush2.msra.mxu0 %v340
      %1234 = vmatprep.subr.mxu0 0.0
      %1235 = vmatpush2.msra.mxu0 %v339
      %1236 = vmatprep.subr.mxu0 0.0
      %1237 = vmatpush2.msra.mxu0 %v338
      %1238 = vmatprep.subr.mxu0 0.0
      %1239 = vmatpush2.msra.mxu0 %v337
      %1240 = vmatprep.subr.mxu0 0.0
      %1241 = vmatpush2.msra.mxu0 %v336
      %1242 = vmatprep.subr.mxu0 0.0
      %1243 = vmatpush2.msra.mxu0 %v335
      %1244 = vmatprep.subr.mxu0 0.0
      %1245 = vmatpush2.msra.mxu0 %v334
      %1246 = vmatprep.subr.mxu0 0.0
      %1247 = vmatpush2.msra.mxu0 %v333
      %1248 = vmatprep.subr.mxu0 0.0
      %1249 = vmatpush2.msra.mxu0 %v332
      %1250 = vmatprep.subr.mxu0 0.0
      %1251 = vmatpush2.msra.mxu0 %v331
      %1252 = vmatprep.subr.mxu0 0.0
      %1253 = vmatpush2.msra.mxu0 %v330
      %1254 = vmatprep.subr.mxu0 0.0
      %1255 = vmatpush2.msra.mxu0 %v329
      %1256 = vmatprep.subr.mxu0 0.0
      %1257 = vmatpush2.msra.mxu0 %v328
      %1258 = vmatprep.mubr.f32.mxu0 %v1146
      %1259 = vmatmul.mubr.f32.gmra.mxu0 %v1145
      %v1260 = vpop.f32.mrf.mxu0
      %v1261 = vadd.f32 %v395, %v1260
      %v1262 = vpop.f32.mrf.mxu0
      %1263 = vmatprep.mubr.f32.mxu0 %v1150
      %1264 = vmatmul.mubr.f32.gmra.mxu0 %v1149
      %v1265 = vpop.f32.mrf.mxu0
      %v1266 = vadd.f32 %v395, %v1265
      %v1267 = vpop.f32.mrf.mxu0
      %1268 = vmatprep.mubr.f32.mxu0 %v1154
      %1269 = vmatmul.mubr.f32.gmra.mxu0 %v1153
      %v1270 = vpop.f32.mrf.mxu0
      %v1271 = vadd.f32 %v395, %v1270
      %v1272 = vpop.f32.mrf.mxu0
      %1273 = vmatprep.mubr.f32.mxu0 %v1158
      %1274 = vmatmul.mubr.f32.gmra.mxu0 %v1157
      %v1275 = vpop.f32.mrf.mxu0
      %v1276 = vadd.f32 %v395, %v1275
      %v1277 = vpop.f32.mrf.mxu0
      %1278 = vmatprep.mubr.f32.mxu0 %v1162
      %1279 = vmatmul.mubr.f32.gmra.mxu0 %v1161
      %v1280 = vpop.f32.mrf.mxu0
      %v1281 = vadd.f32 %v395, %v1280
      %v1282 = vpop.f32.mrf.mxu0
      %1283 = vmatprep.mubr.f32.mxu0 %v1166
      %1284 = vmatmul.mubr.f32.gmra.mxu0 %v1165
      %v1285 = vpop.f32.mrf.mxu0
      %v1286 = vadd.f32 %v395, %v1285
      %v1287 = vpop.f32.mrf.mxu0
      %1288 = vmatprep.mubr.f32.mxu0 %v1170
      %1289 = vmatmul.mubr.f32.gmra.mxu0 %v1169
      %v1290 = vpop.f32.mrf.mxu0
      %v1291 = vadd.f32 %v395, %v1290
      %v1292 = vpop.f32.mrf.mxu0
      %1293 = vdwg.mxu0
      %1294 = vmatprep.subr.mxu0 0.0
      %1295 = vmatpush1.msra.mxu0 %v359
      %1296 = vmatprep.subr.mxu0 0.0
      %1297 = vmatpush1.msra.mxu0 %v358
      %1298 = vmatprep.subr.mxu0 0.0
      %1299 = vmatpush1.msra.mxu0 %v357
      %1300 = vmatprep.subr.mxu0 0.0
      %1301 = vmatpush1.msra.mxu0 %v356
      %1302 = vmatprep.subr.mxu0 0.0
      %1303 = vmatpush1.msra.mxu0 %v355
      %1304 = vmatprep.subr.mxu0 0.0
      %1305 = vmatpush1.msra.mxu0 %v354
      %1306 = vmatprep.subr.mxu0 0.0
      %1307 = vmatpush1.msra.mxu0 %v353
      %1308 = vmatprep.subr.mxu0 0.0
      %1309 = vmatpush1.msra.mxu0 %v352
      %1310 = vmatprep.subr.mxu0 0.0
      %1311 = vmatpush1.msra.mxu0 %v351
      %1312 = vmatprep.subr.mxu0 0.0
      %1313 = vmatpush1.msra.mxu0 %v350
      %1314 = vmatprep.subr.mxu0 0.0
      %1315 = vmatpush1.msra.mxu0 %v349
      %1316 = vmatprep.subr.mxu0 0.0
      %1317 = vmatpush1.msra.mxu0 %v348
      %1318 = vmatprep.subr.mxu0 0.0
      %1319 = vmatpush1.msra.mxu0 %v347
      %1320 = vmatprep.subr.mxu0 0.0
      %1321 = vmatpush1.msra.mxu0 %v346
      %1322 = vmatprep.subr.mxu0 0.0
      %1323 = vmatpush1.msra.mxu0 %v345
      %1324 = vmatprep.subr.mxu0 0.0
      %1325 = vmatpush1.msra.mxu0 %v344
      %1326 = vmatprep.subr.mxu0 0.0
      %1327 = vmatpush2.msra.mxu0 0.0
      %1328 = vmatprep.subr.mxu0 0.0
      %1329 = vmatpush2.msra.mxu0 0.0
      %1330 = vmatprep.subr.mxu0 0.0
      %1331 = vmatpush2.msra.mxu0 0.0
      %1332 = vmatprep.subr.mxu0 0.0
      %1333 = vmatpush2.msra.mxu0 0.0
      %1334 = vmatprep.subr.mxu0 0.0
      %1335 = vmatpush2.msra.mxu0 0.0
      %1336 = vmatprep.subr.mxu0 0.0
      %1337 = vmatpush2.msra.mxu0 0.0
      %1338 = vmatprep.subr.mxu0 0.0
      %1339 = vmatpush2.msra.mxu0 0.0
      %1340 = vmatprep.subr.mxu0 0.0
      %1341 = vmatpush2.msra.mxu0 0.0
      %1342 = vmatprep.subr.mxu0 0.0
      %1343 = vmatpush2.msra.mxu0 0.0
      %1344 = vmatprep.subr.mxu0 0.0
      %1345 = vmatpush2.msra.mxu0 0.0
      %1346 = vmatprep.subr.mxu0 0.0
      %1347 = vmatpush2.msra.mxu0 0.0
      %1348 = vmatprep.subr.mxu0 0.0
      %1349 = vmatpush2.msra.mxu0 0.0
      %1350 = vmatprep.subr.mxu0 0.0
      %1351 = vmatpush2.msra.mxu0 0.0
      %1352 = vmatprep.subr.mxu0 0.0
      %1353 = vmatpush2.msra.mxu0 0.0
      %1354 = vmatprep.subr.mxu0 0.0
      %1355 = vmatpush2.msra.mxu0 %v361
      %1356 = vmatprep.subr.mxu0 0.0
      %1357 = vmatpush2.msra.mxu0 %v360
      %1358 = vmatprep.mubr.f32.mxu0 %v1174
      %1359 = vmatmul.mubr.f32.gmra.mxu0 %v1147
      %v1360 = vpop.f32.mrf.mxu0
      %v1361 = vadd.f32 %v1261, %v1360
      %v1362 = vpop.f32.mrf.mxu0
      %1363 = vmatprep.mubr.f32.mxu0 %v1177
      %1364 = vmatmul.mubr.f32.gmra.mxu0 %v1151
      %v1365 = vpop.f32.mrf.mxu0
      %v1366 = vadd.f32 %v1266, %v1365
      %v1367 = vpop.f32.mrf.mxu0
      %1368 = vmatprep.mubr.f32.mxu0 %v1180
      %1369 = vmatmul.mubr.f32.gmra.mxu0 %v1155
      %v1370 = vpop.f32.mrf.mxu0
      %v1371 = vadd.f32 %v1271, %v1370
      %v1372 = vpop.f32.mrf.mxu0
      %1373 = vmatprep.mubr.f32.mxu0 %v1183
      %1374 = vmatmul.mubr.f32.gmra.mxu0 %v1159
      %v1375 = vpop.f32.mrf.mxu0
      %v1376 = vadd.f32 %v1276, %v1375
      %v1377 = vpop.f32.mrf.mxu0
      %1378 = vmatprep.mubr.f32.mxu0 %v1186
      %1379 = vmatmul.mubr.f32.gmra.mxu0 %v1163
      %v1380 = vpop.f32.mrf.mxu0
      %v1381 = vadd.f32 %v1281, %v1380
      %v1382 = vpop.f32.mrf.mxu0
      %1383 = vmatprep.mubr.f32.mxu0 %v1189
      %1384 = vmatmul.mubr.f32.gmra.mxu0 %v1167
      %v1385 = vpop.f32.mrf.mxu0
      %v1386 = vadd.f32 %v1286, %v1385
      %v1387 = vpop.f32.mrf.mxu0
      %1388 = vmatprep.mubr.f32.mxu0 %v1192
      %1389 = vmatmul.mubr.f32.gmra.mxu0 %v1171
      %v1390 = vpop.f32.mrf.mxu0
      %v1391 = vadd.f32 %v1291, %v1390
      %v1392 = vpop.f32.mrf.mxu0
      %1393 = vdwg.mxu0
      %v1394 = vmax.f32 %v1361, 0.0
      %v1395 = vmax.f32 %v1366, 0.0
      %v1396 = vmax.f32 %v1371, 0.0
      %v1397 = vmax.f32 %v1376, 0.0
      %v1398 = vmax.f32 %v1381, 0.0
      %v1399 = vmax.f32 %v1386, 0.0
      %v1400 = vmax.f32 %v1391, 0.0
      %v1401 = vmax.f32 %v1138, %v1394
      %v1402 = vmax.f32 %v1139, %v1395
      %v1403 = vmax.f32 %v1140, %v1396
      %v1404 = vmax.f32 %v1141, %v1397
      %v1405 = vmax.f32 %v1142, %v1398
      %v1406 = vmax.f32 %v1143, %v1399
      %v1407 = vmax.f32 %v1144, %v1400
      %v1408 = vmax.f32 %v882, %v1401
      %v1409 = vmax.f32 %v883, %v1402
      %v1410 = vmax.f32 %v884, %v1403
      %v1411 = vmax.f32 %v885, %v1404
      %v1412 = vmax.f32 %v886, %v1405
      %v1413 = vmax.f32 %v887, %v1406
      %v1414 = vmax.f32 %v888, %v1407
      %vm1415 = vcmask 261120
      %1416 = vst.msk [vmem:[%s311] sm:$0xff] %vm1415, %v1408
      %1417 = vst.msk [vmem:[%s311 + $0x8] sm:$0xff] %vm1415, %v1409
      %1418 = vst.msk [vmem:[%s311 + $0x10] sm:$0xff] %vm1415, %v1410
      %1419 = vst.msk [vmem:[%s311 + $0x18] sm:$0xff] %vm1415, %v1411
      %1420 = vst.msk [vmem:[%s311 + $0x20] sm:$0xff] %vm1415, %v1412
      %1421 = vst.msk [vmem:[%s311 + $0x28] sm:$0xff] %vm1415, %v1413
      %vm1422 = vcmask 253952
      %1423 = vst.msk [vmem:[%s311 + $0x30] sm:$0x1] %vm1422, %v1414
      %p1424 = scmp.lt.s32.totalorder %s17, 1
      %s1425 = scalar_select %p1424, %s17, 1
      %s1426 = smul.addr %s1425, 7
      %s1427 = smul.addr %s1426, 8
      %s1428 = scalar_lea.vmem %s6, %s1427
      // Predicated region
      $region45: #{cnn_forward.4} parent=43 // pred_check
        %p1429 = pneg %p181
      $region46: #{cnn_forward.4} parent=43 // pred_check_branch
        %1431 = sbr.rel (%p1429) target = $region48
      $region47: #{cnn_forward.4} parent=43 // pred_region
        _
      $region48: #{cnn_forward.4} parent=43 // pred_fallthru
        _
    $region44: #{cnn_forward.4} parent=5 // pred_fallthru
      _
    %p1432 = scmp.le.s32.totalorder 2, %s12
    // Predicated region
    $region49: #{cnn_forward.4} parent=5 // pred_check
      %p1433 = pneg %p1432
    $region50: #{cnn_forward.4} parent=5 // pred_check_branch
      %1435 = sbr.rel (%p1433) target = $region52
    $region51: #{cnn_forward.4} parent=5 // pred_region
      %s1436 = ssub.s32 %s12, 2
      // Predicated region
      $region53: #{cnn_forward.4} parent=51 // pred_check
        %p1437 = pneg %p187
      $region54: #{cnn_forward.4} parent=51 // pred_check_branch
        %1439 = sbr.rel (%p1437) target = $region56
      $region55: #{cnn_forward.4} parent=51 // pred_region
        %p1440 = scmp.lt.s32.totalorder %s18, 1
        %s1441 = scalar_select %p1440, %s18, 1
        %s1442 = smul.addr %s1441, 7
        %s1443 = smul.addr %s1442, 8
        %s1444 = scalar_lea.vmem %s6, %s1443
      $region56: #{cnn_forward.4} parent=51 // pred_fallthru
        _
    $region52: #{cnn_forward.4} parent=5 // pred_fallthru
      _
  $region6: #{cnn_forward.4} parent=0 // loop_footer
    %s16 = sadd.s32 1, %s12
  $region7: #{cnn_forward.4} parent=0 // loop_footer_branch
    %11 = sbr.rel target = $region3
  $region8: #{cnn_forward.4} parent=0 // loop_exit
    _

// kernel: cnn_forward.5
$region0: #{cnn_forward.5}
  #allocation0 [shape = 'u32[]', space=smem, size = 0x4, offset = 0x4, fixed_abs, tag = 'smem constant byte address 0x4 - core index']
  #allocation1 [shape = 'u32[144,128]{1,0:T(1,128)}', space=vmem, size = 0x12000, scoped, tag = 'internal scratch']
  %s0 = inlined_call_operand.vmem [shape: f32[2,1568], index: 0, kind: input, shape index: {}]
  %s1 = inlined_call_operand.vmem [shape: f32[1568,10], index: 1, kind: input, shape index: {}]
  %s2 = inlined_call_operand.vmem [shape: f32[1,10], index: 2, kind: input, shape index: {}]
  %s3 = inlined_call_operand.hbm [shape: f32[2,10], index: 3, kind: output, shape index: {}]
  %s4 = sld [smem:[#allocation0]]
  $region22: #{cnn_forward.5} parent=0
    _
  %s6 = ssub.s32 1, %s4
  %s7 = scalar_select 0, %s6, %s4
  $region1: #{cnn_forward.5} parent=0
    #allocation2 [shape = 'u8[1024]{0}', space=vmem, size = 0x400, scoped, tag = 'output window, operand 0, single buffered']
    #allocation3 [shape = 's32[1]{0}', space=sflag, size = 0x4, scoped, tag = 'scoped memory for cnn_forward.5']
    %8 = vsyncpa [#allocation3], 0
    // Predicated region
    $region2: #{cnn_forward.5} parent=1 // pred_check
      _
    $region3: #{cnn_forward.5} parent=1 // pred_check_branch
      %10 = sbr.rel (0) target = $region5
    $region4: #{cnn_forward.5} parent=1 // pred_region
      _
    $region5: #{cnn_forward.5} parent=1 // pred_fallthru
      _
    // Predicated region
    $region6: #{cnn_forward.5} parent=1 // pred_check
      _
    $region7: #{cnn_forward.5} parent=1 // pred_check_branch
      %12 = sbr.rel (0) target = $region9
    $region8: #{cnn_forward.5} parent=1 // pred_region
      _
    $region9: #{cnn_forward.5} parent=1 // pred_fallthru
      _
    // Predicated region
    $region10: #{cnn_forward.5} parent=1 // pred_check
      _
    $region11: #{cnn_forward.5} parent=1 // pred_check_branch
      %14 = sbr.rel (0) target = $region13
    $region12: #{cnn_forward.5} parent=1 // pred_region
      _
    $region13: #{cnn_forward.5} parent=1 // pred_fallthru
      _
    %v15 = vld [vmem:[%s0] sm:$0xff]
    %v16 = vld [vmem:[%s0 + $0x8] sm:$0xff]
    %v17 = vld [vmem:[%s0 + $0x10] sm:$0xff]
    %v18 = vld [vmem:[%s0 + $0x18] sm:$0x3]
    %v19 = vld [vmem:[%s1] sm:$0xff]
    %v20 = vld [vmem:[%s1 + $0x8] sm:$0xff]
    %v21 = vld [vmem:[%s1 + $0x10] sm:$0xff]
    %v22 = vld [vmem:[%s1 + $0x18] sm:$0xff]
    %v23 = vld [vmem:[%s1 + $0x20] sm:$0xff]
    %v24 = vld [vmem:[%s1 + $0x28] sm:$0xff]
    %v25 = vld [vmem:[%s1 + $0x30] sm:$0xff]
    %v26 = vld [vmem:[%s1 + $0x38] sm:$0xff]
    %v27 = vld [vmem:[%s1 + $0x40] sm:$0xff]
    %v28 = vld [vmem:[%s1 + $0x48] sm:$0xff]
    %v29 = vld [vmem:[%s1 + $0x50] sm:$0xff]
    %v30 = vld [vmem:[%s1 + $0x58] sm:$0xff]
    %v31 = vld [vmem:[%s1 + $0x60] sm:$0xff]
    %v32 = vld [vmem:[%s1 + $0x68] sm:$0xff]
    %v33 = vld [vmem:[%s1 + $0x70] sm:$0xff]
    %v34 = vld [vmem:[%s1 + $0x78] sm:$0xff]
    %v35 = vld [vmem:[%s1 + $0x80] sm:$0xff]
    %v36 = vld [vmem:[%s1 + $0x88] sm:$0xff]
    %v37 = vld [vmem:[%s1 + $0x90] sm:$0xff]
    %v38 = vld [vmem:[%s1 + $0x98] sm:$0xff]
    %v39 = vld [vmem:[%s1 + $0xa0] sm:$0xff]
    %v40 = vld [vmem:[%s1 + $0xa8] sm:$0xff]
    %v41 = vld [vmem:[%s1 + $0xb0] sm:$0xff]
    %v42 = vld [vmem:[%s1 + $0xb8] sm:$0xff]
    %v43 = vld [vmem:[%s1 + $0xc0] sm:$0xff]
    %v44 = vld [vmem:[%s1 + $0xc8] sm:$0xff]
    %v45 = vld [vmem:[%s1 + $0xd0] sm:$0xff]
    %v46 = vld [vmem:[%s1 + $0xd8] sm:$0xff]
    %v47 = vld [vmem:[%s1 + $0xe0] sm:$0xff]
    %v48 = vld [vmem:[%s1 + $0xe8] sm:$0xff]
    %v49 = vld [vmem:[%s1 + $0xf0] sm:$0xff]
    %v50 = vld [vmem:[%s1 + $0xf8] sm:$0xff]
    %v51 = vld [vmem:[%s1 + $0x100] sm:$0xff]
    %v52 = vld [vmem:[%s1 + $0x108] sm:$0xff]
    %v53 = vld [vmem:[%s1 + $0x110] sm:$0xff]
    %v54 = vld [vmem:[%s1 + $0x118] sm:$0xff]
    %v55 = vld [vmem:[%s1 + $0x120] sm:$0xff]
    %v56 = vld [vmem:[%s1 + $0x128] sm:$0xff]
    %v57 = vld [vmem:[%s1 + $0x130] sm:$0xff]
    %v58 = vld [vmem:[%s1 + $0x138] sm:$0xff]
    %v59 = vld [vmem:[%s1 + $0x140] sm:$0xff]
    %v60 = vld [vmem:[%s1 + $0x148] sm:$0xff]
    %v61 = vld [vmem:[%s1 + $0x150] sm:$0xff]
    %v62 = vld [vmem:[%s1 + $0x158] sm:$0xff]
    %v63 = vld [vmem:[%s1 + $0x160] sm:$0xff]
    %v64 = vld [vmem:[%s1 + $0x168] sm:$0xff]
    %v65 = vld [vmem:[%s1 + $0x170] sm:$0xff]
    %v66 = vld [vmem:[%s1 + $0x178] sm:$0xff]
    %v67 = vld [vmem:[%s1 + $0x180] sm:$0xff]
    %v68 = vld [vmem:[%s1 + $0x188] sm:$0xff]
    %v69 = vld [vmem:[%s1 + $0x190] sm:$0xff]
    %v70 = vld [vmem:[%s1 + $0x198] sm:$0xff]
    %v71 = vld [vmem:[%s1 + $0x1a0] sm:$0xff]
    %v72 = vld [vmem:[%s1 + $0x1a8] sm:$0xff]
    %v73 = vld [vmem:[%s1 + $0x1b0] sm:$0xff]
    %v74 = vld [vmem:[%s1 + $0x1b8] sm:$0xff]
    %v75 = vld [vmem:[%s1 + $0x1c0] sm:$0xff]
    %v76 = vld [vmem:[%s1 + $0x1c8] sm:$0xff]
    %v77 = vld [vmem:[%s1 + $0x1d0] sm:$0xff]
    %v78 = vld [vmem:[%s1 + $0x1d8] sm:$0xff]
    %v79 = vld [vmem:[%s1 + $0x1e0] sm:$0xff]
    %v80 = vld [vmem:[%s1 + $0x1e8] sm:$0xff]
    %v81 = vld [vmem:[%s1 + $0x1f0] sm:$0xff]
    %v82 = vld [vmem:[%s1 + $0x1f8] sm:$0xff]
    %v83 = vld [vmem:[%s1 + $0x200] sm:$0xff]
    %v84 = vld [vmem:[%s1 + $0x208] sm:$0xff]
    %v85 = vld [vmem:[%s1 + $0x210] sm:$0xff]
    %v86 = vld [vmem:[%s1 + $0x218] sm:$0xff]
    %v87 = vld [vmem:[%s1 + $0x220] sm:$0xff]
    %v88 = vld [vmem:[%s1 + $0x228] sm:$0xff]
    %v89 = vld [vmem:[%s1 + $0x230] sm:$0xff]
    %v90 = vld [vmem:[%s1 + $0x238] sm:$0xff]
    %v91 = vld [vmem:[%s1 + $0x240] sm:$0xff]
    %v92 = vld [vmem:[%s1 + $0x248] sm:$0xff]
    %v93 = vld [vmem:[%s1 + $0x250] sm:$0xff]
    %v94 = vld [vmem:[%s1 + $0x258] sm:$0xff]
    %v95 = vld [vmem:[%s1 + $0x260] sm:$0xff]
    %v96 = vld [vmem:[%s1 + $0x268] sm:$0xff]
    %v97 = vld [vmem:[%s1 + $0x270] sm:$0xff]
    %v98 = vld [vmem:[%s1 + $0x278] sm:$0xff]
    %v99 = vld [vmem:[%s1 + $0x280] sm:$0xff]
    %v100 = vld [vmem:[%s1 + $0x288] sm:$0xff]
    %v101 = vld [vmem:[%s1 + $0x290] sm:$0xff]
    %v102 = vld [vmem:[%s1 + $0x298] sm:$0xff]
    %v103 = vld [vmem:[%s1 + $0x2a0] sm:$0xff]
    %v104 = vld [vmem:[%s1 + $0x2a8] sm:$0xff]
    %v105 = vld [vmem:[%s1 + $0x2b0] sm:$0xff]
    %v106 = vld [vmem:[%s1 + $0x2b8] sm:$0xff]
    %v107 = vld [vmem:[%s1 + $0x2c0] sm:$0xff]
    %v108 = vld [vmem:[%s1 + $0x2c8] sm:$0xff]
    %v109 = vld [vmem:[%s1 + $0x2d0] sm:$0xff]
    %v110 = vld [vmem:[%s1 + $0x2d8] sm:$0xff]
    %v111 = vld [vmem:[%s1 + $0x2e0] sm:$0xff]
    %v112 = vld [vmem:[%s1 + $0x2e8] sm:$0xff]
    %v113 = vld [vmem:[%s1 + $0x2f0] sm:$0xff]
    %v114 = vld [vmem:[%s1 + $0x2f8] sm:$0xff]
    %v115 = vld [vmem:[%s1 + $0x300] sm:$0xff]
    %v116 = vld [vmem:[%s1 + $0x308] sm:$0xff]
    %v117 = vld [vmem:[%s1 + $0x310] sm:$0xff]
    %v118 = vld [vmem:[%s1 + $0x318] sm:$0xff]
    %v119 = vld [vmem:[%s1 + $0x320] sm:$0xff]
    %v120 = vld [vmem:[%s1 + $0x328] sm:$0xff]
    %v121 = vld [vmem:[%s1 + $0x330] sm:$0xff]
    %v122 = vld [vmem:[%s1 + $0x338] sm:$0xff]
    %v123 = vld [vmem:[%s1 + $0x340] sm:$0xff]
    %v124 = vld [vmem:[%s1 + $0x348] sm:$0xff]
    %v125 = vld [vmem:[%s1 + $0x350] sm:$0xff]
    %v126 = vld [vmem:[%s1 + $0x358] sm:$0xff]
    %v127 = vld [vmem:[%s1 + $0x360] sm:$0xff]
    %v128 = vld [vmem:[%s1 + $0x368] sm:$0xff]
    %v129 = vld [vmem:[%s1 + $0x370] sm:$0xff]
    %v130 = vld [vmem:[%s1 + $0x378] sm:$0xff]
    %v131 = vld [vmem:[%s1 + $0x380] sm:$0xff]
    %v132 = vld [vmem:[%s1 + $0x388] sm:$0xff]
    %v133 = vld [vmem:[%s1 + $0x390] sm:$0xff]
    %v134 = vld [vmem:[%s1 + $0x398] sm:$0xff]
    %v135 = vld [vmem:[%s1 + $0x3a0] sm:$0xff]
    %v136 = vld [vmem:[%s1 + $0x3a8] sm:$0xff]
    %v137 = vld [vmem:[%s1 + $0x3b0] sm:$0xff]
    %v138 = vld [vmem:[%s1 + $0x3b8] sm:$0xff]
    %v139 = vld [vmem:[%s1 + $0x3c0] sm:$0xff]
    %v140 = vld [vmem:[%s1 + $0x3c8] sm:$0xff]
    %v141 = vld [vmem:[%s1 + $0x3d0] sm:$0xff]
    %v142 = vld [vmem:[%s1 + $0x3d8] sm:$0xff]
    %v143 = vld [vmem:[%s1 + $0x3e0] sm:$0xff]
    %v144 = vld [vmem:[%s1 + $0x3e8] sm:$0xff]
    %v145 = vld [vmem:[%s1 + $0x3f0] sm:$0xff]
    %v146 = vld [vmem:[%s1 + $0x3f8] sm:$0xff]
    %v147 = vld [vmem:[%s1 + $0x400] sm:$0xff]
    %v148 = vld [vmem:[%s1 + $0x408] sm:$0xff]
    %v149 = vld [vmem:[%s1 + $0x410] sm:$0xff]
    %v150 = vld [vmem:[%s1 + $0x418] sm:$0xff]
    %v151 = vld [vmem:[%s1 + $0x420] sm:$0xff]
    %v152 = vld [vmem:[%s1 + $0x428] sm:$0xff]
    %v153 = vld [vmem:[%s1 + $0x430] sm:$0xff]
    %v154 = vld [vmem:[%s1 + $0x438] sm:$0xff]
    %v155 = vld [vmem:[%s1 + $0x440] sm:$0xff]
    %v156 = vld [vmem:[%s1 + $0x448] sm:$0xff]
    %v157 = vld [vmem:[%s1 + $0x450] sm:$0xff]
    %v158 = vld [vmem:[%s1 + $0x458] sm:$0xff]
    %v159 = vld [vmem:[%s1 + $0x460] sm:$0xff]
    %v160 = vld [vmem:[%s1 + $0x468] sm:$0xff]
    %v161 = vld [vmem:[%s1 + $0x470] sm:$0xff]
    %v162 = vld [vmem:[%s1 + $0x478] sm:$0xff]
    %v163 = vld [vmem:[%s1 + $0x480] sm:$0xff]
    %v164 = vld [vmem:[%s1 + $0x488] sm:$0xff]
    %v165 = vld [vmem:[%s1 + $0x490] sm:$0xff]
    %v166 = vld [vmem:[%s1 + $0x498] sm:$0xff]
    %v167 = vld [vmem:[%s1 + $0x4a0] sm:$0xff]
    %v168 = vld [vmem:[%s1 + $0x4a8] sm:$0xff]
    %v169 = vld [vmem:[%s1 + $0x4b0] sm:$0xff]
    %v170 = vld [vmem:[%s1 + $0x4b8] sm:$0xff]
    %v171 = vld [vmem:[%s1 + $0x4c0] sm:$0xff]
    %v172 = vld [vmem:[%s1 + $0x4c8] sm:$0xff]
    %v173 = vld [vmem:[%s1 + $0x4d0] sm:$0xff]
    %v174 = vld [vmem:[%s1 + $0x4d8] sm:$0xff]
    %v175 = vld [vmem:[%s1 + $0x4e0] sm:$0xff]
    %v176 = vld [vmem:[%s1 + $0x4e8] sm:$0xff]
    %v177 = vld [vmem:[%s1 + $0x4f0] sm:$0xff]
    %v178 = vld [vmem:[%s1 + $0x4f8] sm:$0xff]
    %v179 = vld [vmem:[%s1 + $0x500] sm:$0xff]
    %v180 = vld [vmem:[%s1 + $0x508] sm:$0xff]
    %v181 = vld [vmem:[%s1 + $0x510] sm:$0xff]
    %v182 = vld [vmem:[%s1 + $0x518] sm:$0xff]
    %v183 = vld [vmem:[%s1 + $0x520] sm:$0xff]
    %v184 = vld [vmem:[%s1 + $0x528] sm:$0xff]
    %v185 = vld [vmem:[%s1 + $0x530] sm:$0xff]
    %v186 = vld [vmem:[%s1 + $0x538] sm:$0xff]
    %v187 = vld [vmem:[%s1 + $0x540] sm:$0xff]
    %v188 = vld [vmem:[%s1 + $0x548] sm:$0xff]
    %v189 = vld [vmem:[%s1 + $0x550] sm:$0xff]
    %v190 = vld [vmem:[%s1 + $0x558] sm:$0xff]
    %v191 = vld [vmem:[%s1 + $0x560] sm:$0xff]
    %v192 = vld [vmem:[%s1 + $0x568] sm:$0xff]
    %v193 = vld [vmem:[%s1 + $0x570] sm:$0xff]
    %v194 = vld [vmem:[%s1 + $0x578] sm:$0xff]
    %v195 = vld [vmem:[%s1 + $0x580] sm:$0xff]
    %v196 = vld [vmem:[%s1 + $0x588] sm:$0xff]
    %v197 = vld [vmem:[%s1 + $0x590] sm:$0xff]
    %v198 = vld [vmem:[%s1 + $0x598] sm:$0xff]
    %v199 = vld [vmem:[%s1 + $0x5a0] sm:$0xff]
    %v200 = vld [vmem:[%s1 + $0x5a8] sm:$0xff]
    %v201 = vld [vmem:[%s1 + $0x5b0] sm:$0xff]
    %v202 = vld [vmem:[%s1 + $0x5b8] sm:$0xff]
    %v203 = vld [vmem:[%s1 + $0x5c0] sm:$0xff]
    %v204 = vld [vmem:[%s1 + $0x5c8] sm:$0xff]
    %v205 = vld [vmem:[%s1 + $0x5d0] sm:$0xff]
    %v206 = vld [vmem:[%s1 + $0x5d8] sm:$0xff]
    %v207 = vld [vmem:[%s1 + $0x5e0] sm:$0xff]
    %v208 = vld [vmem:[%s1 + $0x5e8] sm:$0xff]
    %v209 = vld [vmem:[%s1 + $0x5f0] sm:$0xff]
    %v210 = vld [vmem:[%s1 + $0x5f8] sm:$0xff]
    %v211 = vld [vmem:[%s1 + $0x600] sm:$0xff]
    %v212 = vld [vmem:[%s1 + $0x608] sm:$0xff]
    %v213 = vld [vmem:[%s1 + $0x610] sm:$0xff]
    %v214 = vld [vmem:[%s1 + $0x618] sm:$0xff]
    %v215 = vld [vmem:[%s2] sm:$0x1]
    %v217 = vlaneseq
    %v218 = vshrl.u32 %v217, 7
    %v219 = vsub.s32 0, %v218
    %v220 = vrot.slane %v215, %v219
    %v226 = vcombine.high %v15, %v15
    %v228 = vunpack.c.l.s4 1983009808
    %v229 = vunpack.c.0.s8 %v228
    %v230 = vlaneseq
    %v231 = vshrl.u32 %v230, 7
    %v232 = vsub.s32 %v229, %v231
    %v233 = vrot.slane %v15, %v232
    %v235 = vunpack.c.l.s4 1983009808
    %v236 = vunpack.c.0.s8 %v235
    %v237 = vlaneseq
    %v238 = vshrl.u32 %v237, 7
    %v239 = vsub.s32 %v236, %v238
    %v240 = vrot.slane %v226, %v239
    %v241 = vcombine.high %v233, %v233
    %v242 = vcombine.high %v240, %v240
    %v243 = vcombine.high %v16, %v16
    %v245 = vunpack.c.l.s4 1983009808
    %v246 = vunpack.c.0.s8 %v245
    %v247 = vlaneseq
    %v248 = vshrl.u32 %v247, 7
    %v249 = vsub.s32 %v246, %v248
    %v250 = vrot.slane %v16, %v249
    %v252 = vunpack.c.l.s4 1983009808
    %v253 = vunpack.c.0.s8 %v252
    %v254 = vlaneseq
    %v255 = vshrl.u32 %v254, 7
    %v256 = vsub.s32 %v253, %v255
    %v257 = vrot.slane %v243, %v256
    %v258 = vcombine.high %v250, %v250
    %v259 = vcombine.high %v257, %v257
    %v260 = vcombine.high %v17, %v17
    %v262 = vunpack.c.l.s4 1983009808
    %v263 = vunpack.c.0.s8 %v262
    %v264 = vlaneseq
    %v265 = vshrl.u32 %v264, 7
    %v266 = vsub.s32 %v263, %v265
    %v267 = vrot.slane %v17, %v266
    %v269 = vunpack.c.l.s4 1983009808
    %v270 = vunpack.c.0.s8 %v269
    %v271 = vlaneseq
    %v272 = vshrl.u32 %v271, 7
    %v273 = vsub.s32 %v270, %v272
    %v274 = vrot.slane %v260, %v273
    %v275 = vcombine.high %v267, %v267
    %v276 = vcombine.high %v274, %v274
    %v278 = vunpack.c.l.s4 1983009808
    %v279 = vunpack.c.0.s8 %v278
    %v280 = vlaneseq
    %v281 = vshrl.u32 %v280, 7
    %v282 = vsub.s32 %v279, %v281
    %v283 = vrot.slane %v18, %v282
    %vm296 = vcmask 261120
    %v297 = vsel %vm296, %v283, 0
    %299 = vmatprep.subr.mxu0 0.0
    %300 = vmatpush1.msra.mxu0 %v34
    %301 = vmatprep.subr.mxu0 0.0
    %302 = vmatpush1.msra.mxu0 %v33
    %303 = vmatprep.subr.mxu0 0.0
    %304 = vmatpush1.msra.mxu0 %v32
    %305 = vmatprep.subr.mxu0 0.0
    %306 = vmatpush1.msra.mxu0 %v31
    %307 = vmatprep.subr.mxu0 0.0
    %308 = vmatpush1.msra.mxu0 %v30
    %309 = vmatprep.subr.mxu0 0.0
    %310 = vmatpush1.msra.mxu0 %v29
    %311 = vmatprep.subr.mxu0 0.0
    %312 = vmatpush1.msra.mxu0 %v28
    %313 = vmatprep.subr.mxu0 0.0
    %314 = vmatpush1.msra.mxu0 %v27
    %315 = vmatprep.subr.mxu0 0.0
    %316 = vmatpush1.msra.mxu0 %v26
    %317 = vmatprep.subr.mxu0 0.0
    %318 = vmatpush1.msra.mxu0 %v25
    %319 = vmatprep.subr.mxu0 0.0
    %320 = vmatpush1.msra.mxu0 %v24
    %321 = vmatprep.subr.mxu0 0.0
    %322 = vmatpush1.msra.mxu0 %v23
    %323 = vmatprep.subr.mxu0 0.0
    %324 = vmatpush1.msra.mxu0 %v22
    %325 = vmatprep.subr.mxu0 0.0
    %326 = vmatpush1.msra.mxu0 %v21
    %327 = vmatprep.subr.mxu0 0.0
    %328 = vmatpush1.msra.mxu0 %v20
    %329 = vmatprep.subr.mxu0 0.0
    %330 = vmatpush1.msra.mxu0 %v19
    %331 = vmatprep.subr.mxu0 0.0
    %332 = vmatpush2.msra.mxu0 %v50
    %333 = vmatprep.subr.mxu0 0.0
    %334 = vmatpush2.msra.mxu0 %v49
    %335 = vmatprep.subr.mxu0 0.0
    %336 = vmatpush2.msra.mxu0 %v48
    %337 = vmatprep.subr.mxu0 0.0
    %338 = vmatpush2.msra.mxu0 %v47
    %339 = vmatprep.subr.mxu0 0.0
    %340 = vmatpush2.msra.mxu0 %v46
    %341 = vmatprep.subr.mxu0 0.0
    %342 = vmatpush2.msra.mxu0 %v45
    %343 = vmatprep.subr.mxu0 0.0
    %344 = vmatpush2.msra.mxu0 %v44
    %345 = vmatprep.subr.mxu0 0.0
    %346 = vmatpush2.msra.mxu0 %v43
    %347 = vmatprep.subr.mxu0 0.0
    %348 = vmatpush2.msra.mxu0 %v42
    %349 = vmatprep.subr.mxu0 0.0
    %350 = vmatpush2.msra.mxu0 %v41
    %351 = vmatprep.subr.mxu0 0.0
    %352 = vmatpush2.msra.mxu0 %v40
    %353 = vmatprep.subr.mxu0 0.0
    %354 = vmatpush2.msra.mxu0 %v39
    %355 = vmatprep.subr.mxu0 0.0
    %356 = vmatpush2.msra.mxu0 %v38
    %357 = vmatprep.subr.mxu0 0.0
    %358 = vmatpush2.msra.mxu0 %v37
    %359 = vmatprep.subr.mxu0 0.0
    %360 = vmatpush2.msra.mxu0 %v36
    %361 = vmatprep.subr.mxu0 0.0
    %362 = vmatpush2.msra.mxu0 %v35
    %363 = vmatprep.mubr.f32.mxu0 %v241
    %364 = vmatmul.mubr.f32.gmra.mxu0 %v233
    %v365 = vpop.f32.mrf.mxu0
    %v366 = vadd.f32 %v220, %v365
    %v367 = vpop.f32.mrf.mxu0
    %368 = vdwg.mxu0
    %369 = vmatprep.subr.mxu0 0.0
    %370 = vmatpush1.msra.mxu0 %v66
    %371 = vmatprep.subr.mxu0 0.0
    %372 = vmatpush1.msra.mxu0 %v65
    %373 = vmatprep.subr.mxu0 0.0
    %374 = vmatpush1.msra.mxu0 %v64
    %375 = vmatprep.subr.mxu0 0.0
    %376 = vmatpush1.msra.mxu0 %v63
    %377 = vmatprep.subr.mxu0 0.0
    %378 = vmatpush1.msra.mxu0 %v62
    %379 = vmatprep.subr.mxu0 0.0
    %380 = vmatpush1.msra.mxu0 %v61
    %381 = vmatprep.subr.mxu0 0.0
    %382 = vmatpush1.msra.mxu0 %v60
    %383 = vmatprep.subr.mxu0 0.0
    %384 = vmatpush1.msra.mxu0 %v59
    %385 = vmatprep.subr.mxu0 0.0
    %386 = vmatpush1.msra.mxu0 %v58
    %387 = vmatprep.subr.mxu0 0.0
    %388 = vmatpush1.msra.mxu0 %v57
    %389 = vmatprep.subr.mxu0 0.0
    %390 = vmatpush1.msra.mxu0 %v56
    %391 = vmatprep.subr.mxu0 0.0
    %392 = vmatpush1.msra.mxu0 %v55
    %393 = vmatprep.subr.mxu0 0.0
    %394 = vmatpush1.msra.mxu0 %v54
    %395 = vmatprep.subr.mxu0 0.0
    %396 = vmatpush1.msra.mxu0 %v53
    %397 = vmatprep.subr.mxu0 0.0
    %398 = vmatpush1.msra.mxu0 %v52
    %399 = vmatprep.subr.mxu0 0.0
    %400 = vmatpush1.msra.mxu0 %v51
    %401 = vmatprep.subr.mxu0 0.0
    %402 = vmatpush2.msra.mxu0 %v82
    %403 = vmatprep.subr.mxu0 0.0
    %404 = vmatpush2.msra.mxu0 %v81
    %405 = vmatprep.subr.mxu0 0.0
    %406 = vmatpush2.msra.mxu0 %v80
    %407 = vmatprep.subr.mxu0 0.0
    %408 = vmatpush2.msra.mxu0 %v79
    %409 = vmatprep.subr.mxu0 0.0
    %410 = vmatpush2.msra.mxu0 %v78
    %411 = vmatprep.subr.mxu0 0.0
    %412 = vmatpush2.msra.mxu0 %v77
    %413 = vmatprep.subr.mxu0 0.0
    %414 = vmatpush2.msra.mxu0 %v76
    %415 = vmatprep.subr.mxu0 0.0
    %416 = vmatpush2.msra.mxu0 %v75
    %417 = vmatprep.subr.mxu0 0.0
    %418 = vmatpush2.msra.mxu0 %v74
    %419 = vmatprep.subr.mxu0 0.0
    %420 = vmatpush2.msra.mxu0 %v73
    %421 = vmatprep.subr.mxu0 0.0
    %422 = vmatpush2.msra.mxu0 %v72
    %423 = vmatprep.subr.mxu0 0.0
    %424 = vmatpush2.msra.mxu0 %v71
    %425 = vmatprep.subr.mxu0 0.0
    %426 = vmatpush2.msra.mxu0 %v70
    %427 = vmatprep.subr.mxu0 0.0
    %428 = vmatpush2.msra.mxu0 %v69
    %429 = vmatprep.subr.mxu0 0.0
    %430 = vmatpush2.msra.mxu0 %v68
    %431 = vmatprep.subr.mxu0 0.0
    %432 = vmatpush2.msra.mxu0 %v67
    %433 = vmatprep.mubr.f32.mxu0 %v242
    %434 = vmatmul.mubr.f32.gmra.mxu0 %v240
    %v435 = vpop.f32.mrf.mxu0
    %v436 = vadd.f32 %v366, %v435
    %v437 = vpop.f32.mrf.mxu0
    %438 = vdwg.mxu0
    %439 = vmatprep.subr.mxu0 0.0
    %440 = vmatpush1.msra.mxu0 %v98
    %441 = vmatprep.subr.mxu0 0.0
    %442 = vmatpush1.msra.mxu0 %v97
    %443 = vmatprep.subr.mxu0 0.0
    %444 = vmatpush1.msra.mxu0 %v96
    %445 = vmatprep.subr.mxu0 0.0
    %446 = vmatpush1.msra.mxu0 %v95
    %447 = vmatprep.subr.mxu0 0.0
    %448 = vmatpush1.msra.mxu0 %v94
    %449 = vmatprep.subr.mxu0 0.0
    %450 = vmatpush1.msra.mxu0 %v93
    %451 = vmatprep.subr.mxu0 0.0
    %452 = vmatpush1.msra.mxu0 %v92
    %453 = vmatprep.subr.mxu0 0.0
    %454 = vmatpush1.msra.mxu0 %v91
    %455 = vmatprep.subr.mxu0 0.0
    %456 = vmatpush1.msra.mxu0 %v90
    %457 = vmatprep.subr.mxu0 0.0
    %458 = vmatpush1.msra.mxu0 %v89
    %459 = vmatprep.subr.mxu0 0.0
    %460 = vmatpush1.msra.mxu0 %v88
    %461 = vmatprep.subr.mxu0 0.0
    %462 = vmatpush1.msra.mxu0 %v87
    %463 = vmatprep.subr.mxu0 0.0
    %464 = vmatpush1.msra.mxu0 %v86
    %465 = vmatprep.subr.mxu0 0.0
    %466 = vmatpush1.msra.mxu0 %v85
    %467 = vmatprep.subr.mxu0 0.0
    %468 = vmatpush1.msra.mxu0 %v84
    %469 = vmatprep.subr.mxu0 0.0
    %470 = vmatpush1.msra.mxu0 %v83
    %471 = vmatprep.subr.mxu0 0.0
    %472 = vmatpush2.msra.mxu0 %v114
    %473 = vmatprep.subr.mxu0 0.0
    %474 = vmatpush2.msra.mxu0 %v113
    %475 = vmatprep.subr.mxu0 0.0
    %476 = vmatpush2.msra.mxu0 %v112
    %477 = vmatprep.subr.mxu0 0.0
    %478 = vmatpush2.msra.mxu0 %v111
    %479 = vmatprep.subr.mxu0 0.0
    %480 = vmatpush2.msra.mxu0 %v110
    %481 = vmatprep.subr.mxu0 0.0
    %482 = vmatpush2.msra.mxu0 %v109
    %483 = vmatprep.subr.mxu0 0.0
    %484 = vmatpush2.msra.mxu0 %v108
    %485 = vmatprep.subr.mxu0 0.0
    %486 = vmatpush2.msra.mxu0 %v107
    %487 = vmatprep.subr.mxu0 0.0
    %488 = vmatpush2.msra.mxu0 %v106
    %489 = vmatprep.subr.mxu0 0.0
    %490 = vmatpush2.msra.mxu0 %v105
    %491 = vmatprep.subr.mxu0 0.0
    %492 = vmatpush2.msra.mxu0 %v104
    %493 = vmatprep.subr.mxu0 0.0
    %494 = vmatpush2.msra.mxu0 %v103
    %495 = vmatprep.subr.mxu0 0.0
    %496 = vmatpush2.msra.mxu0 %v102
    %497 = vmatprep.subr.mxu0 0.0
    %498 = vmatpush2.msra.mxu0 %v101
    %499 = vmatprep.subr.mxu0 0.0
    %500 = vmatpush2.msra.mxu0 %v100
    %501 = vmatprep.subr.mxu0 0.0
    %502 = vmatpush2.msra.mxu0 %v99
    %503 = vmatprep.mubr.f32.mxu0 %v258
    %504 = vmatmul.mubr.f32.gmra.mxu0 %v250
    %v505 = vpop.f32.mrf.mxu0
    %v506 = vadd.f32 %v436, %v505
    %v507 = vpop.f32.mrf.mxu0
    %508 = vdwg.mxu0
    %509 = vmatprep.subr.mxu0 0.0
    %510 = vmatpush1.msra.mxu0 %v130
    %511 = vmatprep.subr.mxu0 0.0
    %512 = vmatpush1.msra.mxu0 %v129
    %513 = vmatprep.subr.mxu0 0.0
    %514 = vmatpush1.msra.mxu0 %v128
    %515 = vmatprep.subr.mxu0 0.0
    %516 = vmatpush1.msra.mxu0 %v127
    %517 = vmatprep.subr.mxu0 0.0
    %518 = vmatpush1.msra.mxu0 %v126
    %519 = vmatprep.subr.mxu0 0.0
    %520 = vmatpush1.msra.mxu0 %v125
    %521 = vmatprep.subr.mxu0 0.0
    %522 = vmatpush1.msra.mxu0 %v124
    %523 = vmatprep.subr.mxu0 0.0
    %524 = vmatpush1.msra.mxu0 %v123
    %525 = vmatprep.subr.mxu0 0.0
    %526 = vmatpush1.msra.mxu0 %v122
    %527 = vmatprep.subr.mxu0 0.0
    %528 = vmatpush1.msra.mxu0 %v121
    %529 = vmatprep.subr.mxu0 0.0
    %530 = vmatpush1.msra.mxu0 %v120
    %531 = vmatprep.subr.mxu0 0.0
    %532 = vmatpush1.msra.mxu0 %v119
    %533 = vmatprep.subr.mxu0 0.0
    %534 = vmatpush1.msra.mxu0 %v118
    %535 = vmatprep.subr.mxu0 0.0
    %536 = vmatpush1.msra.mxu0 %v117
    %537 = vmatprep.subr.mxu0 0.0
    %538 = vmatpush1.msra.mxu0 %v116
    %539 = vmatprep.subr.mxu0 0.0
    %540 = vmatpush1.msra.mxu0 %v115
    %541 = vmatprep.subr.mxu0 0.0
    %542 = vmatpush2.msra.mxu0 %v146
    %543 = vmatprep.subr.mxu0 0.0
    %544 = vmatpush2.msra.mxu0 %v145
    %545 = vmatprep.subr.mxu0 0.0
    %546 = vmatpush2.msra.mxu0 %v144
    %547 = vmatprep.subr.mxu0 0.0
    %548 = vmatpush2.msra.mxu0 %v143
    %549 = vmatprep.subr.mxu0 0.0
    %550 = vmatpush2.msra.mxu0 %v142
    %551 = vmatprep.subr.mxu0 0.0
    %552 = vmatpush2.msra.mxu0 %v141
    %553 = vmatprep.subr.mxu0 0.0
    %554 = vmatpush2.msra.mxu0 %v140
    %555 = vmatprep.subr.mxu0 0.0
    %556 = vmatpush2.msra.mxu0 %v139
    %557 = vmatprep.subr.mxu0 0.0
    %558 = vmatpush2.msra.mxu0 %v138
    %559 = vmatprep.subr.mxu0 0.0
    %560 = vmatpush2.msra.mxu0 %v137
    %561 = vmatprep.subr.mxu0 0.0
    %562 = vmatpush2.msra.mxu0 %v136
    %563 = vmatprep.subr.mxu0 0.0
    %564 = vmatpush2.msra.mxu0 %v135
    %565 = vmatprep.subr.mxu0 0.0
    %566 = vmatpush2.msra.mxu0 %v134
    %567 = vmatprep.subr.mxu0 0.0
    %568 = vmatpush2.msra.mxu0 %v133
    %569 = vmatprep.subr.mxu0 0.0
    %570 = vmatpush2.msra.mxu0 %v132
    %571 = vmatprep.subr.mxu0 0.0
    %572 = vmatpush2.msra.mxu0 %v131
    %573 = vmatprep.mubr.f32.mxu0 %v259
    %574 = vmatmul.mubr.f32.gmra.mxu0 %v257
    %v575 = vpop.f32.mrf.mxu0
    %v576 = vadd.f32 %v506, %v575
    %v577 = vpop.f32.mrf.mxu0
    %578 = vdwg.mxu0
    %579 = vmatprep.subr.mxu0 0.0
    %580 = vmatpush1.msra.mxu0 %v162
    %581 = vmatprep.subr.mxu0 0.0
    %582 = vmatpush1.msra.mxu0 %v161
    %583 = vmatprep.subr.mxu0 0.0
    %584 = vmatpush1.msra.mxu0 %v160
    %585 = vmatprep.subr.mxu0 0.0
    %586 = vmatpush1.msra.mxu0 %v159
    %587 = vmatprep.subr.mxu0 0.0
    %588 = vmatpush1.msra.mxu0 %v158
    %589 = vmatprep.subr.mxu0 0.0
    %590 = vmatpush1.msra.mxu0 %v157
    %591 = vmatprep.subr.mxu0 0.0
    %592 = vmatpush1.msra.mxu0 %v156
    %593 = vmatprep.subr.mxu0 0.0
    %594 = vmatpush1.msra.mxu0 %v155
    %595 = vmatprep.subr.mxu0 0.0
    %596 = vmatpush1.msra.mxu0 %v154
    %597 = vmatprep.subr.mxu0 0.0
    %598 = vmatpush1.msra.mxu0 %v153
    %599 = vmatprep.subr.mxu0 0.0
    %600 = vmatpush1.msra.mxu0 %v152
    %601 = vmatprep.subr.mxu0 0.0
    %602 = vmatpush1.msra.mxu0 %v151
    %603 = vmatprep.subr.mxu0 0.0
    %604 = vmatpush1.msra.mxu0 %v150
    %605 = vmatprep.subr.mxu0 0.0
    %606 = vmatpush1.msra.mxu0 %v149
    %607 = vmatprep.subr.mxu0 0.0
    %608 = vmatpush1.msra.mxu0 %v148
    %609 = vmatprep.subr.mxu0 0.0
    %610 = vmatpush1.msra.mxu0 %v147
    %611 = vmatprep.subr.mxu0 0.0
    %612 = vmatpush2.msra.mxu0 %v178
    %613 = vmatprep.subr.mxu0 0.0
    %614 = vmatpush2.msra.mxu0 %v177
    %615 = vmatprep.subr.mxu0 0.0
    %616 = vmatpush2.msra.mxu0 %v176
    %617 = vmatprep.subr.mxu0 0.0
    %618 = vmatpush2.msra.mxu0 %v175
    %619 = vmatprep.subr.mxu0 0.0
    %620 = vmatpush2.msra.mxu0 %v174
    %621 = vmatprep.subr.mxu0 0.0
    %622 = vmatpush2.msra.mxu0 %v173
    %623 = vmatprep.subr.mxu0 0.0
    %624 = vmatpush2.msra.mxu0 %v172
    %625 = vmatprep.subr.mxu0 0.0
    %626 = vmatpush2.msra.mxu0 %v171
    %627 = vmatprep.subr.mxu0 0.0
    %628 = vmatpush2.msra.mxu0 %v170
    %629 = vmatprep.subr.mxu0 0.0
    %630 = vmatpush2.msra.mxu0 %v169
    %631 = vmatprep.subr.mxu0 0.0
    %632 = vmatpush2.msra.mxu0 %v168
    %633 = vmatprep.subr.mxu0 0.0
    %634 = vmatpush2.msra.mxu0 %v167
    %635 = vmatprep.subr.mxu0 0.0
    %636 = vmatpush2.msra.mxu0 %v166
    %637 = vmatprep.subr.mxu0 0.0
    %638 = vmatpush2.msra.mxu0 %v165
    %639 = vmatprep.subr.mxu0 0.0
    %640 = vmatpush2.msra.mxu0 %v164
    %641 = vmatprep.subr.mxu0 0.0
    %642 = vmatpush2.msra.mxu0 %v163
    %643 = vmatprep.mubr.f32.mxu0 %v275
    %644 = vmatmul.mubr.f32.gmra.mxu0 %v267
    %v645 = vpop.f32.mrf.mxu0
    %v646 = vadd.f32 %v576, %v645
    %v647 = vpop.f32.mrf.mxu0
    %648 = vdwg.mxu0
    %649 = vmatprep.subr.mxu0 0.0
    %650 = vmatpush1.msra.mxu0 %v194
    %651 = vmatprep.subr.mxu0 0.0
    %652 = vmatpush1.msra.mxu0 %v193
    %653 = vmatprep.subr.mxu0 0.0
    %654 = vmatpush1.msra.mxu0 %v192
    %655 = vmatprep.subr.mxu0 0.0
    %656 = vmatpush1.msra.mxu0 %v191
    %657 = vmatprep.subr.mxu0 0.0
    %658 = vmatpush1.msra.mxu0 %v190
    %659 = vmatprep.subr.mxu0 0.0
    %660 = vmatpush1.msra.mxu0 %v189
    %661 = vmatprep.subr.mxu0 0.0
    %662 = vmatpush1.msra.mxu0 %v188
    %663 = vmatprep.subr.mxu0 0.0
    %664 = vmatpush1.msra.mxu0 %v187
    %665 = vmatprep.subr.mxu0 0.0
    %666 = vmatpush1.msra.mxu0 %v186
    %667 = vmatprep.subr.mxu0 0.0
    %668 = vmatpush1.msra.mxu0 %v185
    %669 = vmatprep.subr.mxu0 0.0
    %670 = vmatpush1.msra.mxu0 %v184
    %671 = vmatprep.subr.mxu0 0.0
    %672 = vmatpush1.msra.mxu0 %v183
    %673 = vmatprep.subr.mxu0 0.0
    %674 = vmatpush1.msra.mxu0 %v182
    %675 = vmatprep.subr.mxu0 0.0
    %676 = vmatpush1.msra.mxu0 %v181
    %677 = vmatprep.subr.mxu0 0.0
    %678 = vmatpush1.msra.mxu0 %v180
    %679 = vmatprep.subr.mxu0 0.0
    %680 = vmatpush1.msra.mxu0 %v179
    %681 = vmatprep.subr.mxu0 0.0
    %682 = vmatpush2.msra.mxu0 %v210
    %683 = vmatprep.subr.mxu0 0.0
    %684 = vmatpush2.msra.mxu0 %v209
    %685 = vmatprep.subr.mxu0 0.0
    %686 = vmatpush2.msra.mxu0 %v208
    %687 = vmatprep.subr.mxu0 0.0
    %688 = vmatpush2.msra.mxu0 %v207
    %689 = vmatprep.subr.mxu0 0.0
    %690 = vmatpush2.msra.mxu0 %v206
    %691 = vmatprep.subr.mxu0 0.0
    %692 = vmatpush2.msra.mxu0 %v205
    %693 = vmatprep.subr.mxu0 0.0
    %694 = vmatpush2.msra.mxu0 %v204
    %695 = vmatprep.subr.mxu0 0.0
    %696 = vmatpush2.msra.mxu0 %v203
    %697 = vmatprep.subr.mxu0 0.0
    %698 = vmatpush2.msra.mxu0 %v202
    %699 = vmatprep.subr.mxu0 0.0
    %700 = vmatpush2.msra.mxu0 %v201
    %701 = vmatprep.subr.mxu0 0.0
    %702 = vmatpush2.msra.mxu0 %v200
    %703 = vmatprep.subr.mxu0 0.0
    %704 = vmatpush2.msra.mxu0 %v199
    %705 = vmatprep.subr.mxu0 0.0
    %706 = vmatpush2.msra.mxu0 %v198
    %707 = vmatprep.subr.mxu0 0.0
    %708 = vmatpush2.msra.mxu0 %v197
    %709 = vmatprep.subr.mxu0 0.0
    %710 = vmatpush2.msra.mxu0 %v196
    %711 = vmatprep.subr.mxu0 0.0
    %712 = vmatpush2.msra.mxu0 %v195
    %713 = vmatprep.mubr.f32.mxu0 %v276
    %714 = vmatmul.mubr.f32.gmra.mxu0 %v274
    %v715 = vpop.f32.mrf.mxu0
    %v716 = vadd.f32 %v646, %v715
    %v717 = vpop.f32.mrf.mxu0
    %718 = vdwg.mxu0
    %719 = vmatprep.subr.mxu0 0.0
    %720 = vmatpush1.msra.mxu0 0.0
    %721 = vmatprep.subr.mxu0 0.0
    %722 = vmatpush1.msra.mxu0 0.0
    %723 = vmatprep.subr.mxu0 0.0
    %724 = vmatpush1.msra.mxu0 0.0
    %725 = vmatprep.subr.mxu0 0.0
    %726 = vmatpush1.msra.mxu0 0.0
    %727 = vmatprep.subr.mxu0 0.0
    %728 = vmatpush1.msra.mxu0 0.0
    %729 = vmatprep.subr.mxu0 0.0
    %730 = vmatpush1.msra.mxu0 0.0
    %731 = vmatprep.subr.mxu0 0.0
    %732 = vmatpush1.msra.mxu0 0.0
    %733 = vmatprep.subr.mxu0 0.0
    %734 = vmatpush1.msra.mxu0 0.0
    %735 = vmatprep.subr.mxu0 0.0
    %736 = vmatpush1.msra.mxu0 0.0
    %737 = vmatprep.subr.mxu0 0.0
    %738 = vmatpush1.msra.mxu0 0.0
    %739 = vmatprep.subr.mxu0 0.0
    %740 = vmatpush1.msra.mxu0 0.0
    %741 = vmatprep.subr.mxu0 0.0
    %742 = vmatpush1.msra.mxu0 0.0
    %743 = vmatprep.subr.mxu0 0.0
    %744 = vmatpush1.msra.mxu0 %v214
    %745 = vmatprep.subr.mxu0 0.0
    %746 = vmatpush1.msra.mxu0 %v213
    %747 = vmatprep.subr.mxu0 0.0
    %748 = vmatpush1.msra.mxu0 %v212
    %749 = vmatprep.subr.mxu0 0.0
    %750 = vmatpush1.msra.mxu0 %v211
    %751 = vmatprep.subr.mxu0 0.0
    %752 = vmatpush2.msra.mxu0 0.0
    %753 = vmatprep.subr.mxu0 0.0
    %754 = vmatpush2.msra.mxu0 0.0
    %755 = vmatprep.subr.mxu0 0.0
    %756 = vmatpush2.msra.mxu0 0.0
    %757 = vmatprep.subr.mxu0 0.0
    %758 = vmatpush2.msra.mxu0 0.0
    %759 = vmatprep.subr.mxu0 0.0
    %760 = vmatpush2.msra.mxu0 0.0
    %761 = vmatprep.subr.mxu0 0.0
    %762 = vmatpush2.msra.mxu0 0.0
    %763 = vmatprep.subr.mxu0 0.0
    %764 = vmatpush2.msra.mxu0 0.0
    %765 = vmatprep.subr.mxu0 0.0
    %766 = vmatpush2.msra.mxu0 0.0
    %767 = vmatprep.subr.mxu0 0.0
    %768 = vmatpush2.msra.mxu0 0.0
    %769 = vmatprep.subr.mxu0 0.0
    %770 = vmatpush2.msra.mxu0 0.0
    %771 = vmatprep.subr.mxu0 0.0
    %772 = vmatpush2.msra.mxu0 0.0
    %773 = vmatprep.subr.mxu0 0.0
    %774 = vmatpush2.msra.mxu0 0.0
    %775 = vmatprep.subr.mxu0 0.0
    %776 = vmatpush2.msra.mxu0 0.0
    %777 = vmatprep.subr.mxu0 0.0
    %778 = vmatpush2.msra.mxu0 0.0
    %779 = vmatprep.subr.mxu0 0.0
    %780 = vmatpush2.msra.mxu0 0.0
    %781 = vmatprep.subr.mxu0 0.0
    %782 = vmatpush2.msra.mxu0 0.0
    %783 = vmatprep.mubr.f32.mxu0 0.0
    %784 = vmatmul.mubr.f32.gmra.mxu0 %v297
    %v785 = vpop.f32.mrf.mxu0
    %v786 = vadd.f32 %v716, %v785
    %v787 = vpop.f32.mrf.mxu0
    %788 = vdwg.mxu0
    %vm789 = vcmask 74752
    %790 = vst.msk [vmem:[#allocation2] sm:$0x3] %vm789, %v786
    // Predicated region
    $region14: #{cnn_forward.5} parent=1 // pred_check
      _
    $region15: #{cnn_forward.5} parent=1 // pred_check_branch
      %792 = sbr.rel (0) target = $region17
    $region16: #{cnn_forward.5} parent=1 // pred_region
      %s794 = ssub.s32 32, 32
      %795 = vsyncadd [#allocation3], %s794
      %s797 = sshll.u32 [#allocation2], 4
      %s798 = int_to_ptr.vmem [resolvable:$true] %s797
      %800 = dma.vmem_to_hbm [thread:$0]  %s798, 32, %s3, [#allocation3]
    $region17: #{cnn_forward.5} parent=1 // pred_fallthru
      _
    // Predicated region
    $region18: #{cnn_forward.5} parent=1 // pred_check
      _
    $region19: #{cnn_forward.5} parent=1 // pred_check_branch
      %802 = sbr.rel (0) target = $region21
    $region20: #{cnn_forward.5} parent=1 // pred_region
      %803 = dma.done [#allocation3], 32
    $region21: #{cnn_forward.5} parent=1 // pred_fallthru
      _
    %804 = vsyncpa [#allocation3], 1

</llo_original>
